<compile_context>
chip_gen: v6e
topology: v6e:2x2x1
jax: 0.10.0
libtpu: 0.0.40
codegen_flags: <defaults>
</compile_context>

<pallas_src>
import math
import jax
import jax.numpy as jnp
import numpy as np
from jax.experimental import pallas as pl
from jax.experimental.pallas import tpu as pltpu

B, S, S_SRC, D, H, D_FF = 2, 8, 8, 32, 4, 64
DK = D // H
EPS = 1e-6
NEG = -1e9


def _layernorm(t, a_row, b_row):
    # a2 * (x - mean) / (std + eps) + b2, torch.std => unbiased (ddof=1). Exact division.
    mean = jnp.mean(t, axis=-1, keepdims=True)
    var = jnp.sum((t - mean) ** 2, axis=-1, keepdims=True) * (1.0 / (t.shape[-1] - 1))
    std = jnp.sqrt(var)
    return a_row * (t - mean) / (std + EPS) + b_row


def _softmax(s):
    m = jnp.max(s, axis=-1, keepdims=True)
    e = jnp.exp(s - m)
    return e / jnp.sum(e, axis=-1, keepdims=True)


def decoder_layer_kernel(
    x_ref, mem_ref, tmask_ref, smask_ref,
    wqkv_self_ref, bqkv_self_ref, wo_self_ref, bo_self_ref,
    wq_src_ref, bq_src_ref, wkv_src_ref, bkv_src_ref, wo_src_ref, bo_src_ref,
    ln_a_ref, ln_b_ref,
    w1_ref, b1_ref, w2_ref, b2_ref,
    out_ref,
):
    x = x_ref[...]          # (B*S, D)   rows flattened in the wrapper
    mem = mem_ref[...]      # (B*S_SRC, D)
    ln_a = ln_a_ref[...]    # (3, D)
    ln_b = ln_b_ref[...]    # (3, D)
    inv_sqrt_dk = 1.0 / math.sqrt(DK)

    # Additive attention bias, computed ONCE per attention block (shared across heads).
    t_bias = jnp.where(tmask_ref[...] == 0.0, NEG, 0.0)    # (B, S, S)
    s_bias = jnp.where(smask_ref[...] == 0.0, NEG, 0.0)    # (B, S, S_SRC)

    # Encoder-side K/V depend only on `memory`: compute once with a fused (D, 2D) matmul.
    kv_src = (jnp.dot(mem, wkv_src_ref[...], preferred_element_type=jnp.float32)
              + bkv_src_ref[...])                           # (B*S_SRC, 2D)
    k_src, v_src = kv_src[:, :D], kv_src[:, D:]

    def attn(q_all, k_all, v_all, bias_all, wo, bo, s_kv):
        # q_all: (B*S, D); k_all/v_all: (B*s_kv, D); bias_all: (B, S, s_kv)
        # Output projection Wo folded per head: out = sum_h (p_h @ v_h) @ Wo[hDK:(h+1)DK, :]
        outs = []
        for b in range(B):
            qb = q_all[b * S:(b + 1) * S, :]                        # (S, D)
            kbT = k_all[b * s_kv:(b + 1) * s_kv, :].T               # (D, s_kv) one transpose/batch
            vb = v_all[b * s_kv:(b + 1) * s_kv, :]                  # (s_kv, D)
            bias = bias_all[b]                                      # (S, s_kv)
            acc = jnp.zeros((S, D), jnp.float32)                    # lane-dense accumulator
            for h in range(H):
                sl = slice(h * DK, (h + 1) * DK)
                scores = (jnp.dot(qb[:, sl], kbT[sl, :],
                                  preferred_element_type=jnp.float32) * inv_sqrt_dk
                          + bias)
                p = _softmax(scores)
                ctx = jnp.dot(p, vb[:, sl], preferred_element_type=jnp.float32)  # (S, DK)
                acc = acc + jnp.dot(ctx, wo[sl, :], preferred_element_type=jnp.float32)
            outs.append(acc + bo)
        return jnp.concatenate(outs, axis=0)                         # (B*S, D)

    # sublayer 0: x + self_attn(norm(x))          (dropout == identity in eval)
    nx = _layernorm(x, ln_a[0:1, :], ln_b[0:1, :])
    qkv = (jnp.dot(nx, wqkv_self_ref[...], preferred_element_type=jnp.float32)
           + bqkv_self_ref[...])                                     # fused (D, 3D) projection
    x = x + attn(qkv[:, :D], qkv[:, D:2 * D], qkv[:, 2 * D:],
                 t_bias, wo_self_ref[...], bo_self_ref[...], S)

    # sublayer 1: x + src_attn(norm(x), memory, memory)
    nx = _layernorm(x, ln_a[1:2, :], ln_b[1:2, :])
    q_src = (jnp.dot(nx, wq_src_ref[...], preferred_element_type=jnp.float32)
             + bq_src_ref[...])
    x = x + attn(q_src, k_src, v_src, s_bias,
                 wo_src_ref[...], bo_src_ref[...], S_SRC)

    # sublayer 2: x + feed_forward(norm(x))
    nx = _layernorm(x, ln_a[2:3, :], ln_b[2:3, :])
    h1 = jnp.maximum(
        jnp.dot(nx, w1_ref[...], preferred_element_type=jnp.float32) + b1_ref[...], 0.0)
    x = x + jnp.dot(h1, w2_ref[...], preferred_element_type=jnp.float32) + b2_ref[...]

    out_ref[...] = x


def decoder_layer(x, memory, tgt_mask, src_mask, params):
    w_self, b_self, w_src, b_src, ln_a, ln_b, w1, b1, w2, b2 = params

    # Pack weights once in the wrapper so the kernel issues wide MXU calls.
    wqkv_self = jnp.concatenate([w_self[0], w_self[1], w_self[2]], axis=1)    # (D, 3D)
    bqkv_self = jnp.concatenate([b_self[0], b_self[1], b_self[2]])[None, :]   # (1, 3D)
    wo_self, bo_self = w_self[3], b_self[3][None, :]
    wq_src, bq_src = w_src[0], b_src[0][None, :]
    wkv_src = jnp.concatenate([w_src[1], w_src[2]], axis=1)                   # (D, 2D)
    bkv_src = jnp.concatenate([b_src[1], b_src[2]])[None, :]                  # (1, 2D)
    wo_src, bo_src = w_src[3], b_src[3][None, :]

    vmem = pl.BlockSpec(memory_space=pltpu.MemorySpace.VMEM)
    out2d = pl.pallas_call(
        decoder_layer_kernel,
        out_shape=jax.ShapeDtypeStruct((B * S, D), jnp.float32),
        in_specs=[vmem] * 20,
        out_specs=vmem,
    )(
        x.reshape(B * S, D), memory.reshape(B * S_SRC, D), tgt_mask, src_mask,
        wqkv_self, bqkv_self, wo_self, bo_self,
        wq_src, bq_src, wkv_src, bkv_src, wo_src, bo_src,
        ln_a, ln_b, w1, b1, w2, b2,
    )
    return out2d.reshape(B, S, D)


def reference(x, memory, tmask, smask, params):
    """Pure-JAX reference mirroring the PyTorch forward (eval mode)."""
    w_self, b_self, w_src, b_src, ln_a, ln_b, w1, b1, w2, b2 = params

    def ln(t, a, b):
        mean = t.mean(-1, keepdims=True)
        std = jnp.sqrt(((t - mean) ** 2).sum(-1, keepdims=True) / (t.shape[-1] - 1))
        return a * (t - mean) / (std + EPS) + b

    def mha(q_in, kv_in, w, bb, mask):
        q = q_in @ w[0] + bb[0]
        k = kv_in @ w[1] + bb[1]
        v = kv_in @ w[2] + bb[2]
        split = lambda t: t.reshape(t.shape[0], t.shape[1], H, DK).transpose(0, 2, 1, 3)
        qh, kh, vh = split(q), split(k), split(v)
        scores = jnp.einsum('bhqd,bhkd->bhqk', qh, kh) / math.sqrt(DK)
        scores = jnp.where(mask[:, None] == 0.0, -1e9, scores)
        p = jax.nn.softmax(scores, axis=-1)
        o = jnp.einsum('bhqk,bhkd->bhqd', p, vh).transpose(0, 2, 1, 3).reshape(q.shape)
        return o @ w[3] + bb[3]

    nx = ln(x, ln_a[0], ln_b[0])
    x = x + mha(nx, nx, w_self, b_self, tmask)
    nx = ln(x, ln_a[1], ln_b[1])
    x = x + mha(nx, memory, w_src, b_src, smask)
    nx = ln(x, ln_a[2], ln_b[2])
    x = x + (jnp.maximum(nx @ w1 + b1, 0.0) @ w2 + b2)
    return x


if __name__ == "__main__":
    key = jax.random.PRNGKey(0)
    ks = jax.random.split(key, 12)
    scale = 0.1

    w_self = scale * jax.random.normal(ks[0], (4, D, D), jnp.float32)
    b_self = scale * jax.random.normal(ks[1], (4, D), jnp.float32)
    w_src = scale * jax.random.normal(ks[2], (4, D, D), jnp.float32)
    b_src = scale * jax.random.normal(ks[3], (4, D), jnp.float32)
    ln_a = jnp.ones((3, D), jnp.float32)    # LayerNorm a2 init = ones
    ln_b = jnp.zeros((3, D), jnp.float32)   # LayerNorm b2 init = zeros
    w1 = scale * jax.random.normal(ks[4], (D, D_FF), jnp.float32)
    b1 = scale * jax.random.normal(ks[5], (1, D_FF), jnp.float32)
    w2 = scale * jax.random.normal(ks[6], (D_FF, D), jnp.float32)
    b2 = scale * jax.random.normal(ks[7], (1, D), jnp.float32)
    params = (w_self, b_self, w_src, b_src, ln_a, ln_b, w1, b1, w2, b2)

    x = jax.random.normal(ks[8], (B, S, D), jnp.float32)
    memory = jax.random.normal(ks[9], (B, S_SRC, D), jnp.float32)
    causal = jnp.tril(jnp.ones((S, S), jnp.float32))
    tgt_mask = jnp.tile(causal[None], (B, 1, 1))                 # (B, S, S)
    src_mask = jnp.ones((B, S, S_SRC), jnp.float32)              # (B, S, S_src)

    out = decoder_layer(x, memory, tgt_mask, src_mask, params)
    out = jax.block_until_ready(out)

    ref = reference(x, memory, tgt_mask, src_mask, params)
    # Exact division in softmax / layernorm denominators -> differences are just
    # float32 accumulation-order noise.
    np.testing.assert_allclose(np.asarray(out), np.asarray(ref), rtol=1e-3, atol=1e-5)
    # TODO(synk): nn.Dropout(p=0.1) is stochastic; modeled as identity (eval mode).
    print("KERNEL_OK")
</pallas_src>

<mosaic_0001>
module attributes {stable_mosaic.version = 11 : i64} {
  func.func @decoder_layer_kernel(%arg0: memref<16x32xf32, #tpu.memory_space<vmem>>, %arg1: memref<16x32xf32, #tpu.memory_space<vmem>>, %arg2: memref<2x8x8xf32, #tpu.memory_space<vmem>>, %arg3: memref<2x8x8xf32, #tpu.memory_space<vmem>>, %arg4: memref<32x96xf32, #tpu.memory_space<vmem>>, %arg5: memref<1x96xf32, #tpu.memory_space<vmem>>, %arg6: memref<32x32xf32, #tpu.memory_space<vmem>>, %arg7: memref<1x32xf32, #tpu.memory_space<vmem>>, %arg8: memref<32x32xf32, #tpu.memory_space<vmem>>, %arg9: memref<1x32xf32, #tpu.memory_space<vmem>>, %arg10: memref<32x64xf32, #tpu.memory_space<vmem>>, %arg11: memref<1x64xf32, #tpu.memory_space<vmem>>, %arg12: memref<32x32xf32, #tpu.memory_space<vmem>>, %arg13: memref<1x32xf32, #tpu.memory_space<vmem>>, %arg14: memref<3x32xf32, #tpu.memory_space<vmem>>, %arg15: memref<3x32xf32, #tpu.memory_space<vmem>>, %arg16: memref<32x64xf32, #tpu.memory_space<vmem>>, %arg17: memref<1x64xf32, #tpu.memory_space<vmem>>, %arg18: memref<64x32xf32, #tpu.memory_space<vmem>>, %arg19: memref<1x32xf32, #tpu.memory_space<vmem>>, %arg20: memref<16x32xf32, #tpu.memory_space<vmem>>) attributes {dimension_semantics = [], scalar_prefetch = 0 : i64, scratch_operands = 0 : i64, tpu.core_type = #tpu.core_type<tc>} {
    %c0 = arith.constant 0 : index
    %c0_0 = arith.constant 0 : index
    %0 = vector.load %arg0[%c0, %c0_0] : memref<16x32xf32, #tpu.memory_space<vmem>>, vector<16x32xf32>
    %c0_1 = arith.constant 0 : index
    %c0_2 = arith.constant 0 : index
    %1 = vector.load %arg1[%c0_1, %c0_2] : memref<16x32xf32, #tpu.memory_space<vmem>>, vector<16x32xf32>
    %c0_3 = arith.constant 0 : index
    %c0_4 = arith.constant 0 : index
    %2 = vector.load %arg14[%c0_3, %c0_4] : memref<3x32xf32, #tpu.memory_space<vmem>>, vector<3x32xf32>
    %c0_5 = arith.constant 0 : index
    %c0_6 = arith.constant 0 : index
    %3 = vector.load %arg15[%c0_5, %c0_6] : memref<3x32xf32, #tpu.memory_space<vmem>>, vector<3x32xf32>
    %c0_7 = arith.constant 0 : index
    %c0_8 = arith.constant 0 : index
    %c0_9 = arith.constant 0 : index
    %4 = vector.load %arg2[%c0_7, %c0_8, %c0_9] : memref<2x8x8xf32, #tpu.memory_space<vmem>>, vector<2x8x8xf32>
    %cst = arith.constant 0.000000e+00 : f32
    %5 = vector.broadcast %cst : f32 to vector<2x8x8xf32>
    %6 = arith.cmpf oeq, %4, %5 : vector<2x8x8xf32>
    %cst_10 = arith.constant -1.000000e+09 : f32
    %cst_11 = arith.constant 0.000000e+00 : f32
    %7 = vector.broadcast %cst_10 : f32 to vector<2x8x8xf32>
    %8 = vector.broadcast %cst_11 : f32 to vector<2x8x8xf32>
    %9 = arith.select %6, %7, %8 : vector<2x8x8xi1>, vector<2x8x8xf32>
    %c0_12 = arith.constant 0 : index
    %c0_13 = arith.constant 0 : index
    %c0_14 = arith.constant 0 : index
    %10 = vector.load %arg3[%c0_12, %c0_13, %c0_14] : memref<2x8x8xf32, #tpu.memory_space<vmem>>, vector<2x8x8xf32>
    %cst_15 = arith.constant 0.000000e+00 : f32
    %11 = vector.broadcast %cst_15 : f32 to vector<2x8x8xf32>
    %12 = arith.cmpf oeq, %10, %11 : vector<2x8x8xf32>
    %cst_16 = arith.constant -1.000000e+09 : f32
    %cst_17 = arith.constant 0.000000e+00 : f32
    %13 = vector.broadcast %cst_16 : f32 to vector<2x8x8xf32>
    %14 = vector.broadcast %cst_17 : f32 to vector<2x8x8xf32>
    %15 = arith.select %12, %13, %14 : vector<2x8x8xi1>, vector<2x8x8xf32>
    %c0_18 = arith.constant 0 : index
    %c0_19 = arith.constant 0 : index
    %16 = vector.load %arg10[%c0_18, %c0_19] : memref<32x64xf32, #tpu.memory_space<vmem>>, vector<32x64xf32>
    %cst_20 = arith.constant dense<0.000000e+00> : vector<16x64xf32>
    %17 = tpu.matmul %1, %16, %cst_20 {dimension_numbers = #tpu.dot_dimension_numbers<[1], [0], [0], [1], [0, 0, 1, 1], [], []>} : vector<16x32xf32>, vector<32x64xf32>, vector<16x64xf32> -> vector<16x64xf32>
    %c0_21 = arith.constant 0 : index
    %c0_22 = arith.constant 0 : index
    %18 = vector.load %arg11[%c0_21, %c0_22] : memref<1x64xf32, #tpu.memory_space<vmem>>, vector<1x64xf32>
    %19 = vector.broadcast %18 : vector<1x64xf32> to vector<16x64xf32>
    %20 = arith.addf %17, %19 : vector<16x64xf32>
    %21 = vector.extract_strided_slice %20 {offsets = [0, 0], sizes = [16, 32], strides = [1, 1]} : vector<16x64xf32> to vector<16x32xf32>
    %22 = vector.extract_strided_slice %20 {offsets = [0, 32], sizes = [16, 32], strides = [1, 1]} : vector<16x64xf32> to vector<16x32xf32>
    %23 = vector.extract_strided_slice %2 {offsets = [0, 0], sizes = [1, 32], strides = [1, 1]} : vector<3x32xf32> to vector<1x32xf32>
    %24 = vector.extract_strided_slice %3 {offsets = [0, 0], sizes = [1, 32], strides = [1, 1]} : vector<3x32xf32> to vector<1x32xf32>
    %cst_23 = arith.constant dense<0.000000e+00> : vector<16xf32>
    %25 = vector.multi_reduction <add>, %0, %cst_23 [1] : vector<16x32xf32> to vector<16xf32>
    %26 = vector.shape_cast %25 : vector<16xf32> to vector<16x1xf32>
    %cst_24 = arith.constant 3.200000e+01 : f32
    %27 = vector.broadcast %cst_24 : f32 to vector<16x1xf32>
    %28 = arith.divf %26, %27 : vector<16x1xf32>
    %29 = vector.broadcast %28 : vector<16x1xf32> to vector<16x32xf32>
    %30 = arith.subf %0, %29 : vector<16x32xf32>
    %31 = arith.mulf %30, %30 : vector<16x32xf32>
    %cst_25 = arith.constant dense<0.000000e+00> : vector<16xf32>
    %32 = vector.multi_reduction <add>, %31, %cst_25 [1] : vector<16x32xf32> to vector<16xf32>
    %33 = vector.shape_cast %32 : vector<16xf32> to vector<16x1xf32>
    %cst_26 = arith.constant 0.0322580636 : f32
    %34 = vector.broadcast %cst_26 : f32 to vector<16x1xf32>
    %35 = arith.mulf %33, %34 : vector<16x1xf32>
    %36 = math.sqrt %35 : vector<16x1xf32>
    %37 = vector.broadcast %28 : vector<16x1xf32> to vector<16x32xf32>
    %38 = arith.subf %0, %37 : vector<16x32xf32>
    %39 = vector.broadcast %23 : vector<1x32xf32> to vector<16x32xf32>
    %40 = arith.mulf %39, %38 : vector<16x32xf32>
    %cst_27 = arith.constant 9.99999997E-7 : f32
    %41 = vector.broadcast %cst_27 : f32 to vector<16x1xf32>
    %42 = arith.addf %36, %41 : vector<16x1xf32>
    %43 = vector.broadcast %42 : vector<16x1xf32> to vector<16x32xf32>
    %44 = arith.divf %40, %43 : vector<16x32xf32>
    %45 = vector.broadcast %24 : vector<1x32xf32> to vector<16x32xf32>
    %46 = arith.addf %44, %45 : vector<16x32xf32>
    %c0_28 = arith.constant 0 : index
    %c0_29 = arith.constant 0 : index
    %47 = vector.load %arg4[%c0_28, %c0_29] : memref<32x96xf32, #tpu.memory_space<vmem>>, vector<32x96xf32>
    %cst_30 = arith.constant dense<0.000000e+00> : vector<16x96xf32>
    %48 = tpu.matmul %46, %47, %cst_30 {dimension_numbers = #tpu.dot_dimension_numbers<[1], [0], [0], [1], [0, 0, 1, 1], [], []>} : vector<16x32xf32>, vector<32x96xf32>, vector<16x96xf32> -> vector<16x96xf32>
    %c0_31 = arith.constant 0 : index
    %c0_32 = arith.constant 0 : index
    %49 = vector.load %arg5[%c0_31, %c0_32] : memref<1x96xf32, #tpu.memory_space<vmem>>, vector<1x96xf32>
    %50 = vector.broadcast %49 : vector<1x96xf32> to vector<16x96xf32>
    %51 = arith.addf %48, %50 : vector<16x96xf32>
    %52 = vector.extract_strided_slice %51 {offsets = [0, 0], sizes = [16, 32], strides = [1, 1]} : vector<16x96xf32> to vector<16x32xf32>
    %53 = vector.extract_strided_slice %51 {offsets = [0, 32], sizes = [16, 32], strides = [1, 1]} : vector<16x96xf32> to vector<16x32xf32>
    %54 = vector.extract_strided_slice %51 {offsets = [0, 64], sizes = [16, 32], strides = [1, 1]} : vector<16x96xf32> to vector<16x32xf32>
    %c0_33 = arith.constant 0 : index
    %c0_34 = arith.constant 0 : index
    %55 = vector.load %arg6[%c0_33, %c0_34] : memref<32x32xf32, #tpu.memory_space<vmem>>, vector<32x32xf32>
    %c0_35 = arith.constant 0 : index
    %c0_36 = arith.constant 0 : index
    %56 = vector.load %arg7[%c0_35, %c0_36] : memref<1x32xf32, #tpu.memory_space<vmem>>, vector<1x32xf32>
    %57 = vector.extract_strided_slice %52 {offsets = [0, 0], sizes = [8, 32], strides = [1, 1]} : vector<16x32xf32> to vector<8x32xf32>
    %58 = vector.extract_strided_slice %53 {offsets = [0, 0], sizes = [8, 32], strides = [1, 1]} : vector<16x32xf32> to vector<8x32xf32>
    %59 = tpu.transpose %58, [1, 0] : vector<8x32xf32> -> vector<32x8xf32>
    %60 = vector.extract_strided_slice %54 {offsets = [0, 0], sizes = [8, 32], strides = [1, 1]} : vector<16x32xf32> to vector<8x32xf32>
    %61 = vector.extract_strided_slice %9 {offsets = [0, 0, 0], sizes = [1, 8, 8], strides = [1, 1, 1]} : vector<2x8x8xf32> to vector<1x8x8xf32>
    %62 = vector.shape_cast %61 : vector<1x8x8xf32> to vector<8x8xf32>
    %cst_37 = arith.constant 0.000000e+00 : f32
    %63 = vector.broadcast %cst_37 : f32 to vector<8x32xf32>
    %64 = vector.extract_strided_slice %57 {offsets = [0, 0], sizes = [8, 8], strides = [1, 1]} : vector<8x32xf32> to vector<8x8xf32>
    %65 = vector.extract_strided_slice %59 {offsets = [0, 0], sizes = [8, 8], strides = [1, 1]} : vector<32x8xf32> to vector<8x8xf32>
    %cst_38 = arith.constant dense<0.000000e+00> : vector<8x8xf32>
    %66 = tpu.matmul %64, %65, %cst_38 {dimension_numbers = #tpu.dot_dimension_numbers<[1], [0], [0], [1], [0, 0, 1, 1], [], []>} : vector<8x8xf32>, vector<8x8xf32>, vector<8x8xf32> -> vector<8x8xf32>
    %cst_39 = arith.constant 0.353553385 : f32
    %67 = vector.broadcast %cst_39 : f32 to vector<8x8xf32>
    %68 = arith.mulf %66, %67 : vector<8x8xf32>
    %69 = arith.addf %68, %62 : vector<8x8xf32>
    %cst_40 = arith.constant dense<0xFF800000> : vector<8xf32>
    %70 = vector.multi_reduction <maximumf>, %69, %cst_40 [1] : vector<8x8xf32> to vector<8xf32>
    %71 = vector.shape_cast %70 : vector<8xf32> to vector<8x1xf32>
    %72 = vector.broadcast %71 : vector<8x1xf32> to vector<8x8xf32>
    %73 = arith.subf %69, %72 : vector<8x8xf32>
    %74 = math.exp %73 : vector<8x8xf32>
    %cst_41 = arith.constant dense<0.000000e+00> : vector<8xf32>
    %75 = vector.multi_reduction <add>, %74, %cst_41 [1] : vector<8x8xf32> to vector<8xf32>
    %76 = vector.shape_cast %75 : vector<8xf32> to vector<8x1xf32>
    %77 = vector.broadcast %76 : vector<8x1xf32> to vector<8x8xf32>
    %78 = arith.divf %74, %77 : vector<8x8xf32>
    %79 = vector.extract_strided_slice %60 {offsets = [0, 0], sizes = [8, 8], strides = [1, 1]} : vector<8x32xf32> to vector<8x8xf32>
    %cst_42 = arith.constant dense<0.000000e+00> : vector<8x8xf32>
    %80 = tpu.matmul %78, %79, %cst_42 {dimension_numbers = #tpu.dot_dimension_numbers<[1], [0], [0], [1], [0, 0, 1, 1], [], []>} : vector<8x8xf32>, vector<8x8xf32>, vector<8x8xf32> -> vector<8x8xf32>
    %81 = vector.extract_strided_slice %55 {offsets = [0, 0], sizes = [8, 32], strides = [1, 1]} : vector<32x32xf32> to vector<8x32xf32>
    %cst_43 = arith.constant dense<0.000000e+00> : vector<8x32xf32>
    %82 = tpu.matmul %80, %81, %cst_43 {dimension_numbers = #tpu.dot_dimension_numbers<[1], [0], [0], [1], [0, 0, 1, 1], [], []>} : vector<8x8xf32>, vector<8x32xf32>, vector<8x32xf32> -> vector<8x32xf32>
    %83 = arith.addf %63, %82 : vector<8x32xf32>
    %84 = vector.extract_strided_slice %57 {offsets = [0, 8], sizes = [8, 8], strides = [1, 1]} : vector<8x32xf32> to vector<8x8xf32>
    %85 = vector.extract_strided_slice %59 {offsets = [8, 0], sizes = [8, 8], strides = [1, 1]} : vector<32x8xf32> to vector<8x8xf32>
    %cst_44 = arith.constant dense<0.000000e+00> : vector<8x8xf32>
    %86 = tpu.matmul %84, %85, %cst_44 {dimension_numbers = #tpu.dot_dimension_numbers<[1], [0], [0], [1], [0, 0, 1, 1], [], []>} : vector<8x8xf32>, vector<8x8xf32>, vector<8x8xf32> -> vector<8x8xf32>
    %cst_45 = arith.constant 0.353553385 : f32
    %87 = vector.broadcast %cst_45 : f32 to vector<8x8xf32>
    %88 = arith.mulf %86, %87 : vector<8x8xf32>
    %89 = arith.addf %88, %62 : vector<8x8xf32>
    %cst_46 = arith.constant dense<0xFF800000> : vector<8xf32>
    %90 = vector.multi_reduction <maximumf>, %89, %cst_46 [1] : vector<8x8xf32> to vector<8xf32>
    %91 = vector.shape_cast %90 : vector<8xf32> to vector<8x1xf32>
    %92 = vector.broadcast %91 : vector<8x1xf32> to vector<8x8xf32>
    %93 = arith.subf %89, %92 : vector<8x8xf32>
    %94 = math.exp %93 : vector<8x8xf32>
    %cst_47 = arith.constant dense<0.000000e+00> : vector<8xf32>
    %95 = vector.multi_reduction <add>, %94, %cst_47 [1] : vector<8x8xf32> to vector<8xf32>
    %96 = vector.shape_cast %95 : vector<8xf32> to vector<8x1xf32>
    %97 = vector.broadcast %96 : vector<8x1xf32> to vector<8x8xf32>
    %98 = arith.divf %94, %97 : vector<8x8xf32>
    %99 = vector.extract_strided_slice %60 {offsets = [0, 8], sizes = [8, 8], strides = [1, 1]} : vector<8x32xf32> to vector<8x8xf32>
    %cst_48 = arith.constant dense<0.000000e+00> : vector<8x8xf32>
    %100 = tpu.matmul %98, %99, %cst_48 {dimension_numbers = #tpu.dot_dimension_numbers<[1], [0], [0], [1], [0, 0, 1, 1], [], []>} : vector<8x8xf32>, vector<8x8xf32>, vector<8x8xf32> -> vector<8x8xf32>
    %101 = vector.extract_strided_slice %55 {offsets = [8, 0], sizes = [8, 32], strides = [1, 1]} : vector<32x32xf32> to vector<8x32xf32>
    %cst_49 = arith.constant dense<0.000000e+00> : vector<8x32xf32>
    %102 = tpu.matmul %100, %101, %cst_49 {dimension_numbers = #tpu.dot_dimension_numbers<[1], [0], [0], [1], [0, 0, 1, 1], [], []>} : vector<8x8xf32>, vector<8x32xf32>, vector<8x32xf32> -> vector<8x32xf32>
    %103 = arith.addf %83, %102 : vector<8x32xf32>
    %104 = vector.extract_strided_slice %57 {offsets = [0, 16], sizes = [8, 8], strides = [1, 1]} : vector<8x32xf32> to vector<8x8xf32>
    %105 = vector.extract_strided_slice %59 {offsets = [16, 0], sizes = [8, 8], strides = [1, 1]} : vector<32x8xf32> to vector<8x8xf32>
    %cst_50 = arith.constant dense<0.000000e+00> : vector<8x8xf32>
    %106 = tpu.matmul %104, %105, %cst_50 {dimension_numbers = #tpu.dot_dimension_numbers<[1], [0], [0], [1], [0, 0, 1, 1], [], []>} : vector<8x8xf32>, vector<8x8xf32>, vector<8x8xf32> -> vector<8x8xf32>
    %cst_51 = arith.constant 0.353553385 : f32
    %107 = vector.broadcast %cst_51 : f32 to vector<8x8xf32>
    %108 = arith.mulf %106, %107 : vector<8x8xf32>
    %109 = arith.addf %108, %62 : vector<8x8xf32>
    %cst_52 = arith.constant dense<0xFF800000> : vector<8xf32>
    %110 = vector.multi_reduction <maximumf>, %109, %cst_52 [1] : vector<8x8xf32> to vector<8xf32>
    %111 = vector.shape_cast %110 : vector<8xf32> to vector<8x1xf32>
    %112 = vector.broadcast %111 : vector<8x1xf32> to vector<8x8xf32>
    %113 = arith.subf %109, %112 : vector<8x8xf32>
    %114 = math.exp %113 : vector<8x8xf32>
    %cst_53 = arith.constant dense<0.000000e+00> : vector<8xf32>
    %115 = vector.multi_reduction <add>, %114, %cst_53 [1] : vector<8x8xf32> to vector<8xf32>
    %116 = vector.shape_cast %115 : vector<8xf32> to vector<8x1xf32>
    %117 = vector.broadcast %116 : vector<8x1xf32> to vector<8x8xf32>
    %118 = arith.divf %114, %117 : vector<8x8xf32>
    %119 = vector.extract_strided_slice %60 {offsets = [0, 16], sizes = [8, 8], strides = [1, 1]} : vector<8x32xf32> to vector<8x8xf32>
    %cst_54 = arith.constant dense<0.000000e+00> : vector<8x8xf32>
    %120 = tpu.matmul %118, %119, %cst_54 {dimension_numbers = #tpu.dot_dimension_numbers<[1], [0], [0], [1], [0, 0, 1, 1], [], []>} : vector<8x8xf32>, vector<8x8xf32>, vector<8x8xf32> -> vector<8x8xf32>
    %121 = vector.extract_strided_slice %55 {offsets = [16, 0], sizes = [8, 32], strides = [1, 1]} : vector<32x32xf32> to vector<8x32xf32>
    %cst_55 = arith.constant dense<0.000000e+00> : vector<8x32xf32>
    %122 = tpu.matmul %120, %121, %cst_55 {dimension_numbers = #tpu.dot_dimension_numbers<[1], [0], [0], [1], [0, 0, 1, 1], [], []>} : vector<8x8xf32>, vector<8x32xf32>, vector<8x32xf32> -> vector<8x32xf32>
    %123 = arith.addf %103, %122 : vector<8x32xf32>
    %124 = vector.extract_strided_slice %57 {offsets = [0, 24], sizes = [8, 8], strides = [1, 1]} : vector<8x32xf32> to vector<8x8xf32>
    %125 = vector.extract_strided_slice %59 {offsets = [24, 0], sizes = [8, 8], strides = [1, 1]} : vector<32x8xf32> to vector<8x8xf32>
    %cst_56 = arith.constant dense<0.000000e+00> : vector<8x8xf32>
    %126 = tpu.matmul %124, %125, %cst_56 {dimension_numbers = #tpu.dot_dimension_numbers<[1], [0], [0], [1], [0, 0, 1, 1], [], []>} : vector<8x8xf32>, vector<8x8xf32>, vector<8x8xf32> -> vector<8x8xf32>
    %cst_57 = arith.constant 0.353553385 : f32
    %127 = vector.broadcast %cst_57 : f32 to vector<8x8xf32>
    %128 = arith.mulf %126, %127 : vector<8x8xf32>
    %129 = arith.addf %128, %62 : vector<8x8xf32>
    %cst_58 = arith.constant dense<0xFF800000> : vector<8xf32>
    %130 = vector.multi_reduction <maximumf>, %129, %cst_58 [1] : vector<8x8xf32> to vector<8xf32>
    %131 = vector.shape_cast %130 : vector<8xf32> to vector<8x1xf32>
    %132 = vector.broadcast %131 : vector<8x1xf32> to vector<8x8xf32>
    %133 = arith.subf %129, %132 : vector<8x8xf32>
    %134 = math.exp %133 : vector<8x8xf32>
    %cst_59 = arith.constant dense<0.000000e+00> : vector<8xf32>
    %135 = vector.multi_reduction <add>, %134, %cst_59 [1] : vector<8x8xf32> to vector<8xf32>
    %136 = vector.shape_cast %135 : vector<8xf32> to vector<8x1xf32>
    %137 = vector.broadcast %136 : vector<8x1xf32> to vector<8x8xf32>
    %138 = arith.divf %134, %137 : vector<8x8xf32>
    %139 = vector.extract_strided_slice %60 {offsets = [0, 24], sizes = [8, 8], strides = [1, 1]} : vector<8x32xf32> to vector<8x8xf32>
    %cst_60 = arith.constant dense<0.000000e+00> : vector<8x8xf32>
    %140 = tpu.matmul %138, %139, %cst_60 {dimension_numbers = #tpu.dot_dimension_numbers<[1], [0], [0], [1], [0, 0, 1, 1], [], []>} : vector<8x8xf32>, vector<8x8xf32>, vector<8x8xf32> -> vector<8x8xf32>
    %141 = vector.extract_strided_slice %55 {offsets = [24, 0], sizes = [8, 32], strides = [1, 1]} : vector<32x32xf32> to vector<8x32xf32>
    %cst_61 = arith.constant dense<0.000000e+00> : vector<8x32xf32>
    %142 = tpu.matmul %140, %141, %cst_61 {dimension_numbers = #tpu.dot_dimension_numbers<[1], [0], [0], [1], [0, 0, 1, 1], [], []>} : vector<8x8xf32>, vector<8x32xf32>, vector<8x32xf32> -> vector<8x32xf32>
    %143 = arith.addf %123, %142 : vector<8x32xf32>
    %144 = vector.broadcast %56 : vector<1x32xf32> to vector<8x32xf32>
    %145 = arith.addf %143, %144 : vector<8x32xf32>
    %146 = vector.extract_strided_slice %52 {offsets = [8, 0], sizes = [8, 32], strides = [1, 1]} : vector<16x32xf32> to vector<8x32xf32>
    %147 = vector.extract_strided_slice %53 {offsets = [8, 0], sizes = [8, 32], strides = [1, 1]} : vector<16x32xf32> to vector<8x32xf32>
    %148 = tpu.transpose %147, [1, 0] : vector<8x32xf32> -> vector<32x8xf32>
    %149 = vector.extract_strided_slice %54 {offsets = [8, 0], sizes = [8, 32], strides = [1, 1]} : vector<16x32xf32> to vector<8x32xf32>
    %150 = vector.extract_strided_slice %9 {offsets = [1, 0, 0], sizes = [1, 8, 8], strides = [1, 1, 1]} : vector<2x8x8xf32> to vector<1x8x8xf32>
    %151 = vector.shape_cast %150 : vector<1x8x8xf32> to vector<8x8xf32>
    %cst_62 = arith.constant 0.000000e+00 : f32
    %152 = vector.broadcast %cst_62 : f32 to vector<8x32xf32>
    %153 = vector.extract_strided_slice %146 {offsets = [0, 0], sizes = [8, 8], strides = [1, 1]} : vector<8x32xf32> to vector<8x8xf32>
    %154 = vector.extract_strided_slice %148 {offsets = [0, 0], sizes = [8, 8], strides = [1, 1]} : vector<32x8xf32> to vector<8x8xf32>
    %cst_63 = arith.constant dense<0.000000e+00> : vector<8x8xf32>
    %155 = tpu.matmul %153, %154, %cst_63 {dimension_numbers = #tpu.dot_dimension_numbers<[1], [0], [0], [1], [0, 0, 1, 1], [], []>} : vector<8x8xf32>, vector<8x8xf32>, vector<8x8xf32> -> vector<8x8xf32>
    %cst_64 = arith.constant 0.353553385 : f32
    %156 = vector.broadcast %cst_64 : f32 to vector<8x8xf32>
    %157 = arith.mulf %155, %156 : vector<8x8xf32>
    %158 = arith.addf %157, %151 : vector<8x8xf32>
    %cst_65 = arith.constant dense<0xFF800000> : vector<8xf32>
    %159 = vector.multi_reduction <maximumf>, %158, %cst_65 [1] : vector<8x8xf32> to vector<8xf32>
    %160 = vector.shape_cast %159 : vector<8xf32> to vector<8x1xf32>
    %161 = vector.broadcast %160 : vector<8x1xf32> to vector<8x8xf32>
    %162 = arith.subf %158, %161 : vector<8x8xf32>
    %163 = math.exp %162 : vector<8x8xf32>
    %cst_66 = arith.constant dense<0.000000e+00> : vector<8xf32>
    %164 = vector.multi_reduction <add>, %163, %cst_66 [1] : vector<8x8xf32> to vector<8xf32>
    %165 = vector.shape_cast %164 : vector<8xf32> to vector<8x1xf32>
    %166 = vector.broadcast %165 : vector<8x1xf32> to vector<8x8xf32>
    %167 = arith.divf %163, %166 : vector<8x8xf32>
    %168 = vector.extract_strided_slice %149 {offsets = [0, 0], sizes = [8, 8], strides = [1, 1]} : vector<8x32xf32> to vector<8x8xf32>
    %cst_67 = arith.constant dense<0.000000e+00> : vector<8x8xf32>
    %169 = tpu.matmul %167, %168, %cst_67 {dimension_numbers = #tpu.dot_dimension_numbers<[1], [0], [0], [1], [0, 0, 1, 1], [], []>} : vector<8x8xf32>, vector<8x8xf32>, vector<8x8xf32> -> vector<8x8xf32>
    %170 = vector.extract_strided_slice %55 {offsets = [0, 0], sizes = [8, 32], strides = [1, 1]} : vector<32x32xf32> to vector<8x32xf32>
    %cst_68 = arith.constant dense<0.000000e+00> : vector<8x32xf32>
    %171 = tpu.matmul %169, %170, %cst_68 {dimension_numbers = #tpu.dot_dimension_numbers<[1], [0], [0], [1], [0, 0, 1, 1], [], []>} : vector<8x8xf32>, vector<8x32xf32>, vector<8x32xf32> -> vector<8x32xf32>
    %172 = arith.addf %152, %171 : vector<8x32xf32>
    %173 = vector.extract_strided_slice %146 {offsets = [0, 8], sizes = [8, 8], strides = [1, 1]} : vector<8x32xf32> to vector<8x8xf32>
    %174 = vector.extract_strided_slice %148 {offsets = [8, 0], sizes = [8, 8], strides = [1, 1]} : vector<32x8xf32> to vector<8x8xf32>
    %cst_69 = arith.constant dense<0.000000e+00> : vector<8x8xf32>
    %175 = tpu.matmul %173, %174, %cst_69 {dimension_numbers = #tpu.dot_dimension_numbers<[1], [0], [0], [1], [0, 0, 1, 1], [], []>} : vector<8x8xf32>, vector<8x8xf32>, vector<8x8xf32> -> vector<8x8xf32>
    %cst_70 = arith.constant 0.353553385 : f32
    %176 = vector.broadcast %cst_70 : f32 to vector<8x8xf32>
    %177 = arith.mulf %175, %176 : vector<8x8xf32>
    %178 = arith.addf %177, %151 : vector<8x8xf32>
    %cst_71 = arith.constant dense<0xFF800000> : vector<8xf32>
    %179 = vector.multi_reduction <maximumf>, %178, %cst_71 [1] : vector<8x8xf32> to vector<8xf32>
    %180 = vector.shape_cast %179 : vector<8xf32> to vector<8x1xf32>
    %181 = vector.broadcast %180 : vector<8x1xf32> to vector<8x8xf32>
    %182 = arith.subf %178, %181 : vector<8x8xf32>
    %183 = math.exp %182 : vector<8x8xf32>
    %cst_72 = arith.constant dense<0.000000e+00> : vector<8xf32>
    %184 = vector.multi_reduction <add>, %183, %cst_72 [1] : vector<8x8xf32> to vector<8xf32>
    %185 = vector.shape_cast %184 : vector<8xf32> to vector<8x1xf32>
    %186 = vector.broadcast %185 : vector<8x1xf32> to vector<8x8xf32>
    %187 = arith.divf %183, %186 : vector<8x8xf32>
    %188 = vector.extract_strided_slice %149 {offsets = [0, 8], sizes = [8, 8], strides = [1, 1]} : vector<8x32xf32> to vector<8x8xf32>
    %cst_73 = arith.constant dense<0.000000e+00> : vector<8x8xf32>
    %189 = tpu.matmul %187, %188, %cst_73 {dimension_numbers = #tpu.dot_dimension_numbers<[1], [0], [0], [1], [0, 0, 1, 1], [], []>} : vector<8x8xf32>, vector<8x8xf32>, vector<8x8xf32> -> vector<8x8xf32>
    %190 = vector.extract_strided_slice %55 {offsets = [8, 0], sizes = [8, 32], strides = [1, 1]} : vector<32x32xf32> to vector<8x32xf32>
    %cst_74 = arith.constant dense<0.000000e+00> : vector<8x32xf32>
    %191 = tpu.matmul %189, %190, %cst_74 {dimension_numbers = #tpu.dot_dimension_numbers<[1], [0], [0], [1], [0, 0, 1, 1], [], []>} : vector<8x8xf32>, vector<8x32xf32>, vector<8x32xf32> -> vector<8x32xf32>
    %192 = arith.addf %172, %191 : vector<8x32xf32>
    %193 = vector.extract_strided_slice %146 {offsets = [0, 16], sizes = [8, 8], strides = [1, 1]} : vector<8x32xf32> to vector<8x8xf32>
    %194 = vector.extract_strided_slice %148 {offsets = [16, 0], sizes = [8, 8], strides = [1, 1]} : vector<32x8xf32> to vector<8x8xf32>
    %cst_75 = arith.constant dense<0.000000e+00> : vector<8x8xf32>
    %195 = tpu.matmul %193, %194, %cst_75 {dimension_numbers = #tpu.dot_dimension_numbers<[1], [0], [0], [1], [0, 0, 1, 1], [], []>} : vector<8x8xf32>, vector<8x8xf32>, vector<8x8xf32> -> vector<8x8xf32>
    %cst_76 = arith.constant 0.353553385 : f32
    %196 = vector.broadcast %cst_76 : f32 to vector<8x8xf32>
    %197 = arith.mulf %195, %196 : vector<8x8xf32>
    %198 = arith.addf %197, %151 : vector<8x8xf32>
    %cst_77 = arith.constant dense<0xFF800000> : vector<8xf32>
    %199 = vector.multi_reduction <maximumf>, %198, %cst_77 [1] : vector<8x8xf32> to vector<8xf32>
    %200 = vector.shape_cast %199 : vector<8xf32> to vector<8x1xf32>
    %201 = vector.broadcast %200 : vector<8x1xf32> to vector<8x8xf32>
    %202 = arith.subf %198, %201 : vector<8x8xf32>
    %203 = math.exp %202 : vector<8x8xf32>
    %cst_78 = arith.constant dense<0.000000e+00> : vector<8xf32>
    %204 = vector.multi_reduction <add>, %203, %cst_78 [1] : vector<8x8xf32> to vector<8xf32>
    %205 = vector.shape_cast %204 : vector<8xf32> to vector<8x1xf32>
    %206 = vector.broadcast %205 : vector<8x1xf32> to vector<8x8xf32>
    %207 = arith.divf %203, %206 : vector<8x8xf32>
    %208 = vector.extract_strided_slice %149 {offsets = [0, 16], sizes = [8, 8], strides = [1, 1]} : vector<8x32xf32> to vector<8x8xf32>
    %cst_79 = arith.constant dense<0.000000e+00> : vector<8x8xf32>
    %209 = tpu.matmul %207, %208, %cst_79 {dimension_numbers = #tpu.dot_dimension_numbers<[1], [0], [0], [1], [0, 0, 1, 1], [], []>} : vector<8x8xf32>, vector<8x8xf32>, vector<8x8xf32> -> vector<8x8xf32>
    %210 = vector.extract_strided_slice %55 {offsets = [16, 0], sizes = [8, 32], strides = [1, 1]} : vector<32x32xf32> to vector<8x32xf32>
    %cst_80 = arith.constant dense<0.000000e+00> : vector<8x32xf32>
    %211 = tpu.matmul %209, %210, %cst_80 {dimension_numbers = #tpu.dot_dimension_numbers<[1], [0], [0], [1], [0, 0, 1, 1], [], []>} : vector<8x8xf32>, vector<8x32xf32>, vector<8x32xf32> -> vector<8x32xf32>
    %212 = arith.addf %192, %211 : vector<8x32xf32>
    %213 = vector.extract_strided_slice %146 {offsets = [0, 24], sizes = [8, 8], strides = [1, 1]} : vector<8x32xf32> to vector<8x8xf32>
    %214 = vector.extract_strided_slice %148 {offsets = [24, 0], sizes = [8, 8], strides = [1, 1]} : vector<32x8xf32> to vector<8x8xf32>
    %cst_81 = arith.constant dense<0.000000e+00> : vector<8x8xf32>
    %215 = tpu.matmul %213, %214, %cst_81 {dimension_numbers = #tpu.dot_dimension_numbers<[1], [0], [0], [1], [0, 0, 1, 1], [], []>} : vector<8x8xf32>, vector<8x8xf32>, vector<8x8xf32> -> vector<8x8xf32>
    %cst_82 = arith.constant 0.353553385 : f32
    %216 = vector.broadcast %cst_82 : f32 to vector<8x8xf32>
    %217 = arith.mulf %215, %216 : vector<8x8xf32>
    %218 = arith.addf %217, %151 : vector<8x8xf32>
    %cst_83 = arith.constant dense<0xFF800000> : vector<8xf32>
    %219 = vector.multi_reduction <maximumf>, %218, %cst_83 [1] : vector<8x8xf32> to vector<8xf32>
    %220 = vector.shape_cast %219 : vector<8xf32> to vector<8x1xf32>
    %221 = vector.broadcast %220 : vector<8x1xf32> to vector<8x8xf32>
    %222 = arith.subf %218, %221 : vector<8x8xf32>
    %223 = math.exp %222 : vector<8x8xf32>
    %cst_84 = arith.constant dense<0.000000e+00> : vector<8xf32>
    %224 = vector.multi_reduction <add>, %223, %cst_84 [1] : vector<8x8xf32> to vector<8xf32>
    %225 = vector.shape_cast %224 : vector<8xf32> to vector<8x1xf32>
    %226 = vector.broadcast %225 : vector<8x1xf32> to vector<8x8xf32>
    %227 = arith.divf %223, %226 : vector<8x8xf32>
    %228 = vector.extract_strided_slice %149 {offsets = [0, 24], sizes = [8, 8], strides = [1, 1]} : vector<8x32xf32> to vector<8x8xf32>
    %cst_85 = arith.constant dense<0.000000e+00> : vector<8x8xf32>
    %229 = tpu.matmul %227, %228, %cst_85 {dimension_numbers = #tpu.dot_dimension_numbers<[1], [0], [0], [1], [0, 0, 1, 1], [], []>} : vector<8x8xf32>, vector<8x8xf32>, vector<8x8xf32> -> vector<8x8xf32>
    %230 = vector.extract_strided_slice %55 {offsets = [24, 0], sizes = [8, 32], strides = [1, 1]} : vector<32x32xf32> to vector<8x32xf32>
    %cst_86 = arith.constant dense<0.000000e+00> : vector<8x32xf32>
    %231 = tpu.matmul %229, %230, %cst_86 {dimension_numbers = #tpu.dot_dimension_numbers<[1], [0], [0], [1], [0, 0, 1, 1], [], []>} : vector<8x8xf32>, vector<8x32xf32>, vector<8x32xf32> -> vector<8x32xf32>
    %232 = arith.addf %212, %231 : vector<8x32xf32>
    %233 = vector.broadcast %56 : vector<1x32xf32> to vector<8x32xf32>
    %234 = arith.addf %232, %233 : vector<8x32xf32>
    %235 = tpu.concatenate %145, %234 in 0 : vector<8x32xf32>, vector<8x32xf32> -> vector<16x32xf32>
    %236 = arith.addf %0, %235 : vector<16x32xf32>
    %237 = vector.extract_strided_slice %2 {offsets = [1, 0], sizes = [1, 32], strides = [1, 1]} : vector<3x32xf32> to vector<1x32xf32>
    %238 = vector.extract_strided_slice %3 {offsets = [1, 0], sizes = [1, 32], strides = [1, 1]} : vector<3x32xf32> to vector<1x32xf32>
    %cst_87 = arith.constant dense<0.000000e+00> : vector<16xf32>
    %239 = vector.multi_reduction <add>, %236, %cst_87 [1] : vector<16x32xf32> to vector<16xf32>
    %240 = vector.shape_cast %239 : vector<16xf32> to vector<16x1xf32>
    %cst_88 = arith.constant 3.200000e+01 : f32
    %241 = vector.broadcast %cst_88 : f32 to vector<16x1xf32>
    %242 = arith.divf %240, %241 : vector<16x1xf32>
    %243 = vector.broadcast %242 : vector<16x1xf32> to vector<16x32xf32>
    %244 = arith.subf %236, %243 : vector<16x32xf32>
    %245 = arith.mulf %244, %244 : vector<16x32xf32>
    %cst_89 = arith.constant dense<0.000000e+00> : vector<16xf32>
    %246 = vector.multi_reduction <add>, %245, %cst_89 [1] : vector<16x32xf32> to vector<16xf32>
    %247 = vector.shape_cast %246 : vector<16xf32> to vector<16x1xf32>
    %cst_90 = arith.constant 0.0322580636 : f32
    %248 = vector.broadcast %cst_90 : f32 to vector<16x1xf32>
    %249 = arith.mulf %247, %248 : vector<16x1xf32>
    %250 = math.sqrt %249 : vector<16x1xf32>
    %251 = vector.broadcast %242 : vector<16x1xf32> to vector<16x32xf32>
    %252 = arith.subf %236, %251 : vector<16x32xf32>
    %253 = vector.broadcast %237 : vector<1x32xf32> to vector<16x32xf32>
    %254 = arith.mulf %253, %252 : vector<16x32xf32>
    %cst_91 = arith.constant 9.99999997E-7 : f32
    %255 = vector.broadcast %cst_91 : f32 to vector<16x1xf32>
    %256 = arith.addf %250, %255 : vector<16x1xf32>
    %257 = vector.broadcast %256 : vector<16x1xf32> to vector<16x32xf32>
    %258 = arith.divf %254, %257 : vector<16x32xf32>
    %259 = vector.broadcast %238 : vector<1x32xf32> to vector<16x32xf32>
    %260 = arith.addf %258, %259 : vector<16x32xf32>
    %c0_92 = arith.constant 0 : index
    %c0_93 = arith.constant 0 : index
    %261 = vector.load %arg8[%c0_92, %c0_93] : memref<32x32xf32, #tpu.memory_space<vmem>>, vector<32x32xf32>
    %cst_94 = arith.constant dense<0.000000e+00> : vector<16x32xf32>
    %262 = tpu.matmul %260, %261, %cst_94 {dimension_numbers = #tpu.dot_dimension_numbers<[1], [0], [0], [1], [0, 0, 1, 1], [], []>} : vector<16x32xf32>, vector<32x32xf32>, vector<16x32xf32> -> vector<16x32xf32>
    %c0_95 = arith.constant 0 : index
    %c0_96 = arith.constant 0 : index
    %263 = vector.load %arg9[%c0_95, %c0_96] : memref<1x32xf32, #tpu.memory_space<vmem>>, vector<1x32xf32>
    %264 = vector.broadcast %263 : vector<1x32xf32> to vector<16x32xf32>
    %265 = arith.addf %262, %264 : vector<16x32xf32>
    %c0_97 = arith.constant 0 : index
    %c0_98 = arith.constant 0 : index
    %266 = vector.load %arg12[%c0_97, %c0_98] : memref<32x32xf32, #tpu.memory_space<vmem>>, vector<32x32xf32>
    %c0_99 = arith.constant 0 : index
    %c0_100 = arith.constant 0 : index
    %267 = vector.load %arg13[%c0_99, %c0_100] : memref<1x32xf32, #tpu.memory_space<vmem>>, vector<1x32xf32>
    %268 = vector.extract_strided_slice %265 {offsets = [0, 0], sizes = [8, 32], strides = [1, 1]} : vector<16x32xf32> to vector<8x32xf32>
    %269 = vector.extract_strided_slice %21 {offsets = [0, 0], sizes = [8, 32], strides = [1, 1]} : vector<16x32xf32> to vector<8x32xf32>
    %270 = tpu.transpose %269, [1, 0] : vector<8x32xf32> -> vector<32x8xf32>
    %271 = vector.extract_strided_slice %22 {offsets = [0, 0], sizes = [8, 32], strides = [1, 1]} : vector<16x32xf32> to vector<8x32xf32>
    %272 = vector.extract_strided_slice %15 {offsets = [0, 0, 0], sizes = [1, 8, 8], strides = [1, 1, 1]} : vector<2x8x8xf32> to vector<1x8x8xf32>
    %273 = vector.shape_cast %272 : vector<1x8x8xf32> to vector<8x8xf32>
    %cst_101 = arith.constant 0.000000e+00 : f32
    %274 = vector.broadcast %cst_101 : f32 to vector<8x32xf32>
    %275 = vector.extract_strided_slice %268 {offsets = [0, 0], sizes = [8, 8], strides = [1, 1]} : vector<8x32xf32> to vector<8x8xf32>
    %276 = vector.extract_strided_slice %270 {offsets = [0, 0], sizes = [8, 8], strides = [1, 1]} : vector<32x8xf32> to vector<8x8xf32>
    %cst_102 = arith.constant dense<0.000000e+00> : vector<8x8xf32>
    %277 = tpu.matmul %275, %276, %cst_102 {dimension_numbers = #tpu.dot_dimension_numbers<[1], [0], [0], [1], [0, 0, 1, 1], [], []>} : vector<8x8xf32>, vector<8x8xf32>, vector<8x8xf32> -> vector<8x8xf32>
    %cst_103 = arith.constant 0.353553385 : f32
    %278 = vector.broadcast %cst_103 : f32 to vector<8x8xf32>
    %279 = arith.mulf %277, %278 : vector<8x8xf32>
    %280 = arith.addf %279, %273 : vector<8x8xf32>
    %cst_104 = arith.constant dense<0xFF800000> : vector<8xf32>
    %281 = vector.multi_reduction <maximumf>, %280, %cst_104 [1] : vector<8x8xf32> to vector<8xf32>
    %282 = vector.shape_cast %281 : vector<8xf32> to vector<8x1xf32>
    %283 = vector.broadcast %282 : vector<8x1xf32> to vector<8x8xf32>
    %284 = arith.subf %280, %283 : vector<8x8xf32>
    %285 = math.exp %284 : vector<8x8xf32>
    %cst_105 = arith.constant dense<0.000000e+00> : vector<8xf32>
    %286 = vector.multi_reduction <add>, %285, %cst_105 [1] : vector<8x8xf32> to vector<8xf32>
    %287 = vector.shape_cast %286 : vector<8xf32> to vector<8x1xf32>
    %288 = vector.broadcast %287 : vector<8x1xf32> to vector<8x8xf32>
    %289 = arith.divf %285, %288 : vector<8x8xf32>
    %290 = vector.extract_strided_slice %271 {offsets = [0, 0], sizes = [8, 8], strides = [1, 1]} : vector<8x32xf32> to vector<8x8xf32>
    %cst_106 = arith.constant dense<0.000000e+00> : vector<8x8xf32>
    %291 = tpu.matmul %289, %290, %cst_106 {dimension_numbers = #tpu.dot_dimension_numbers<[1], [0], [0], [1], [0, 0, 1, 1], [], []>} : vector<8x8xf32>, vector<8x8xf32>, vector<8x8xf32> -> vector<8x8xf32>
    %292 = vector.extract_strided_slice %266 {offsets = [0, 0], sizes = [8, 32], strides = [1, 1]} : vector<32x32xf32> to vector<8x32xf32>
    %cst_107 = arith.constant dense<0.000000e+00> : vector<8x32xf32>
    %293 = tpu.matmul %291, %292, %cst_107 {dimension_numbers = #tpu.dot_dimension_numbers<[1], [0], [0], [1], [0, 0, 1, 1], [], []>} : vector<8x8xf32>, vector<8x32xf32>, vector<8x32xf32> -> vector<8x32xf32>
    %294 = arith.addf %274, %293 : vector<8x32xf32>
    %295 = vector.extract_strided_slice %268 {offsets = [0, 8], sizes = [8, 8], strides = [1, 1]} : vector<8x32xf32> to vector<8x8xf32>
    %296 = vector.extract_strided_slice %270 {offsets = [8, 0], sizes = [8, 8], strides = [1, 1]} : vector<32x8xf32> to vector<8x8xf32>
    %cst_108 = arith.constant dense<0.000000e+00> : vector<8x8xf32>
    %297 = tpu.matmul %295, %296, %cst_108 {dimension_numbers = #tpu.dot_dimension_numbers<[1], [0], [0], [1], [0, 0, 1, 1], [], []>} : vector<8x8xf32>, vector<8x8xf32>, vector<8x8xf32> -> vector<8x8xf32>
    %cst_109 = arith.constant 0.353553385 : f32
    %298 = vector.broadcast %cst_109 : f32 to vector<8x8xf32>
    %299 = arith.mulf %297, %298 : vector<8x8xf32>
    %300 = arith.addf %299, %273 : vector<8x8xf32>
    %cst_110 = arith.constant dense<0xFF800000> : vector<8xf32>
    %301 = vector.multi_reduction <maximumf>, %300, %cst_110 [1] : vector<8x8xf32> to vector<8xf32>
    %302 = vector.shape_cast %301 : vector<8xf32> to vector<8x1xf32>
    %303 = vector.broadcast %302 : vector<8x1xf32> to vector<8x8xf32>
    %304 = arith.subf %300, %303 : vector<8x8xf32>
    %305 = math.exp %304 : vector<8x8xf32>
    %cst_111 = arith.constant dense<0.000000e+00> : vector<8xf32>
    %306 = vector.multi_reduction <add>, %305, %cst_111 [1] : vector<8x8xf32> to vector<8xf32>
    %307 = vector.shape_cast %306 : vector<8xf32> to vector<8x1xf32>
    %308 = vector.broadcast %307 : vector<8x1xf32> to vector<8x8xf32>
    %309 = arith.divf %305, %308 : vector<8x8xf32>
    %310 = vector.extract_strided_slice %271 {offsets = [0, 8], sizes = [8, 8], strides = [1, 1]} : vector<8x32xf32> to vector<8x8xf32>
    %cst_112 = arith.constant dense<0.000000e+00> : vector<8x8xf32>
    %311 = tpu.matmul %309, %310, %cst_112 {dimension_numbers = #tpu.dot_dimension_numbers<[1], [0], [0], [1], [0, 0, 1, 1], [], []>} : vector<8x8xf32>, vector<8x8xf32>, vector<8x8xf32> -> vector<8x8xf32>
    %312 = vector.extract_strided_slice %266 {offsets = [8, 0], sizes = [8, 32], strides = [1, 1]} : vector<32x32xf32> to vector<8x32xf32>
    %cst_113 = arith.constant dense<0.000000e+00> : vector<8x32xf32>
    %313 = tpu.matmul %311, %312, %cst_113 {dimension_numbers = #tpu.dot_dimension_numbers<[1], [0], [0], [1], [0, 0, 1, 1], [], []>} : vector<8x8xf32>, vector<8x32xf32>, vector<8x32xf32> -> vector<8x32xf32>
    %314 = arith.addf %294, %313 : vector<8x32xf32>
    %315 = vector.extract_strided_slice %268 {offsets = [0, 16], sizes = [8, 8], strides = [1, 1]} : vector<8x32xf32> to vector<8x8xf32>
    %316 = vector.extract_strided_slice %270 {offsets = [16, 0], sizes = [8, 8], strides = [1, 1]} : vector<32x8xf32> to vector<8x8xf32>
    %cst_114 = arith.constant dense<0.000000e+00> : vector<8x8xf32>
    %317 = tpu.matmul %315, %316, %cst_114 {dimension_numbers = #tpu.dot_dimension_numbers<[1], [0], [0], [1], [0, 0, 1, 1], [], []>} : vector<8x8xf32>, vector<8x8xf32>, vector<8x8xf32> -> vector<8x8xf32>
    %cst_115 = arith.constant 0.353553385 : f32
    %318 = vector.broadcast %cst_115 : f32 to vector<8x8xf32>
    %319 = arith.mulf %317, %318 : vector<8x8xf32>
    %320 = arith.addf %319, %273 : vector<8x8xf32>
    %cst_116 = arith.constant dense<0xFF800000> : vector<8xf32>
    %321 = vector.multi_reduction <maximumf>, %320, %cst_116 [1] : vector<8x8xf32> to vector<8xf32>
    %322 = vector.shape_cast %321 : vector<8xf32> to vector<8x1xf32>
    %323 = vector.broadcast %322 : vector<8x1xf32> to vector<8x8xf32>
    %324 = arith.subf %320, %323 : vector<8x8xf32>
    %325 = math.exp %324 : vector<8x8xf32>
    %cst_117 = arith.constant dense<0.000000e+00> : vector<8xf32>
    %326 = vector.multi_reduction <add>, %325, %cst_117 [1] : vector<8x8xf32> to vector<8xf32>
    %327 = vector.shape_cast %326 : vector<8xf32> to vector<8x1xf32>
    %328 = vector.broadcast %327 : vector<8x1xf32> to vector<8x8xf32>
    %329 = arith.divf %325, %328 : vector<8x8xf32>
    %330 = vector.extract_strided_slice %271 {offsets = [0, 16], sizes = [8, 8], strides = [1, 1]} : vector<8x32xf32> to vector<8x8xf32>
    %cst_118 = arith.constant dense<0.000000e+00> : vector<8x8xf32>
    %331 = tpu.matmul %329, %330, %cst_118 {dimension_numbers = #tpu.dot_dimension_numbers<[1], [0], [0], [1], [0, 0, 1, 1], [], []>} : vector<8x8xf32>, vector<8x8xf32>, vector<8x8xf32> -> vector<8x8xf32>
    %332 = vector.extract_strided_slice %266 {offsets = [16, 0], sizes = [8, 32], strides = [1, 1]} : vector<32x32xf32> to vector<8x32xf32>
    %cst_119 = arith.constant dense<0.000000e+00> : vector<8x32xf32>
    %333 = tpu.matmul %331, %332, %cst_119 {dimension_numbers = #tpu.dot_dimension_numbers<[1], [0], [0], [1], [0, 0, 1, 1], [], []>} : vector<8x8xf32>, vector<8x32xf32>, vector<8x32xf32> -> vector<8x32xf32>
    %334 = arith.addf %314, %333 : vector<8x32xf32>
    %335 = vector.extract_strided_slice %268 {offsets = [0, 24], sizes = [8, 8], strides = [1, 1]} : vector<8x32xf32> to vector<8x8xf32>
    %336 = vector.extract_strided_slice %270 {offsets = [24, 0], sizes = [8, 8], strides = [1, 1]} : vector<32x8xf32> to vector<8x8xf32>
    %cst_120 = arith.constant dense<0.000000e+00> : vector<8x8xf32>
    %337 = tpu.matmul %335, %336, %cst_120 {dimension_numbers = #tpu.dot_dimension_numbers<[1], [0], [0], [1], [0, 0, 1, 1], [], []>} : vector<8x8xf32>, vector<8x8xf32>, vector<8x8xf32> -> vector<8x8xf32>
    %cst_121 = arith.constant 0.353553385 : f32
    %338 = vector.broadcast %cst_121 : f32 to vector<8x8xf32>
    %339 = arith.mulf %337, %338 : vector<8x8xf32>
    %340 = arith.addf %339, %273 : vector<8x8xf32>
    %cst_122 = arith.constant dense<0xFF800000> : vector<8xf32>
    %341 = vector.multi_reduction <maximumf>, %340, %cst_122 [1] : vector<8x8xf32> to vector<8xf32>
    %342 = vector.shape_cast %341 : vector<8xf32> to vector<8x1xf32>
    %343 = vector.broadcast %342 : vector<8x1xf32> to vector<8x8xf32>
    %344 = arith.subf %340, %343 : vector<8x8xf32>
    %345 = math.exp %344 : vector<8x8xf32>
    %cst_123 = arith.constant dense<0.000000e+00> : vector<8xf32>
    %346 = vector.multi_reduction <add>, %345, %cst_123 [1] : vector<8x8xf32> to vector<8xf32>
    %347 = vector.shape_cast %346 : vector<8xf32> to vector<8x1xf32>
    %348 = vector.broadcast %347 : vector<8x1xf32> to vector<8x8xf32>
    %349 = arith.divf %345, %348 : vector<8x8xf32>
    %350 = vector.extract_strided_slice %271 {offsets = [0, 24], sizes = [8, 8], strides = [1, 1]} : vector<8x32xf32> to vector<8x8xf32>
    %cst_124 = arith.constant dense<0.000000e+00> : vector<8x8xf32>
    %351 = tpu.matmul %349, %350, %cst_124 {dimension_numbers = #tpu.dot_dimension_numbers<[1], [0], [0], [1], [0, 0, 1, 1], [], []>} : vector<8x8xf32>, vector<8x8xf32>, vector<8x8xf32> -> vector<8x8xf32>
    %352 = vector.extract_strided_slice %266 {offsets = [24, 0], sizes = [8, 32], strides = [1, 1]} : vector<32x32xf32> to vector<8x32xf32>
    %cst_125 = arith.constant dense<0.000000e+00> : vector<8x32xf32>
    %353 = tpu.matmul %351, %352, %cst_125 {dimension_numbers = #tpu.dot_dimension_numbers<[1], [0], [0], [1], [0, 0, 1, 1], [], []>} : vector<8x8xf32>, vector<8x32xf32>, vector<8x32xf32> -> vector<8x32xf32>
    %354 = arith.addf %334, %353 : vector<8x32xf32>
    %355 = vector.broadcast %267 : vector<1x32xf32> to vector<8x32xf32>
    %356 = arith.addf %354, %355 : vector<8x32xf32>
    %357 = vector.extract_strided_slice %265 {offsets = [8, 0], sizes = [8, 32], strides = [1, 1]} : vector<16x32xf32> to vector<8x32xf32>
    %358 = vector.extract_strided_slice %21 {offsets = [8, 0], sizes = [8, 32], strides = [1, 1]} : vector<16x32xf32> to vector<8x32xf32>
    %359 = tpu.transpose %358, [1, 0] : vector<8x32xf32> -> vector<32x8xf32>
    %360 = vector.extract_strided_slice %22 {offsets = [8, 0], sizes = [8, 32], strides = [1, 1]} : vector<16x32xf32> to vector<8x32xf32>
    %361 = vector.extract_strided_slice %15 {offsets = [1, 0, 0], sizes = [1, 8, 8], strides = [1, 1, 1]} : vector<2x8x8xf32> to vector<1x8x8xf32>
    %362 = vector.shape_cast %361 : vector<1x8x8xf32> to vector<8x8xf32>
    %cst_126 = arith.constant 0.000000e+00 : f32
    %363 = vector.broadcast %cst_126 : f32 to vector<8x32xf32>
    %364 = vector.extract_strided_slice %357 {offsets = [0, 0], sizes = [8, 8], strides = [1, 1]} : vector<8x32xf32> to vector<8x8xf32>
    %365 = vector.extract_strided_slice %359 {offsets = [0, 0], sizes = [8, 8], strides = [1, 1]} : vector<32x8xf32> to vector<8x8xf32>
    %cst_127 = arith.constant dense<0.000000e+00> : vector<8x8xf32>
    %366 = tpu.matmul %364, %365, %cst_127 {dimension_numbers = #tpu.dot_dimension_numbers<[1], [0], [0], [1], [0, 0, 1, 1], [], []>} : vector<8x8xf32>, vector<8x8xf32>, vector<8x8xf32> -> vector<8x8xf32>
    %cst_128 = arith.constant 0.353553385 : f32
    %367 = vector.broadcast %cst_128 : f32 to vector<8x8xf32>
    %368 = arith.mulf %366, %367 : vector<8x8xf32>
    %369 = arith.addf %368, %362 : vector<8x8xf32>
    %cst_129 = arith.constant dense<0xFF800000> : vector<8xf32>
    %370 = vector.multi_reduction <maximumf>, %369, %cst_129 [1] : vector<8x8xf32> to vector<8xf32>
    %371 = vector.shape_cast %370 : vector<8xf32> to vector<8x1xf32>
    %372 = vector.broadcast %371 : vector<8x1xf32> to vector<8x8xf32>
    %373 = arith.subf %369, %372 : vector<8x8xf32>
    %374 = math.exp %373 : vector<8x8xf32>
    %cst_130 = arith.constant dense<0.000000e+00> : vector<8xf32>
    %375 = vector.multi_reduction <add>, %374, %cst_130 [1] : vector<8x8xf32> to vector<8xf32>
    %376 = vector.shape_cast %375 : vector<8xf32> to vector<8x1xf32>
    %377 = vector.broadcast %376 : vector<8x1xf32> to vector<8x8xf32>
    %378 = arith.divf %374, %377 : vector<8x8xf32>
    %379 = vector.extract_strided_slice %360 {offsets = [0, 0], sizes = [8, 8], strides = [1, 1]} : vector<8x32xf32> to vector<8x8xf32>
    %cst_131 = arith.constant dense<0.000000e+00> : vector<8x8xf32>
    %380 = tpu.matmul %378, %379, %cst_131 {dimension_numbers = #tpu.dot_dimension_numbers<[1], [0], [0], [1], [0, 0, 1, 1], [], []>} : vector<8x8xf32>, vector<8x8xf32>, vector<8x8xf32> -> vector<8x8xf32>
    %381 = vector.extract_strided_slice %266 {offsets = [0, 0], sizes = [8, 32], strides = [1, 1]} : vector<32x32xf32> to vector<8x32xf32>
    %cst_132 = arith.constant dense<0.000000e+00> : vector<8x32xf32>
    %382 = tpu.matmul %380, %381, %cst_132 {dimension_numbers = #tpu.dot_dimension_numbers<[1], [0], [0], [1], [0, 0, 1, 1], [], []>} : vector<8x8xf32>, vector<8x32xf32>, vector<8x32xf32> -> vector<8x32xf32>
    %383 = arith.addf %363, %382 : vector<8x32xf32>
    %384 = vector.extract_strided_slice %357 {offsets = [0, 8], sizes = [8, 8], strides = [1, 1]} : vector<8x32xf32> to vector<8x8xf32>
    %385 = vector.extract_strided_slice %359 {offsets = [8, 0], sizes = [8, 8], strides = [1, 1]} : vector<32x8xf32> to vector<8x8xf32>
    %cst_133 = arith.constant dense<0.000000e+00> : vector<8x8xf32>
    %386 = tpu.matmul %384, %385, %cst_133 {dimension_numbers = #tpu.dot_dimension_numbers<[1], [0], [0], [1], [0, 0, 1, 1], [], []>} : vector<8x8xf32>, vector<8x8xf32>, vector<8x8xf32> -> vector<8x8xf32>
    %cst_134 = arith.constant 0.353553385 : f32
    %387 = vector.broadcast %cst_134 : f32 to vector<8x8xf32>
    %388 = arith.mulf %386, %387 : vector<8x8xf32>
    %389 = arith.addf %388, %362 : vector<8x8xf32>
    %cst_135 = arith.constant dense<0xFF800000> : vector<8xf32>
    %390 = vector.multi_reduction <maximumf>, %389, %cst_135 [1] : vector<8x8xf32> to vector<8xf32>
    %391 = vector.shape_cast %390 : vector<8xf32> to vector<8x1xf32>
    %392 = vector.broadcast %391 : vector<8x1xf32> to vector<8x8xf32>
    %393 = arith.subf %389, %392 : vector<8x8xf32>
    %394 = math.exp %393 : vector<8x8xf32>
    %cst_136 = arith.constant dense<0.000000e+00> : vector<8xf32>
    %395 = vector.multi_reduction <add>, %394, %cst_136 [1] : vector<8x8xf32> to vector<8xf32>
    %396 = vector.shape_cast %395 : vector<8xf32> to vector<8x1xf32>
    %397 = vector.broadcast %396 : vector<8x1xf32> to vector<8x8xf32>
    %398 = arith.divf %394, %397 : vector<8x8xf32>
    %399 = vector.extract_strided_slice %360 {offsets = [0, 8], sizes = [8, 8], strides = [1, 1]} : vector<8x32xf32> to vector<8x8xf32>
    %cst_137 = arith.constant dense<0.000000e+00> : vector<8x8xf32>
    %400 = tpu.matmul %398, %399, %cst_137 {dimension_numbers = #tpu.dot_dimension_numbers<[1], [0], [0], [1], [0, 0, 1, 1], [], []>} : vector<8x8xf32>, vector<8x8xf32>, vector<8x8xf32> -> vector<8x8xf32>
    %401 = vector.extract_strided_slice %266 {offsets = [8, 0], sizes = [8, 32], strides = [1, 1]} : vector<32x32xf32> to vector<8x32xf32>
    %cst_138 = arith.constant dense<0.000000e+00> : vector<8x32xf32>
    %402 = tpu.matmul %400, %401, %cst_138 {dimension_numbers = #tpu.dot_dimension_numbers<[1], [0], [0], [1], [0, 0, 1, 1], [], []>} : vector<8x8xf32>, vector<8x32xf32>, vector<8x32xf32> -> vector<8x32xf32>
    %403 = arith.addf %383, %402 : vector<8x32xf32>
    %404 = vector.extract_strided_slice %357 {offsets = [0, 16], sizes = [8, 8], strides = [1, 1]} : vector<8x32xf32> to vector<8x8xf32>
    %405 = vector.extract_strided_slice %359 {offsets = [16, 0], sizes = [8, 8], strides = [1, 1]} : vector<32x8xf32> to vector<8x8xf32>
    %cst_139 = arith.constant dense<0.000000e+00> : vector<8x8xf32>
    %406 = tpu.matmul %404, %405, %cst_139 {dimension_numbers = #tpu.dot_dimension_numbers<[1], [0], [0], [1], [0, 0, 1, 1], [], []>} : vector<8x8xf32>, vector<8x8xf32>, vector<8x8xf32> -> vector<8x8xf32>
    %cst_140 = arith.constant 0.353553385 : f32
    %407 = vector.broadcast %cst_140 : f32 to vector<8x8xf32>
    %408 = arith.mulf %406, %407 : vector<8x8xf32>
    %409 = arith.addf %408, %362 : vector<8x8xf32>
    %cst_141 = arith.constant dense<0xFF800000> : vector<8xf32>
    %410 = vector.multi_reduction <maximumf>, %409, %cst_141 [1] : vector<8x8xf32> to vector<8xf32>
    %411 = vector.shape_cast %410 : vector<8xf32> to vector<8x1xf32>
    %412 = vector.broadcast %411 : vector<8x1xf32> to vector<8x8xf32>
    %413 = arith.subf %409, %412 : vector<8x8xf32>
    %414 = math.exp %413 : vector<8x8xf32>
    %cst_142 = arith.constant dense<0.000000e+00> : vector<8xf32>
    %415 = vector.multi_reduction <add>, %414, %cst_142 [1] : vector<8x8xf32> to vector<8xf32>
    %416 = vector.shape_cast %415 : vector<8xf32> to vector<8x1xf32>
    %417 = vector.broadcast %416 : vector<8x1xf32> to vector<8x8xf32>
    %418 = arith.divf %414, %417 : vector<8x8xf32>
    %419 = vector.extract_strided_slice %360 {offsets = [0, 16], sizes = [8, 8], strides = [1, 1]} : vector<8x32xf32> to vector<8x8xf32>
    %cst_143 = arith.constant dense<0.000000e+00> : vector<8x8xf32>
    %420 = tpu.matmul %418, %419, %cst_143 {dimension_numbers = #tpu.dot_dimension_numbers<[1], [0], [0], [1], [0, 0, 1, 1], [], []>} : vector<8x8xf32>, vector<8x8xf32>, vector<8x8xf32> -> vector<8x8xf32>
    %421 = vector.extract_strided_slice %266 {offsets = [16, 0], sizes = [8, 32], strides = [1, 1]} : vector<32x32xf32> to vector<8x32xf32>
    %cst_144 = arith.constant dense<0.000000e+00> : vector<8x32xf32>
    %422 = tpu.matmul %420, %421, %cst_144 {dimension_numbers = #tpu.dot_dimension_numbers<[1], [0], [0], [1], [0, 0, 1, 1], [], []>} : vector<8x8xf32>, vector<8x32xf32>, vector<8x32xf32> -> vector<8x32xf32>
    %423 = arith.addf %403, %422 : vector<8x32xf32>
    %424 = vector.extract_strided_slice %357 {offsets = [0, 24], sizes = [8, 8], strides = [1, 1]} : vector<8x32xf32> to vector<8x8xf32>
    %425 = vector.extract_strided_slice %359 {offsets = [24, 0], sizes = [8, 8], strides = [1, 1]} : vector<32x8xf32> to vector<8x8xf32>
    %cst_145 = arith.constant dense<0.000000e+00> : vector<8x8xf32>
    %426 = tpu.matmul %424, %425, %cst_145 {dimension_numbers = #tpu.dot_dimension_numbers<[1], [0], [0], [1], [0, 0, 1, 1], [], []>} : vector<8x8xf32>, vector<8x8xf32>, vector<8x8xf32> -> vector<8x8xf32>
    %cst_146 = arith.constant 0.353553385 : f32
    %427 = vector.broadcast %cst_146 : f32 to vector<8x8xf32>
    %428 = arith.mulf %426, %427 : vector<8x8xf32>
    %429 = arith.addf %428, %362 : vector<8x8xf32>
    %cst_147 = arith.constant dense<0xFF800000> : vector<8xf32>
    %430 = vector.multi_reduction <maximumf>, %429, %cst_147 [1] : vector<8x8xf32> to vector<8xf32>
    %431 = vector.shape_cast %430 : vector<8xf32> to vector<8x1xf32>
    %432 = vector.broadcast %431 : vector<8x1xf32> to vector<8x8xf32>
    %433 = arith.subf %429, %432 : vector<8x8xf32>
    %434 = math.exp %433 : vector<8x8xf32>
    %cst_148 = arith.constant dense<0.000000e+00> : vector<8xf32>
    %435 = vector.multi_reduction <add>, %434, %cst_148 [1] : vector<8x8xf32> to vector<8xf32>
    %436 = vector.shape_cast %435 : vector<8xf32> to vector<8x1xf32>
    %437 = vector.broadcast %436 : vector<8x1xf32> to vector<8x8xf32>
    %438 = arith.divf %434, %437 : vector<8x8xf32>
    %439 = vector.extract_strided_slice %360 {offsets = [0, 24], sizes = [8, 8], strides = [1, 1]} : vector<8x32xf32> to vector<8x8xf32>
    %cst_149 = arith.constant dense<0.000000e+00> : vector<8x8xf32>
    %440 = tpu.matmul %438, %439, %cst_149 {dimension_numbers = #tpu.dot_dimension_numbers<[1], [0], [0], [1], [0, 0, 1, 1], [], []>} : vector<8x8xf32>, vector<8x8xf32>, vector<8x8xf32> -> vector<8x8xf32>
    %441 = vector.extract_strided_slice %266 {offsets = [24, 0], sizes = [8, 32], strides = [1, 1]} : vector<32x32xf32> to vector<8x32xf32>
    %cst_150 = arith.constant dense<0.000000e+00> : vector<8x32xf32>
    %442 = tpu.matmul %440, %441, %cst_150 {dimension_numbers = #tpu.dot_dimension_numbers<[1], [0], [0], [1], [0, 0, 1, 1], [], []>} : vector<8x8xf32>, vector<8x32xf32>, vector<8x32xf32> -> vector<8x32xf32>
    %443 = arith.addf %423, %442 : vector<8x32xf32>
    %444 = vector.broadcast %267 : vector<1x32xf32> to vector<8x32xf32>
    %445 = arith.addf %443, %444 : vector<8x32xf32>
    %446 = tpu.concatenate %356, %445 in 0 : vector<8x32xf32>, vector<8x32xf32> -> vector<16x32xf32>
    %447 = arith.addf %236, %446 : vector<16x32xf32>
    %448 = vector.extract_strided_slice %2 {offsets = [2, 0], sizes = [1, 32], strides = [1, 1]} : vector<3x32xf32> to vector<1x32xf32>
    %449 = vector.extract_strided_slice %3 {offsets = [2, 0], sizes = [1, 32], strides = [1, 1]} : vector<3x32xf32> to vector<1x32xf32>
    %cst_151 = arith.constant dense<0.000000e+00> : vector<16xf32>
    %450 = vector.multi_reduction <add>, %447, %cst_151 [1] : vector<16x32xf32> to vector<16xf32>
    %451 = vector.shape_cast %450 : vector<16xf32> to vector<16x1xf32>
    %cst_152 = arith.constant 3.200000e+01 : f32
    %452 = vector.broadcast %cst_152 : f32 to vector<16x1xf32>
    %453 = arith.divf %451, %452 : vector<16x1xf32>
    %454 = vector.broadcast %453 : vector<16x1xf32> to vector<16x32xf32>
    %455 = arith.subf %447, %454 : vector<16x32xf32>
    %456 = arith.mulf %455, %455 : vector<16x32xf32>
    %cst_153 = arith.constant dense<0.000000e+00> : vector<16xf32>
    %457 = vector.multi_reduction <add>, %456, %cst_153 [1] : vector<16x32xf32> to vector<16xf32>
    %458 = vector.shape_cast %457 : vector<16xf32> to vector<16x1xf32>
    %cst_154 = arith.constant 0.0322580636 : f32
    %459 = vector.broadcast %cst_154 : f32 to vector<16x1xf32>
    %460 = arith.mulf %458, %459 : vector<16x1xf32>
    %461 = math.sqrt %460 : vector<16x1xf32>
    %462 = vector.broadcast %453 : vector<16x1xf32> to vector<16x32xf32>
    %463 = arith.subf %447, %462 : vector<16x32xf32>
    %464 = vector.broadcast %448 : vector<1x32xf32> to vector<16x32xf32>
    %465 = arith.mulf %464, %463 : vector<16x32xf32>
    %cst_155 = arith.constant 9.99999997E-7 : f32
    %466 = vector.broadcast %cst_155 : f32 to vector<16x1xf32>
    %467 = arith.addf %461, %466 : vector<16x1xf32>
    %468 = vector.broadcast %467 : vector<16x1xf32> to vector<16x32xf32>
    %469 = arith.divf %465, %468 : vector<16x32xf32>
    %470 = vector.broadcast %449 : vector<1x32xf32> to vector<16x32xf32>
    %471 = arith.addf %469, %470 : vector<16x32xf32>
    %c0_156 = arith.constant 0 : index
    %c0_157 = arith.constant 0 : index
    %472 = vector.load %arg16[%c0_156, %c0_157] : memref<32x64xf32, #tpu.memory_space<vmem>>, vector<32x64xf32>
    %cst_158 = arith.constant dense<0.000000e+00> : vector<16x64xf32>
    %473 = tpu.matmul %471, %472, %cst_158 {dimension_numbers = #tpu.dot_dimension_numbers<[1], [0], [0], [1], [0, 0, 1, 1], [], []>} : vector<16x32xf32>, vector<32x64xf32>, vector<16x64xf32> -> vector<16x64xf32>
    %c0_159 = arith.constant 0 : index
    %c0_160 = arith.constant 0 : index
    %474 = vector.load %arg17[%c0_159, %c0_160] : memref<1x64xf32, #tpu.memory_space<vmem>>, vector<1x64xf32>
    %475 = vector.broadcast %474 : vector<1x64xf32> to vector<16x64xf32>
    %476 = arith.addf %473, %475 : vector<16x64xf32>
    %cst_161 = arith.constant 0.000000e+00 : f32
    %477 = vector.broadcast %cst_161 : f32 to vector<16x64xf32>
    %478 = arith.maximumf %476, %477 : vector<16x64xf32>
    %c0_162 = arith.constant 0 : index
    %c0_163 = arith.constant 0 : index
    %479 = vector.load %arg18[%c0_162, %c0_163] : memref<64x32xf32, #tpu.memory_space<vmem>>, vector<64x32xf32>
    %cst_164 = arith.constant dense<0.000000e+00> : vector<16x32xf32>
    %480 = tpu.matmul %478, %479, %cst_164 {dimension_numbers = #tpu.dot_dimension_numbers<[1], [0], [0], [1], [0, 0, 1, 1], [], []>} : vector<16x64xf32>, vector<64x32xf32>, vector<16x32xf32> -> vector<16x32xf32>
    %481 = arith.addf %447, %480 : vector<16x32xf32>
    %c0_165 = arith.constant 0 : index
    %c0_166 = arith.constant 0 : index
    %482 = vector.load %arg19[%c0_165, %c0_166] : memref<1x32xf32, #tpu.memory_space<vmem>>, vector<1x32xf32>
    %483 = vector.broadcast %482 : vector<1x32xf32> to vector<16x32xf32>
    %484 = arith.addf %481, %483 : vector<16x32xf32>
    %c0_167 = arith.constant 0 : index
    %c0_168 = arith.constant 0 : index
    %485 = vector.load %arg20[%c0_167, %c0_168] : memref<16x32xf32, #tpu.memory_space<vmem>>, vector<16x32xf32>
    tpu.vector_store %arg20[%c0_167, %c0_168], %484 {strides = array<i32>} : memref<16x32xf32, #tpu.memory_space<vmem>>, vector<16x32xf32>,
    return
  }
}

</mosaic_0001>

<llo_original>
// kernel: tpu_custom_call.1
$region0: #{tpu_custom_call.1}
  #allocation0 [shape = 'u32[]', space=smem, size = 0x4, offset = 0x4, fixed_abs, tag = 'smem constant byte address 0x4 - core index']
  #allocation1 [shape = 'u32[144,128]{1,0:T(1,128)}', space=vmem, size = 0x12000, scoped, tag = 'internal scratch']
  %s0 = inlined_call_operand.hbm [shape: f32[16,32], index: 0, kind: input, shape index: {}]
  %s1 = inlined_call_operand.hbm [shape: f32[16,32], index: 1, kind: input, shape index: {}]
  %s2 = inlined_call_operand.hbm [shape: f32[2,8,8], index: 2, kind: input, shape index: {}]
  %s3 = inlined_call_operand.hbm [shape: f32[2,8,8], index: 3, kind: input, shape index: {}]
  %s4 = inlined_call_operand.vmem [shape: f32[32,96], index: 4, kind: input, shape index: {}]
  %s5 = inlined_call_operand.hbm [shape: f32[1,96], index: 5, kind: input, shape index: {}]
  %s6 = inlined_call_operand.vmem [shape: f32[32,32], index: 6, kind: input, shape index: {}]
  %s7 = inlined_call_operand.hbm [shape: f32[1,32], index: 7, kind: input, shape index: {}]
  %s8 = inlined_call_operand.vmem [shape: f32[32,32], index: 8, kind: input, shape index: {}]
  %s9 = inlined_call_operand.hbm [shape: f32[1,32], index: 9, kind: input, shape index: {}]
  %s10 = inlined_call_operand.hbm [shape: f32[32,64], index: 10, kind: input, shape index: {}]
  %s11 = inlined_call_operand.hbm [shape: f32[1,64], index: 11, kind: input, shape index: {}]
  %s12 = inlined_call_operand.hbm [shape: f32[32,32], index: 12, kind: input, shape index: {}]
  %s13 = inlined_call_operand.hbm [shape: f32[1,32], index: 13, kind: input, shape index: {}]
  %s14 = inlined_call_operand.hbm [shape: f32[3,32], index: 14, kind: input, shape index: {}]
  %s15 = inlined_call_operand.hbm [shape: f32[3,32], index: 15, kind: input, shape index: {}]
  %s16 = inlined_call_operand.hbm [shape: f32[32,64], index: 16, kind: input, shape index: {}]
  %s17 = inlined_call_operand.hbm [shape: f32[1,64], index: 17, kind: input, shape index: {}]
  %s18 = inlined_call_operand.vmem [shape: f32[64,32], index: 18, kind: input, shape index: {}]
  %s19 = inlined_call_operand.vmem [shape: f32[1,32], index: 19, kind: input, shape index: {}]
  %s20 = inlined_call_operand.hbm [shape: f32[16,32], index: 20, kind: output, shape index: {}]
  %s21 = sld [smem:[#allocation0]]
  $region150: #{tpu_custom_call.1} parent=0
    _
  %s23 = ssub.s32 1, %s21
  %s24 = scalar_select 0, %s23, %s21
  $region1: #{tpu_custom_call.1} parent=0
    #allocation2 [shape = 'u8[8192]{0}', space=vmem, size = 0x2000, scoped, tag = 'input window, operand 0, single buffered']
    #allocation3 [shape = 's32[1]{0}', space=sflag, size = 0x4, scoped, tag = 'scoped memory for tpu_custom_call.1']
    #allocation4 [shape = 's32[1]{0}', space=sflag, size = 0x4, scoped, tag = 'scoped memory for tpu_custom_call.1']
    #allocation5 [shape = 'u8[8192]{0}', space=vmem, size = 0x2000, scoped, tag = 'input window, operand 1, single buffered']
    #allocation6 [shape = 's32[1]{0}', space=sflag, size = 0x4, scoped, tag = 'scoped memory for tpu_custom_call.1']
    #allocation7 [shape = 'u8[8192]{0}', space=vmem, size = 0x2000, scoped, tag = 'input window, operand 2, single buffered']
    #allocation8 [shape = 'u8[8192]{0}', space=vmem, size = 0x2000, scoped, tag = 'input window, operand 3, single buffered']
    #allocation9 [shape = 's32[1]{0}', space=sflag, size = 0x4, scoped, tag = 'scoped memory for tpu_custom_call.1']
    #allocation10 [shape = 'u8[512]{0}', space=vmem, size = 0x400, scoped, tag = 'input window, operand 5, single buffered']
    #allocation11 [shape = 'u8[512]{0}', space=vmem, size = 0x400, scoped, tag = 'input window, operand 7, single buffered']
    #allocation12 [shape = 's32[1]{0}', space=sflag, size = 0x4, scoped, tag = 'scoped memory for tpu_custom_call.1']
    #allocation13 [shape = 'u8[512]{0}', space=vmem, size = 0x400, scoped, tag = 'input window, operand 9, single buffered']
    #allocation14 [shape = 'u8[16384]{0}', space=vmem, size = 0x4000, scoped, tag = 'input window, operand 10, single buffered']
    #allocation15 [shape = 's32[1]{0}', space=sflag, size = 0x4, scoped, tag = 'scoped memory for tpu_custom_call.1']
    #allocation16 [shape = 'u8[512]{0}', space=vmem, size = 0x400, scoped, tag = 'input window, operand 11, single buffered']
    #allocation17 [shape = 'u8[16384]{0}', space=vmem, size = 0x4000, scoped, tag = 'input window, operand 12, single buffered']
    #allocation18 [shape = 's32[1]{0}', space=sflag, size = 0x4, scoped, tag = 'scoped memory for tpu_custom_call.1']
    #allocation19 [shape = 'u8[512]{0}', space=vmem, size = 0x400, scoped, tag = 'input window, operand 13, single buffered']
    #allocation20 [shape = 'u8[2048]{0}', space=vmem, size = 0x800, scoped, tag = 'input window, operand 14, single buffered']
    #allocation21 [shape = 's32[1]{0}', space=sflag, size = 0x4, scoped, tag = 'scoped memory for tpu_custom_call.1']
    #allocation22 [shape = 'u8[2048]{0}', space=vmem, size = 0x800, scoped, tag = 'input window, operand 15, single buffered']
    #allocation23 [shape = 'u8[16384]{0}', space=vmem, size = 0x4000, scoped, tag = 'input window, operand 16, single buffered']
    #allocation24 [shape = 's32[1]{0}', space=sflag, size = 0x4, scoped, tag = 'scoped memory for tpu_custom_call.1']
    #allocation25 [shape = 'u8[512]{0}', space=vmem, size = 0x400, scoped, tag = 'input window, operand 17, single buffered']
    #allocation26 [shape = 'u8[8192]{0}', space=vmem, size = 0x2000, scoped, tag = 'output window, operand 0, single buffered']
    %25 = vsyncpa [#allocation3], 0
    %26 = vsyncpa [#allocation6], 0
    %27 = vsyncpa [#allocation9], 0
    %28 = vsyncpa [#allocation12], 0
    %29 = vsyncpa [#allocation15], 0
    %30 = vsyncpa [#allocation18], 0
    %31 = vsyncpa [#allocation21], 0
    %32 = vsyncpa [#allocation24], 0
    %33 = vsyncpa [#allocation4], 0
    // Predicated region
    $region2: #{tpu_custom_call.1} parent=1 // pred_check
      _
    $region3: #{tpu_custom_call.1} parent=1 // pred_check_branch
      %35 = sbr.rel (0) target = $region5
    $region4: #{tpu_custom_call.1} parent=1 // pred_region
      %s37 = ssub.s32 256, 256
      %38 = vsyncadd [#allocation3], %s37
      %s39 = sshll.u32 [#allocation2], 4
      %s40 = int_to_ptr.vmem [resolvable:$true] %s39
      %45 = dma.hbm_to_vmem [thread:$0]  %s0, 256, %s40, [#allocation3], 128, 128, 8
    $region5: #{tpu_custom_call.1} parent=1 // pred_fallthru
      _
    // Predicated region
    $region6: #{tpu_custom_call.1} parent=1 // pred_check
      _
    $region7: #{tpu_custom_call.1} parent=1 // pred_check_branch
      %47 = sbr.rel (0) target = $region9
    $region8: #{tpu_custom_call.1} parent=1 // pred_region
      %s49 = ssub.s32 256, 256
      %50 = vsyncadd [#allocation6], %s49
      %s51 = sshll.u32 [#allocation5], 4
      %s52 = int_to_ptr.vmem [resolvable:$true] %s51
      %57 = dma.hbm_to_vmem [thread:$0]  %s1, 256, %s52, [#allocation6], 128, 128, 8
    $region9: #{tpu_custom_call.1} parent=1 // pred_fallthru
      _
    // Predicated region
    $region10: #{tpu_custom_call.1} parent=1 // pred_check
      _
    $region11: #{tpu_custom_call.1} parent=1 // pred_check_branch
      %59 = sbr.rel (0) target = $region13
    $region12: #{tpu_custom_call.1} parent=1 // pred_region
      %s61 = ssub.s32 256, 256
      %62 = vsyncadd [#allocation6], %s61
      %s63 = sshll.u32 [#allocation7], 4
      %s64 = int_to_ptr.vmem [resolvable:$true] %s63
      %69 = dma.hbm_to_vmem [thread:$0]  %s2, 256, %s64, [#allocation6], 128, 128, 8
    $region13: #{tpu_custom_call.1} parent=1 // pred_fallthru
      _
    // Predicated region
    $region14: #{tpu_custom_call.1} parent=1 // pred_check
      _
    $region15: #{tpu_custom_call.1} parent=1 // pred_check_branch
      %71 = sbr.rel (0) target = $region17
    $region16: #{tpu_custom_call.1} parent=1 // pred_region
      %s73 = ssub.s32 256, 256
      %74 = vsyncadd [#allocation9], %s73
      %s75 = sshll.u32 [#allocation8], 4
      %s76 = int_to_ptr.vmem [resolvable:$true] %s75
      %81 = dma.hbm_to_vmem [thread:$0]  %s3, 256, %s76, [#allocation9], 128, 128, 8
    $region17: #{tpu_custom_call.1} parent=1 // pred_fallthru
      _
    // Predicated region
    $region18: #{tpu_custom_call.1} parent=1 // pred_check
      _
    $region19: #{tpu_custom_call.1} parent=1 // pred_check_branch
      %83 = sbr.rel (0) target = $region21
    $region20: #{tpu_custom_call.1} parent=1 // pred_region
      _
    $region21: #{tpu_custom_call.1} parent=1 // pred_fallthru
      _
    // Predicated region
    $region22: #{tpu_custom_call.1} parent=1 // pred_check
      _
    $region23: #{tpu_custom_call.1} parent=1 // pred_check_branch
      %85 = sbr.rel (0) target = $region25
    $region24: #{tpu_custom_call.1} parent=1 // pred_region
      %s87 = ssub.s32 16, 16
      %88 = vsyncadd [#allocation9], %s87
      %s90 = sshll.u32 [#allocation10], 4
      %s91 = int_to_ptr.vmem [resolvable:$true] %s90
      %93 = dma.hbm_to_vmem [thread:$0]  %s5, 16, %s91, [#allocation9]
    $region25: #{tpu_custom_call.1} parent=1 // pred_fallthru
      _
    // Predicated region
    $region26: #{tpu_custom_call.1} parent=1 // pred_check
      _
    $region27: #{tpu_custom_call.1} parent=1 // pred_check_branch
      %95 = sbr.rel (0) target = $region29
    $region28: #{tpu_custom_call.1} parent=1 // pred_region
      _
    $region29: #{tpu_custom_call.1} parent=1 // pred_fallthru
      _
    // Predicated region
    $region30: #{tpu_custom_call.1} parent=1 // pred_check
      _
    $region31: #{tpu_custom_call.1} parent=1 // pred_check_branch
      %97 = sbr.rel (0) target = $region33
    $region32: #{tpu_custom_call.1} parent=1 // pred_region
      %s99 = ssub.s32 16, 16
      %100 = vsyncadd [#allocation12], %s99
      %s102 = sshll.u32 [#allocation11], 4
      %s103 = int_to_ptr.vmem [resolvable:$true] %s102
      %105 = dma.hbm_to_vmem [thread:$0]  %s7, 16, %s103, [#allocation12]
    $region33: #{tpu_custom_call.1} parent=1 // pred_fallthru
      _
    // Predicated region
    $region34: #{tpu_custom_call.1} parent=1 // pred_check
      _
    $region35: #{tpu_custom_call.1} parent=1 // pred_check_branch
      %107 = sbr.rel (0) target = $region37
    $region36: #{tpu_custom_call.1} parent=1 // pred_region
      _
    $region37: #{tpu_custom_call.1} parent=1 // pred_fallthru
      _
    // Predicated region
    $region38: #{tpu_custom_call.1} parent=1 // pred_check
      _
    $region39: #{tpu_custom_call.1} parent=1 // pred_check_branch
      %109 = sbr.rel (0) target = $region41
    $region40: #{tpu_custom_call.1} parent=1 // pred_region
      %s111 = ssub.s32 16, 16
      %112 = vsyncadd [#allocation12], %s111
      %s114 = sshll.u32 [#allocation13], 4
      %s115 = int_to_ptr.vmem [resolvable:$true] %s114
      %117 = dma.hbm_to_vmem [thread:$0]  %s9, 16, %s115, [#allocation12]
    $region41: #{tpu_custom_call.1} parent=1 // pred_fallthru
      _
    // Predicated region
    $region42: #{tpu_custom_call.1} parent=1 // pred_check
      _
    $region43: #{tpu_custom_call.1} parent=1 // pred_check_branch
      %119 = sbr.rel (0) target = $region45
    $region44: #{tpu_custom_call.1} parent=1 // pred_region
      %s121 = ssub.s32 512, 512
      %122 = vsyncadd [#allocation15], %s121
      %s123 = sshll.u32 [#allocation14], 4
      %s124 = int_to_ptr.vmem [resolvable:$true] %s123
      %129 = dma.hbm_to_vmem [thread:$0]  %s10, 512, %s124, [#allocation15], 128, 128, 8
    $region45: #{tpu_custom_call.1} parent=1 // pred_fallthru
      _
    // Predicated region
    $region46: #{tpu_custom_call.1} parent=1 // pred_check
      _
    $region47: #{tpu_custom_call.1} parent=1 // pred_check_branch
      %131 = sbr.rel (0) target = $region49
    $region48: #{tpu_custom_call.1} parent=1 // pred_region
      %s133 = ssub.s32 16, 16
      %134 = vsyncadd [#allocation15], %s133
      %s136 = sshll.u32 [#allocation16], 4
      %s137 = int_to_ptr.vmem [resolvable:$true] %s136
      %139 = dma.hbm_to_vmem [thread:$0]  %s11, 16, %s137, [#allocation15]
    $region49: #{tpu_custom_call.1} parent=1 // pred_fallthru
      _
    // Predicated region
    $region50: #{tpu_custom_call.1} parent=1 // pred_check
      _
    $region51: #{tpu_custom_call.1} parent=1 // pred_check_branch
      %141 = sbr.rel (0) target = $region53
    $region52: #{tpu_custom_call.1} parent=1 // pred_region
      %s143 = ssub.s32 512, 512
      %144 = vsyncadd [#allocation18], %s143
      %s145 = sshll.u32 [#allocation17], 4
      %s146 = int_to_ptr.vmem [resolvable:$true] %s145
      %151 = dma.hbm_to_vmem [thread:$0]  %s12, 512, %s146, [#allocation18], 128, 128, 8
    $region53: #{tpu_custom_call.1} parent=1 // pred_fallthru
      _
    // Predicated region
    $region54: #{tpu_custom_call.1} parent=1 // pred_check
      _
    $region55: #{tpu_custom_call.1} parent=1 // pred_check_branch
      %153 = sbr.rel (0) target = $region57
    $region56: #{tpu_custom_call.1} parent=1 // pred_region
      %s155 = ssub.s32 16, 16
      %156 = vsyncadd [#allocation18], %s155
      %s158 = sshll.u32 [#allocation19], 4
      %s159 = int_to_ptr.vmem [resolvable:$true] %s158
      %161 = dma.hbm_to_vmem [thread:$0]  %s13, 16, %s159, [#allocation18]
    $region57: #{tpu_custom_call.1} parent=1 // pred_fallthru
      _
    // Predicated region
    $region58: #{tpu_custom_call.1} parent=1 // pred_check
      _
    $region59: #{tpu_custom_call.1} parent=1 // pred_check_branch
      %163 = sbr.rel (0) target = $region61
    $region60: #{tpu_custom_call.1} parent=1 // pred_region
      %s165 = ssub.s32 64, 64
      %166 = vsyncadd [#allocation21], %s165
      %s168 = sshll.u32 [#allocation20], 4
      %s169 = int_to_ptr.vmem [resolvable:$true] %s168
      %171 = dma.hbm_to_vmem [thread:$0]  %s14, 64, %s169, [#allocation21]
    $region61: #{tpu_custom_call.1} parent=1 // pred_fallthru
      _
    // Predicated region
    $region62: #{tpu_custom_call.1} parent=1 // pred_check
      _
    $region63: #{tpu_custom_call.1} parent=1 // pred_check_branch
      %173 = sbr.rel (0) target = $region65
    $region64: #{tpu_custom_call.1} parent=1 // pred_region
      %s175 = ssub.s32 64, 64
      %176 = vsyncadd [#allocation21], %s175
      %s178 = sshll.u32 [#allocation22], 4
      %s179 = int_to_ptr.vmem [resolvable:$true] %s178
      %181 = dma.hbm_to_vmem [thread:$0]  %s15, 64, %s179, [#allocation21]
    $region65: #{tpu_custom_call.1} parent=1 // pred_fallthru
      _
    // Predicated region
    $region66: #{tpu_custom_call.1} parent=1 // pred_check
      _
    $region67: #{tpu_custom_call.1} parent=1 // pred_check_branch
      %183 = sbr.rel (0) target = $region69
    $region68: #{tpu_custom_call.1} parent=1 // pred_region
      %s185 = ssub.s32 512, 512
      %186 = vsyncadd [#allocation24], %s185
      %s187 = sshll.u32 [#allocation23], 4
      %s188 = int_to_ptr.vmem [resolvable:$true] %s187
      %193 = dma.hbm_to_vmem [thread:$0]  %s16, 512, %s188, [#allocation24], 128, 128, 8
    $region69: #{tpu_custom_call.1} parent=1 // pred_fallthru
      _
    // Predicated region
    $region70: #{tpu_custom_call.1} parent=1 // pred_check
      _
    $region71: #{tpu_custom_call.1} parent=1 // pred_check_branch
      %195 = sbr.rel (0) target = $region73
    $region72: #{tpu_custom_call.1} parent=1 // pred_region
      %s197 = ssub.s32 16, 16
      %198 = vsyncadd [#allocation24], %s197
      %s200 = sshll.u32 [#allocation25], 4
      %s201 = int_to_ptr.vmem [resolvable:$true] %s200
      %203 = dma.hbm_to_vmem [thread:$0]  %s17, 16, %s201, [#allocation24]
    $region73: #{tpu_custom_call.1} parent=1 // pred_fallthru
      _
    // Predicated region
    $region74: #{tpu_custom_call.1} parent=1 // pred_check
      _
    $region75: #{tpu_custom_call.1} parent=1 // pred_check_branch
      %205 = sbr.rel (0) target = $region77
    $region76: #{tpu_custom_call.1} parent=1 // pred_region
      _
    $region77: #{tpu_custom_call.1} parent=1 // pred_fallthru
      _
    // Predicated region
    $region78: #{tpu_custom_call.1} parent=1 // pred_check
      _
    $region79: #{tpu_custom_call.1} parent=1 // pred_check_branch
      %207 = sbr.rel (0) target = $region81
    $region80: #{tpu_custom_call.1} parent=1 // pred_region
      _
    $region81: #{tpu_custom_call.1} parent=1 // pred_fallthru
      _
    // Predicated region
    $region82: #{tpu_custom_call.1} parent=1 // pred_check
      _
    $region83: #{tpu_custom_call.1} parent=1 // pred_check_branch
      %209 = sbr.rel (0) target = $region85
    $region84: #{tpu_custom_call.1} parent=1 // pred_region
      %210 = dma.done [#allocation3], 256
    $region85: #{tpu_custom_call.1} parent=1 // pred_fallthru
      _
    // Predicated region
    $region86: #{tpu_custom_call.1} parent=1 // pred_check
      _
    $region87: #{tpu_custom_call.1} parent=1 // pred_check_branch
      %212 = sbr.rel (0) target = $region89
    $region88: #{tpu_custom_call.1} parent=1 // pred_region
      %213 = dma.done [#allocation6], 256
    $region89: #{tpu_custom_call.1} parent=1 // pred_fallthru
      _
    // Predicated region
    $region90: #{tpu_custom_call.1} parent=1 // pred_check
      _
    $region91: #{tpu_custom_call.1} parent=1 // pred_check_branch
      %215 = sbr.rel (0) target = $region93
    $region92: #{tpu_custom_call.1} parent=1 // pred_region
      %216 = dma.done [#allocation6], 256
    $region93: #{tpu_custom_call.1} parent=1 // pred_fallthru
      _
    // Predicated region
    $region94: #{tpu_custom_call.1} parent=1 // pred_check
      _
    $region95: #{tpu_custom_call.1} parent=1 // pred_check_branch
      %218 = sbr.rel (0) target = $region97
    $region96: #{tpu_custom_call.1} parent=1 // pred_region
      %219 = dma.done [#allocation9], 256
    $region97: #{tpu_custom_call.1} parent=1 // pred_fallthru
      _
    // Predicated region
    $region98: #{tpu_custom_call.1} parent=1 // pred_check
      _
    $region99: #{tpu_custom_call.1} parent=1 // pred_check_branch
      %221 = sbr.rel (0) target = $region101
    $region100: #{tpu_custom_call.1} parent=1 // pred_region
      %222 = dma.done [#allocation9], 16
    $region101: #{tpu_custom_call.1} parent=1 // pred_fallthru
      _
    // Predicated region
    $region102: #{tpu_custom_call.1} parent=1 // pred_check
      _
    $region103: #{tpu_custom_call.1} parent=1 // pred_check_branch
      %224 = sbr.rel (0) target = $region105
    $region104: #{tpu_custom_call.1} parent=1 // pred_region
      %225 = dma.done [#allocation12], 16
    $region105: #{tpu_custom_call.1} parent=1 // pred_fallthru
      _
    // Predicated region
    $region106: #{tpu_custom_call.1} parent=1 // pred_check
      _
    $region107: #{tpu_custom_call.1} parent=1 // pred_check_branch
      %227 = sbr.rel (0) target = $region109
    $region108: #{tpu_custom_call.1} parent=1 // pred_region
      %228 = dma.done [#allocation12], 16
    $region109: #{tpu_custom_call.1} parent=1 // pred_fallthru
      _
    // Predicated region
    $region110: #{tpu_custom_call.1} parent=1 // pred_check
      _
    $region111: #{tpu_custom_call.1} parent=1 // pred_check_branch
      %230 = sbr.rel (0) target = $region113
    $region112: #{tpu_custom_call.1} parent=1 // pred_region
      %231 = dma.done [#allocation15], 512
    $region113: #{tpu_custom_call.1} parent=1 // pred_fallthru
      _
    // Predicated region
    $region114: #{tpu_custom_call.1} parent=1 // pred_check
      _
    $region115: #{tpu_custom_call.1} parent=1 // pred_check_branch
      %233 = sbr.rel (0) target = $region117
    $region116: #{tpu_custom_call.1} parent=1 // pred_region
      %234 = dma.done [#allocation15], 16
    $region117: #{tpu_custom_call.1} parent=1 // pred_fallthru
      _
    // Predicated region
    $region118: #{tpu_custom_call.1} parent=1 // pred_check
      _
    $region119: #{tpu_custom_call.1} parent=1 // pred_check_branch
      %236 = sbr.rel (0) target = $region121
    $region120: #{tpu_custom_call.1} parent=1 // pred_region
      %237 = dma.done [#allocation18], 512
    $region121: #{tpu_custom_call.1} parent=1 // pred_fallthru
      _
    // Predicated region
    $region122: #{tpu_custom_call.1} parent=1 // pred_check
      _
    $region123: #{tpu_custom_call.1} parent=1 // pred_check_branch
      %239 = sbr.rel (0) target = $region125
    $region124: #{tpu_custom_call.1} parent=1 // pred_region
      %240 = dma.done [#allocation18], 16
    $region125: #{tpu_custom_call.1} parent=1 // pred_fallthru
      _
    // Predicated region
    $region126: #{tpu_custom_call.1} parent=1 // pred_check
      _
    $region127: #{tpu_custom_call.1} parent=1 // pred_check_branch
      %242 = sbr.rel (0) target = $region129
    $region128: #{tpu_custom_call.1} parent=1 // pred_region
      %243 = dma.done [#allocation21], 64
    $region129: #{tpu_custom_call.1} parent=1 // pred_fallthru
      _
    // Predicated region
    $region130: #{tpu_custom_call.1} parent=1 // pred_check
      _
    $region131: #{tpu_custom_call.1} parent=1 // pred_check_branch
      %245 = sbr.rel (0) target = $region133
    $region132: #{tpu_custom_call.1} parent=1 // pred_region
      %246 = dma.done [#allocation21], 64
    $region133: #{tpu_custom_call.1} parent=1 // pred_fallthru
      _
    // Predicated region
    $region134: #{tpu_custom_call.1} parent=1 // pred_check
      _
    $region135: #{tpu_custom_call.1} parent=1 // pred_check_branch
      %248 = sbr.rel (0) target = $region137
    $region136: #{tpu_custom_call.1} parent=1 // pred_region
      %249 = dma.done [#allocation24], 512
    $region137: #{tpu_custom_call.1} parent=1 // pred_fallthru
      _
    // Predicated region
    $region138: #{tpu_custom_call.1} parent=1 // pred_check
      _
    $region139: #{tpu_custom_call.1} parent=1 // pred_check_branch
      %251 = sbr.rel (0) target = $region141
    $region140: #{tpu_custom_call.1} parent=1 // pred_region
      %252 = dma.done [#allocation24], 16
    $region141: #{tpu_custom_call.1} parent=1 // pred_fallthru
      _
    %v253 = vld [vmem:[#allocation2] sm:$0xff]
    %v254 = vld [vmem:[#allocation2 + $0x8] sm:$0xff]
    %v255 = vld [vmem:[#allocation5] sm:$0xff]
    %v256 = vld [vmem:[#allocation5 + $0x8] sm:$0xff]
    %v257 = vld [vmem:[#allocation20] sm:$0x7]
    %v258 = vld [vmem:[#allocation22] sm:$0x7]
    %v259 = vld [vmem:[#allocation7] sm:$0xff]
    %v260 = vld [vmem:[#allocation7 + $0x8] sm:$0xff]
    %vm261 = vcmp.eq.f32.partialorder %v259, 0.0
    %vm262 = vcmp.eq.f32.partialorder %v260, 0.0
    %v263 = vsel %vm261, -1e+09, 0.0
    %v264 = vsel %vm262, -1e+09, 0.0
    %v265 = vld [vmem:[#allocation8] sm:$0xff]
    %v266 = vld [vmem:[#allocation8 + $0x8] sm:$0xff]
    %vm267 = vcmp.eq.f32.partialorder %v265, 0.0
    %vm268 = vcmp.eq.f32.partialorder %v266, 0.0
    %v269 = vsel %vm267, -1e+09, 0.0
    %v270 = vsel %vm268, -1e+09, 0.0
    %v271 = vld [vmem:[#allocation14] sm:$0xff]
    %v272 = vld [vmem:[#allocation14 + $0x8] sm:$0xff]
    %v273 = vld [vmem:[#allocation14 + $0x10] sm:$0xff]
    %v274 = vld [vmem:[#allocation14 + $0x18] sm:$0xff]
    %v275 = vld [vmem:[#allocation16] sm:$0x1]
    %v277 = vlaneseq
    %v278 = vshrl.u32 %v277, 7
    %v279 = vsub.s32 0, %v278
    %v280 = vrot.slane %v275, %v279
    %vm282 = vcmask 261120
    %v284 = vsel %vm282, %v255, 0
    %v287 = vsel %vm282, %v256, 0
    %289 = vmatprep.subr.mxu0 0.0
    %290 = vmatpush1.msra.mxu0 0.0
    %291 = vmatprep.subr.mxu0 0.0
    %292 = vmatpush1.msra.mxu0 0.0
    %293 = vmatprep.subr.mxu0 0.0
    %294 = vmatpush1.msra.mxu0 0.0
    %295 = vmatprep.subr.mxu0 0.0
    %296 = vmatpush1.msra.mxu0 0.0
    %297 = vmatprep.subr.mxu0 0.0
    %298 = vmatpush1.msra.mxu0 0.0
    %299 = vmatprep.subr.mxu0 0.0
    %300 = vmatpush1.msra.mxu0 0.0
    %301 = vmatprep.subr.mxu0 0.0
    %302 = vmatpush1.msra.mxu0 0.0
    %303 = vmatprep.subr.mxu0 0.0
    %304 = vmatpush1.msra.mxu0 0.0
    %305 = vmatprep.subr.mxu0 0.0
    %306 = vmatpush1.msra.mxu0 0.0
    %307 = vmatprep.subr.mxu0 0.0
    %308 = vmatpush1.msra.mxu0 0.0
    %309 = vmatprep.subr.mxu0 0.0
    %310 = vmatpush1.msra.mxu0 0.0
    %311 = vmatprep.subr.mxu0 0.0
    %312 = vmatpush1.msra.mxu0 0.0
    %313 = vmatprep.subr.mxu0 0.0
    %314 = vmatpush1.msra.mxu0 %v274
    %315 = vmatprep.subr.mxu0 0.0
    %316 = vmatpush1.msra.mxu0 %v273
    %317 = vmatprep.subr.mxu0 0.0
    %318 = vmatpush1.msra.mxu0 %v272
    %319 = vmatprep.subr.mxu0 0.0
    %320 = vmatpush1.msra.mxu0 %v271
    %321 = vmatprep.subr.mxu0 0.0
    %322 = vmatpush2.msra.mxu0 0.0
    %323 = vmatprep.subr.mxu0 0.0
    %324 = vmatpush2.msra.mxu0 0.0
    %325 = vmatprep.subr.mxu0 0.0
    %326 = vmatpush2.msra.mxu0 0.0
    %327 = vmatprep.subr.mxu0 0.0
    %328 = vmatpush2.msra.mxu0 0.0
    %329 = vmatprep.subr.mxu0 0.0
    %330 = vmatpush2.msra.mxu0 0.0
    %331 = vmatprep.subr.mxu0 0.0
    %332 = vmatpush2.msra.mxu0 0.0
    %333 = vmatprep.subr.mxu0 0.0
    %334 = vmatpush2.msra.mxu0 0.0
    %335 = vmatprep.subr.mxu0 0.0
    %336 = vmatpush2.msra.mxu0 0.0
    %337 = vmatprep.subr.mxu0 0.0
    %338 = vmatpush2.msra.mxu0 0.0
    %339 = vmatprep.subr.mxu0 0.0
    %340 = vmatpush2.msra.mxu0 0.0
    %341 = vmatprep.subr.mxu0 0.0
    %342 = vmatpush2.msra.mxu0 0.0
    %343 = vmatprep.subr.mxu0 0.0
    %344 = vmatpush2.msra.mxu0 0.0
    %345 = vmatprep.subr.mxu0 0.0
    %346 = vmatpush2.msra.mxu0 0.0
    %347 = vmatprep.subr.mxu0 0.0
    %348 = vmatpush2.msra.mxu0 0.0
    %349 = vmatprep.subr.mxu0 0.0
    %350 = vmatpush2.msra.mxu0 0.0
    %351 = vmatprep.subr.mxu0 0.0
    %352 = vmatpush2.msra.mxu0 0.0
    %353 = vmatprep.mubr.f32.mxu0 0.0
    %354 = vmatmul.mubr.f32.gmra.mxu0 %v284
    %v355 = vpop.f32.mrf.mxu0
    %v356 = vadd.f32 %v280, %v355
    %v357 = vpop.f32.mrf.mxu0
    %358 = vmatprep.mubr.f32.mxu0 0.0
    %359 = vmatmul.mubr.f32.gmra.mxu0 %v287
    %v360 = vpop.f32.mrf.mxu0
    %v361 = vadd.f32 %v280, %v360
    %v362 = vpop.f32.mrf.mxu0
    %363 = vdwg.mxu0
    %v364 = vsel %vm282, %v253, 0.0
    %365 = vadd.xlane.f32.xlu0 %v364
    %v366 = vpop.xlane.xlu0 %365
    %v367 = vsel %vm282, %v254, 0.0
    %368 = vadd.xlane.f32.xlu0 %v367
    %v369 = vpop.xlane.xlu0 %368
    %v370 = vrcp.pop 32.0
    %v371 = vmul.f32 %v366, %v370
    %v372 = vmul.f32 %v369, %v370
    %v373 = vsub.f32 %v253, %v371
    %v374 = vsub.f32 %v254, %v372
    %v375 = vmul.f32 %v373, %v373
    %v376 = vmul.f32 %v374, %v374
    %v377 = vsel %vm282, %v375, 0.0
    %378 = vadd.xlane.f32.xlu0 %v377
    %v379 = vpop.xlane.xlu0 %378
    %v380 = vsel %vm282, %v376, 0.0
    %381 = vadd.xlane.f32.xlu0 %v380
    %v382 = vpop.xlane.xlu0 %381
    %v383 = vmul.f32 %v379, 0.032258064
    %v384 = vmul.f32 %v382, 0.032258064
    %v385 = vrsqrt.pop %v383
    %v386 = vmul.f32 %v383, %v385
    %vm387 = vcmp.eq.f32.partialorder %v383, inf
    %v388 = vsel %vm387, %v383, %v386
    %vm389 = vcmp.eq.f32.partialorder %v383, 0.0
    %v390 = vand.u32 %v383, 2147483648
    %v391 = vsel %vm389, %v390, %v388
    %v392 = vrsqrt.pop %v384
    %v393 = vmul.f32 %v384, %v392
    %vm394 = vcmp.eq.f32.partialorder %v384, inf
    %v395 = vsel %vm394, %v384, %v393
    %vm396 = vcmp.eq.f32.partialorder %v384, 0.0
    %v397 = vand.u32 %v384, 2147483648
    %v398 = vsel %vm396, %v397, %v395
    %v399 = vlaneseq
    %v400 = vshrl.u32 %v399, 7
    %v401 = vsub.s32 0, %v400
    %v402 = vrot.slane %v257, %v401
    %v403 = vmul.f32 %v402, %v373
    %v404 = vmul.f32 %v402, %v374
    %v405 = vadd.f32 %v391, 1e-06
    %v406 = vadd.f32 %v398, 1e-06
    %v407 = vrcp.pop %v405
    %v408 = vmul.f32 %v403, %v407
    %v409 = vrcp.pop %v406
    %v410 = vmul.f32 %v404, %v409
    %v411 = vlaneseq
    %v412 = vshrl.u32 %v411, 7
    %v413 = vsub.s32 0, %v412
    %v414 = vrot.slane %v258, %v413
    %v415 = vadd.f32 %v408, %v414
    %v416 = vadd.f32 %v410, %v414
    %v417 = vld [vmem:[%s4] sm:$0xff]
    %v418 = vld [vmem:[%s4 + $0x8] sm:$0xff]
    %v419 = vld [vmem:[%s4 + $0x10] sm:$0xff]
    %v420 = vld [vmem:[%s4 + $0x18] sm:$0xff]
    %v421 = vld [vmem:[#allocation10] sm:$0x1]
    %v423 = vlaneseq
    %v424 = vshrl.u32 %v423, 7
    %v425 = vsub.s32 0, %v424
    %v426 = vrot.slane %v421, %v425
    %v429 = vsel %vm282, %v415, 0
    %v432 = vsel %vm282, %v416, 0
    %434 = vmatprep.subr.mxu0 0.0
    %435 = vmatpush1.msra.mxu0 0.0
    %436 = vmatprep.subr.mxu0 0.0
    %437 = vmatpush1.msra.mxu0 0.0
    %438 = vmatprep.subr.mxu0 0.0
    %439 = vmatpush1.msra.mxu0 0.0
    %440 = vmatprep.subr.mxu0 0.0
    %441 = vmatpush1.msra.mxu0 0.0
    %442 = vmatprep.subr.mxu0 0.0
    %443 = vmatpush1.msra.mxu0 0.0
    %444 = vmatprep.subr.mxu0 0.0
    %445 = vmatpush1.msra.mxu0 0.0
    %446 = vmatprep.subr.mxu0 0.0
    %447 = vmatpush1.msra.mxu0 0.0
    %448 = vmatprep.subr.mxu0 0.0
    %449 = vmatpush1.msra.mxu0 0.0
    %450 = vmatprep.subr.mxu0 0.0
    %451 = vmatpush1.msra.mxu0 0.0
    %452 = vmatprep.subr.mxu0 0.0
    %453 = vmatpush1.msra.mxu0 0.0
    %454 = vmatprep.subr.mxu0 0.0
    %455 = vmatpush1.msra.mxu0 0.0
    %456 = vmatprep.subr.mxu0 0.0
    %457 = vmatpush1.msra.mxu0 0.0
    %458 = vmatprep.subr.mxu0 0.0
    %459 = vmatpush1.msra.mxu0 %v420
    %460 = vmatprep.subr.mxu0 0.0
    %461 = vmatpush1.msra.mxu0 %v419
    %462 = vmatprep.subr.mxu0 0.0
    %463 = vmatpush1.msra.mxu0 %v418
    %464 = vmatprep.subr.mxu0 0.0
    %465 = vmatpush1.msra.mxu0 %v417
    %466 = vmatprep.subr.mxu0 0.0
    %467 = vmatpush2.msra.mxu0 0.0
    %468 = vmatprep.subr.mxu0 0.0
    %469 = vmatpush2.msra.mxu0 0.0
    %470 = vmatprep.subr.mxu0 0.0
    %471 = vmatpush2.msra.mxu0 0.0
    %472 = vmatprep.subr.mxu0 0.0
    %473 = vmatpush2.msra.mxu0 0.0
    %474 = vmatprep.subr.mxu0 0.0
    %475 = vmatpush2.msra.mxu0 0.0
    %476 = vmatprep.subr.mxu0 0.0
    %477 = vmatpush2.msra.mxu0 0.0
    %478 = vmatprep.subr.mxu0 0.0
    %479 = vmatpush2.msra.mxu0 0.0
    %480 = vmatprep.subr.mxu0 0.0
    %481 = vmatpush2.msra.mxu0 0.0
    %482 = vmatprep.subr.mxu0 0.0
    %483 = vmatpush2.msra.mxu0 0.0
    %484 = vmatprep.subr.mxu0 0.0
    %485 = vmatpush2.msra.mxu0 0.0
    %486 = vmatprep.subr.mxu0 0.0
    %487 = vmatpush2.msra.mxu0 0.0
    %488 = vmatprep.subr.mxu0 0.0
    %489 = vmatpush2.msra.mxu0 0.0
    %490 = vmatprep.subr.mxu0 0.0
    %491 = vmatpush2.msra.mxu0 0.0
    %492 = vmatprep.subr.mxu0 0.0
    %493 = vmatpush2.msra.mxu0 0.0
    %494 = vmatprep.subr.mxu0 0.0
    %495 = vmatpush2.msra.mxu0 0.0
    %496 = vmatprep.subr.mxu0 0.0
    %497 = vmatpush2.msra.mxu0 0.0
    %498 = vmatprep.mubr.f32.mxu0 0.0
    %499 = vmatmul.mubr.f32.gmra.mxu0 %v429
    %v500 = vpop.f32.mrf.mxu0
    %v501 = vadd.f32 %v426, %v500
    %v502 = vpop.f32.mrf.mxu0
    %503 = vmatprep.mubr.f32.mxu0 0.0
    %504 = vmatmul.mubr.f32.gmra.mxu0 %v432
    %v505 = vpop.f32.mrf.mxu0
    %v506 = vadd.f32 %v426, %v505
    %v507 = vpop.f32.mrf.mxu0
    %508 = vdwg.mxu0
    %v509 = vld [vmem:[%s6] sm:$0xff]
    %v510 = vld [vmem:[%s6 + $0x8] sm:$0xff]
    %v511 = vld [vmem:[%s6 + $0x10] sm:$0xff]
    %v512 = vld [vmem:[%s6 + $0x18] sm:$0xff]
    %v513 = vld [vmem:[#allocation11] sm:$0x1]
    %515 = vrot.lane.b32.xlu0 %v501, 96
    %v516 = vpop.permute.xlu0 %515
    %vm517 = vcmask 64512
    %v518 = vsel %vm517, %v501, 0
    %v520 = vsel %vm517, %v516, 0
    %522 = vmatprep.subr.mxu0 0.0
    %523 = vmatpush1.xpose.msra.mxu0 0.0
    %524 = vmatprep.subr.mxu0 0.0
    %525 = vmatpush1.xpose.msra.mxu0 0.0
    %526 = vmatprep.subr.mxu0 0.0
    %527 = vmatpush1.xpose.msra.mxu0 0.0
    %528 = vmatprep.subr.mxu0 0.0
    %529 = vmatpush1.xpose.msra.mxu0 0.0
    %530 = vmatprep.subr.mxu0 0.0
    %531 = vmatpush1.xpose.msra.mxu0 0.0
    %532 = vmatprep.subr.mxu0 0.0
    %533 = vmatpush1.xpose.msra.mxu0 0.0
    %534 = vmatprep.subr.mxu0 0.0
    %535 = vmatpush1.xpose.msra.mxu0 0.0
    %536 = vmatprep.subr.mxu0 0.0
    %537 = vmatpush1.xpose.msra.mxu0 0.0
    %538 = vmatprep.subr.mxu0 0.0
    %539 = vmatpush1.xpose.msra.mxu0 0.0
    %540 = vmatprep.subr.mxu0 0.0
    %541 = vmatpush1.xpose.msra.mxu0 0.0
    %542 = vmatprep.subr.mxu0 0.0
    %543 = vmatpush1.xpose.msra.mxu0 0.0
    %544 = vmatprep.subr.mxu0 0.0
    %545 = vmatpush1.xpose.msra.mxu0 0.0
    %546 = vmatprep.subr.mxu0 0.0
    %547 = vmatpush1.xpose.msra.mxu0 0.0
    %548 = vmatprep.subr.mxu0 0.0
    %549 = vmatpush1.xpose.msra.mxu0 0.0
    %550 = vmatprep.subr.mxu0 0.0
    %551 = vmatpush1.xpose.msra.mxu0 0.0
    %552 = vmatprep.subr.mxu0 0.0
    %553 = vmatpush1.xpose.msra.mxu0 %v520
    %554 = vmatprep.subr.mxu0 0.0
    %555 = vmatpush2.xpose.msra.mxu0 0.0
    %556 = vmatprep.subr.mxu0 0.0
    %557 = vmatpush2.xpose.msra.mxu0 0.0
    %558 = vmatprep.subr.mxu0 0.0
    %559 = vmatpush2.xpose.msra.mxu0 0.0
    %560 = vmatprep.subr.mxu0 0.0
    %561 = vmatpush2.xpose.msra.mxu0 0.0
    %562 = vmatprep.subr.mxu0 0.0
    %563 = vmatpush2.xpose.msra.mxu0 0.0
    %564 = vmatprep.subr.mxu0 0.0
    %565 = vmatpush2.xpose.msra.mxu0 0.0
    %566 = vmatprep.subr.mxu0 0.0
    %567 = vmatpush2.xpose.msra.mxu0 0.0
    %568 = vmatprep.subr.mxu0 0.0
    %569 = vmatpush2.xpose.msra.mxu0 0.0
    %570 = vmatprep.subr.mxu0 0.0
    %571 = vmatpush2.xpose.msra.mxu0 0.0
    %572 = vmatprep.subr.mxu0 0.0
    %573 = vmatpush2.xpose.msra.mxu0 0.0
    %574 = vmatprep.subr.mxu0 0.0
    %575 = vmatpush2.xpose.msra.mxu0 0.0
    %576 = vmatprep.subr.mxu0 0.0
    %577 = vmatpush2.xpose.msra.mxu0 0.0
    %578 = vmatprep.subr.mxu0 0.0
    %579 = vmatpush2.xpose.msra.mxu0 0.0
    %580 = vmatprep.subr.mxu0 0.0
    %581 = vmatpush2.xpose.msra.mxu0 0.0
    %582 = vmatprep.subr.mxu0 0.0
    %583 = vmatpush2.xpose.msra.mxu0 0.0
    %584 = vmatprep.subr.mxu0 0.0
    %585 = vmatpush2.xpose.msra.mxu0 0.0
    %586 = vmatprep.mubr.f32.mxu0 0.0
    %587 = vmatmul.mubr.f32.gmra.mxu0 %v518
    %v588 = vpop.f32.mrf.mxu0
    %v589 = vadd.f32 0.0, %v588
    %v590 = vpop.f32.mrf.mxu0
    %591 = vdwg.mxu0
    %v592 = vmul.f32 %v589, 0.35355338
    %v593 = vadd.f32 %v592, %v263
    %v594 = vsel %vm517, %v593, -inf
    %595 = vmax.xlane.f32.xlu0 %v594
    %v596 = vpop.xlane.xlu0 %595
    %v597 = vsub.f32 %v593, %v596
    %v598 = vmul.f32 %v597, 1.442695
    %v599 = vpow.pop %v598
    %v600 = vsel %vm517, %v599, 0.0
    %601 = vadd.xlane.f32.xlu0 %v600
    %v602 = vpop.xlane.xlu0 %601
    %v603 = vrcp.pop %v602
    %v604 = vmul.f32 %v599, %v603
    %605 = vrot.lane.b32.xlu0 %v501, 64
    %v606 = vpop.permute.xlu0 %605
    %v609 = vsel %vm517, %v604, 0
    %611 = vmatprep.subr.mxu0 0.0
    %612 = vmatpush1.msra.mxu0 0.0
    %613 = vmatprep.subr.mxu0 0.0
    %614 = vmatpush1.msra.mxu0 0.0
    %615 = vmatprep.subr.mxu0 0.0
    %616 = vmatpush1.msra.mxu0 0.0
    %617 = vmatprep.subr.mxu0 0.0
    %618 = vmatpush1.msra.mxu0 0.0
    %619 = vmatprep.subr.mxu0 0.0
    %620 = vmatpush1.msra.mxu0 0.0
    %621 = vmatprep.subr.mxu0 0.0
    %622 = vmatpush1.msra.mxu0 0.0
    %623 = vmatprep.subr.mxu0 0.0
    %624 = vmatpush1.msra.mxu0 0.0
    %625 = vmatprep.subr.mxu0 0.0
    %626 = vmatpush1.msra.mxu0 0.0
    %627 = vmatprep.subr.mxu0 0.0
    %628 = vmatpush1.msra.mxu0 0.0
    %629 = vmatprep.subr.mxu0 0.0
    %630 = vmatpush1.msra.mxu0 0.0
    %631 = vmatprep.subr.mxu0 0.0
    %632 = vmatpush1.msra.mxu0 0.0
    %633 = vmatprep.subr.mxu0 0.0
    %634 = vmatpush1.msra.mxu0 0.0
    %635 = vmatprep.subr.mxu0 0.0
    %636 = vmatpush1.msra.mxu0 0.0
    %637 = vmatprep.subr.mxu0 0.0
    %638 = vmatpush1.msra.mxu0 0.0
    %639 = vmatprep.subr.mxu0 0.0
    %640 = vmatpush1.msra.mxu0 0.0
    %641 = vmatprep.subr.mxu0 0.0
    %642 = vmatpush1.msra.mxu0 %v606
    %643 = vmatprep.subr.mxu0 0.0
    %644 = vmatpush2.msra.mxu0 0.0
    %645 = vmatprep.subr.mxu0 0.0
    %646 = vmatpush2.msra.mxu0 0.0
    %647 = vmatprep.subr.mxu0 0.0
    %648 = vmatpush2.msra.mxu0 0.0
    %649 = vmatprep.subr.mxu0 0.0
    %650 = vmatpush2.msra.mxu0 0.0
    %651 = vmatprep.subr.mxu0 0.0
    %652 = vmatpush2.msra.mxu0 0.0
    %653 = vmatprep.subr.mxu0 0.0
    %654 = vmatpush2.msra.mxu0 0.0
    %655 = vmatprep.subr.mxu0 0.0
    %656 = vmatpush2.msra.mxu0 0.0
    %657 = vmatprep.subr.mxu0 0.0
    %658 = vmatpush2.msra.mxu0 0.0
    %659 = vmatprep.subr.mxu0 0.0
    %660 = vmatpush2.msra.mxu0 0.0
    %661 = vmatprep.subr.mxu0 0.0
    %662 = vmatpush2.msra.mxu0 0.0
    %663 = vmatprep.subr.mxu0 0.0
    %664 = vmatpush2.msra.mxu0 0.0
    %665 = vmatprep.subr.mxu0 0.0
    %666 = vmatpush2.msra.mxu0 0.0
    %667 = vmatprep.subr.mxu0 0.0
    %668 = vmatpush2.msra.mxu0 0.0
    %669 = vmatprep.subr.mxu0 0.0
    %670 = vmatpush2.msra.mxu0 0.0
    %671 = vmatprep.subr.mxu0 0.0
    %672 = vmatpush2.msra.mxu0 0.0
    %673 = vmatprep.subr.mxu0 0.0
    %674 = vmatpush2.msra.mxu0 0.0
    %675 = vmatprep.mubr.f32.mxu0 0.0
    %676 = vmatmul.mubr.f32.gmra.mxu0 %v609
    %v677 = vpop.f32.mrf.mxu0
    %v678 = vadd.f32 0.0, %v677
    %v679 = vpop.f32.mrf.mxu0
    %680 = vdwg.mxu0
    %681 = vrot.lane.b32.xlu0 %v501, 120
    %v682 = vpop.permute.xlu0 %681
    %683 = vrot.lane.b32.xlu0 %v501, 88
    %v684 = vpop.permute.xlu0 %683
    %v685 = vsel %vm517, %v682, 0
    %v687 = vsel %vm517, %v684, 0
    %689 = vmatprep.subr.mxu0 0.0
    %690 = vmatpush1.xpose.msra.mxu0 0.0
    %691 = vmatprep.subr.mxu0 0.0
    %692 = vmatpush1.xpose.msra.mxu0 0.0
    %693 = vmatprep.subr.mxu0 0.0
    %694 = vmatpush1.xpose.msra.mxu0 0.0
    %695 = vmatprep.subr.mxu0 0.0
    %696 = vmatpush1.xpose.msra.mxu0 0.0
    %697 = vmatprep.subr.mxu0 0.0
    %698 = vmatpush1.xpose.msra.mxu0 0.0
    %699 = vmatprep.subr.mxu0 0.0
    %700 = vmatpush1.xpose.msra.mxu0 0.0
    %701 = vmatprep.subr.mxu0 0.0
    %702 = vmatpush1.xpose.msra.mxu0 0.0
    %703 = vmatprep.subr.mxu0 0.0
    %704 = vmatpush1.xpose.msra.mxu0 0.0
    %705 = vmatprep.subr.mxu0 0.0
    %706 = vmatpush1.xpose.msra.mxu0 0.0
    %707 = vmatprep.subr.mxu0 0.0
    %708 = vmatpush1.xpose.msra.mxu0 0.0
    %709 = vmatprep.subr.mxu0 0.0
    %710 = vmatpush1.xpose.msra.mxu0 0.0
    %711 = vmatprep.subr.mxu0 0.0
    %712 = vmatpush1.xpose.msra.mxu0 0.0
    %713 = vmatprep.subr.mxu0 0.0
    %714 = vmatpush1.xpose.msra.mxu0 0.0
    %715 = vmatprep.subr.mxu0 0.0
    %716 = vmatpush1.xpose.msra.mxu0 0.0
    %717 = vmatprep.subr.mxu0 0.0
    %718 = vmatpush1.xpose.msra.mxu0 0.0
    %719 = vmatprep.subr.mxu0 0.0
    %720 = vmatpush1.xpose.msra.mxu0 %v687
    %721 = vmatprep.subr.mxu0 0.0
    %722 = vmatpush2.xpose.msra.mxu0 0.0
    %723 = vmatprep.subr.mxu0 0.0
    %724 = vmatpush2.xpose.msra.mxu0 0.0
    %725 = vmatprep.subr.mxu0 0.0
    %726 = vmatpush2.xpose.msra.mxu0 0.0
    %727 = vmatprep.subr.mxu0 0.0
    %728 = vmatpush2.xpose.msra.mxu0 0.0
    %729 = vmatprep.subr.mxu0 0.0
    %730 = vmatpush2.xpose.msra.mxu0 0.0
    %731 = vmatprep.subr.mxu0 0.0
    %732 = vmatpush2.xpose.msra.mxu0 0.0
    %733 = vmatprep.subr.mxu0 0.0
    %734 = vmatpush2.xpose.msra.mxu0 0.0
    %735 = vmatprep.subr.mxu0 0.0
    %736 = vmatpush2.xpose.msra.mxu0 0.0
    %737 = vmatprep.subr.mxu0 0.0
    %738 = vmatpush2.xpose.msra.mxu0 0.0
    %739 = vmatprep.subr.mxu0 0.0
    %740 = vmatpush2.xpose.msra.mxu0 0.0
    %741 = vmatprep.subr.mxu0 0.0
    %742 = vmatpush2.xpose.msra.mxu0 0.0
    %743 = vmatprep.subr.mxu0 0.0
    %744 = vmatpush2.xpose.msra.mxu0 0.0
    %745 = vmatprep.subr.mxu0 0.0
    %746 = vmatpush2.xpose.msra.mxu0 0.0
    %747 = vmatprep.subr.mxu0 0.0
    %748 = vmatpush2.xpose.msra.mxu0 0.0
    %749 = vmatprep.subr.mxu0 0.0
    %750 = vmatpush2.xpose.msra.mxu0 0.0
    %751 = vmatprep.subr.mxu0 0.0
    %752 = vmatpush2.xpose.msra.mxu0 0.0
    %753 = vmatprep.mubr.f32.mxu0 0.0
    %754 = vmatmul.mubr.f32.gmra.mxu0 %v685
    %v755 = vpop.f32.mrf.mxu0
    %v756 = vadd.f32 0.0, %v755
    %v757 = vpop.f32.mrf.mxu0
    %758 = vdwg.mxu0
    %v759 = vmul.f32 %v756, 0.35355338
    %v760 = vadd.f32 %v759, %v263
    %v761 = vsel %vm517, %v760, -inf
    %762 = vmax.xlane.f32.xlu0 %v761
    %v763 = vpop.xlane.xlu0 %762
    %v764 = vsub.f32 %v760, %v763
    %v765 = vmul.f32 %v764, 1.442695
    %v766 = vpow.pop %v765
    %v767 = vsel %vm517, %v766, 0.0
    %768 = vadd.xlane.f32.xlu0 %v767
    %v769 = vpop.xlane.xlu0 %768
    %v770 = vrcp.pop %v769
    %v771 = vmul.f32 %v766, %v770
    %772 = vrot.lane.b32.xlu0 %v501, 56
    %v773 = vpop.permute.xlu0 %772
    %v776 = vsel %vm517, %v771, 0
    %778 = vmatprep.subr.mxu0 0.0
    %779 = vmatpush1.msra.mxu0 0.0
    %780 = vmatprep.subr.mxu0 0.0
    %781 = vmatpush1.msra.mxu0 0.0
    %782 = vmatprep.subr.mxu0 0.0
    %783 = vmatpush1.msra.mxu0 0.0
    %784 = vmatprep.subr.mxu0 0.0
    %785 = vmatpush1.msra.mxu0 0.0
    %786 = vmatprep.subr.mxu0 0.0
    %787 = vmatpush1.msra.mxu0 0.0
    %788 = vmatprep.subr.mxu0 0.0
    %789 = vmatpush1.msra.mxu0 0.0
    %790 = vmatprep.subr.mxu0 0.0
    %791 = vmatpush1.msra.mxu0 0.0
    %792 = vmatprep.subr.mxu0 0.0
    %793 = vmatpush1.msra.mxu0 0.0
    %794 = vmatprep.subr.mxu0 0.0
    %795 = vmatpush1.msra.mxu0 0.0
    %796 = vmatprep.subr.mxu0 0.0
    %797 = vmatpush1.msra.mxu0 0.0
    %798 = vmatprep.subr.mxu0 0.0
    %799 = vmatpush1.msra.mxu0 0.0
    %800 = vmatprep.subr.mxu0 0.0
    %801 = vmatpush1.msra.mxu0 0.0
    %802 = vmatprep.subr.mxu0 0.0
    %803 = vmatpush1.msra.mxu0 0.0
    %804 = vmatprep.subr.mxu0 0.0
    %805 = vmatpush1.msra.mxu0 0.0
    %806 = vmatprep.subr.mxu0 0.0
    %807 = vmatpush1.msra.mxu0 0.0
    %808 = vmatprep.subr.mxu0 0.0
    %809 = vmatpush1.msra.mxu0 %v773
    %810 = vmatprep.subr.mxu0 0.0
    %811 = vmatpush2.msra.mxu0 0.0
    %812 = vmatprep.subr.mxu0 0.0
    %813 = vmatpush2.msra.mxu0 0.0
    %814 = vmatprep.subr.mxu0 0.0
    %815 = vmatpush2.msra.mxu0 0.0
    %816 = vmatprep.subr.mxu0 0.0
    %817 = vmatpush2.msra.mxu0 0.0
    %818 = vmatprep.subr.mxu0 0.0
    %819 = vmatpush2.msra.mxu0 0.0
    %820 = vmatprep.subr.mxu0 0.0
    %821 = vmatpush2.msra.mxu0 0.0
    %822 = vmatprep.subr.mxu0 0.0
    %823 = vmatpush2.msra.mxu0 0.0
    %824 = vmatprep.subr.mxu0 0.0
    %825 = vmatpush2.msra.mxu0 0.0
    %826 = vmatprep.subr.mxu0 0.0
    %827 = vmatpush2.msra.mxu0 0.0
    %828 = vmatprep.subr.mxu0 0.0
    %829 = vmatpush2.msra.mxu0 0.0
    %830 = vmatprep.subr.mxu0 0.0
    %831 = vmatpush2.msra.mxu0 0.0
    %832 = vmatprep.subr.mxu0 0.0
    %833 = vmatpush2.msra.mxu0 0.0
    %834 = vmatprep.subr.mxu0 0.0
    %835 = vmatpush2.msra.mxu0 0.0
    %836 = vmatprep.subr.mxu0 0.0
    %837 = vmatpush2.msra.mxu0 0.0
    %838 = vmatprep.subr.mxu0 0.0
    %839 = vmatpush2.msra.mxu0 0.0
    %840 = vmatprep.subr.mxu0 0.0
    %841 = vmatpush2.msra.mxu0 0.0
    %842 = vmatprep.mubr.f32.mxu0 0.0
    %843 = vmatmul.mubr.f32.gmra.mxu0 %v776
    %v844 = vpop.f32.mrf.mxu0
    %v845 = vadd.f32 0.0, %v844
    %v846 = vpop.f32.mrf.mxu0
    %847 = vdwg.mxu0
    %v849 = vsel %vm517, %v845, 0
    %851 = vmatprep.subr.mxu0 0.0
    %852 = vmatpush1.msra.mxu0 0.0
    %853 = vmatprep.subr.mxu0 0.0
    %854 = vmatpush1.msra.mxu0 0.0
    %855 = vmatprep.subr.mxu0 0.0
    %856 = vmatpush1.msra.mxu0 0.0
    %857 = vmatprep.subr.mxu0 0.0
    %858 = vmatpush1.msra.mxu0 0.0
    %859 = vmatprep.subr.mxu0 0.0
    %860 = vmatpush1.msra.mxu0 0.0
    %861 = vmatprep.subr.mxu0 0.0
    %862 = vmatpush1.msra.mxu0 0.0
    %863 = vmatprep.subr.mxu0 0.0
    %864 = vmatpush1.msra.mxu0 0.0
    %865 = vmatprep.subr.mxu0 0.0
    %866 = vmatpush1.msra.mxu0 0.0
    %867 = vmatprep.subr.mxu0 0.0
    %868 = vmatpush1.msra.mxu0 0.0
    %869 = vmatprep.subr.mxu0 0.0
    %870 = vmatpush1.msra.mxu0 0.0
    %871 = vmatprep.subr.mxu0 0.0
    %872 = vmatpush1.msra.mxu0 0.0
    %873 = vmatprep.subr.mxu0 0.0
    %874 = vmatpush1.msra.mxu0 0.0
    %875 = vmatprep.subr.mxu0 0.0
    %876 = vmatpush1.msra.mxu0 0.0
    %877 = vmatprep.subr.mxu0 0.0
    %878 = vmatpush1.msra.mxu0 0.0
    %879 = vmatprep.subr.mxu0 0.0
    %880 = vmatpush1.msra.mxu0 0.0
    %881 = vmatprep.subr.mxu0 0.0
    %882 = vmatpush1.msra.mxu0 %v510
    %883 = vmatprep.subr.mxu0 0.0
    %884 = vmatpush2.msra.mxu0 0.0
    %885 = vmatprep.subr.mxu0 0.0
    %886 = vmatpush2.msra.mxu0 0.0
    %887 = vmatprep.subr.mxu0 0.0
    %888 = vmatpush2.msra.mxu0 0.0
    %889 = vmatprep.subr.mxu0 0.0
    %890 = vmatpush2.msra.mxu0 0.0
    %891 = vmatprep.subr.mxu0 0.0
    %892 = vmatpush2.msra.mxu0 0.0
    %893 = vmatprep.subr.mxu0 0.0
    %894 = vmatpush2.msra.mxu0 0.0
    %895 = vmatprep.subr.mxu0 0.0
    %896 = vmatpush2.msra.mxu0 0.0
    %897 = vmatprep.subr.mxu0 0.0
    %898 = vmatpush2.msra.mxu0 0.0
    %899 = vmatprep.subr.mxu0 0.0
    %900 = vmatpush2.msra.mxu0 0.0
    %901 = vmatprep.subr.mxu0 0.0
    %902 = vmatpush2.msra.mxu0 0.0
    %903 = vmatprep.subr.mxu0 0.0
    %904 = vmatpush2.msra.mxu0 0.0
    %905 = vmatprep.subr.mxu0 0.0
    %906 = vmatpush2.msra.mxu0 0.0
    %907 = vmatprep.subr.mxu0 0.0
    %908 = vmatpush2.msra.mxu0 0.0
    %909 = vmatprep.subr.mxu0 0.0
    %910 = vmatpush2.msra.mxu0 0.0
    %911 = vmatprep.subr.mxu0 0.0
    %912 = vmatpush2.msra.mxu0 0.0
    %913 = vmatprep.subr.mxu0 0.0
    %914 = vmatpush2.msra.mxu0 0.0
    %915 = vmatprep.mubr.f32.mxu0 0.0
    %916 = vmatmul.mubr.f32.gmra.mxu0 %v849
    %v917 = vpop.f32.mrf.mxu0
    %v918 = vadd.f32 0.0, %v917
    %v919 = vpop.f32.mrf.mxu0
    %920 = vdwg.mxu0
    %v922 = vsel %vm517, %v678, 0
    %924 = vmatprep.subr.mxu0 0.0
    %925 = vmatpush1.msra.mxu0 0.0
    %926 = vmatprep.subr.mxu0 0.0
    %927 = vmatpush1.msra.mxu0 0.0
    %928 = vmatprep.subr.mxu0 0.0
    %929 = vmatpush1.msra.mxu0 0.0
    %930 = vmatprep.subr.mxu0 0.0
    %931 = vmatpush1.msra.mxu0 0.0
    %932 = vmatprep.subr.mxu0 0.0
    %933 = vmatpush1.msra.mxu0 0.0
    %934 = vmatprep.subr.mxu0 0.0
    %935 = vmatpush1.msra.mxu0 0.0
    %936 = vmatprep.subr.mxu0 0.0
    %937 = vmatpush1.msra.mxu0 0.0
    %938 = vmatprep.subr.mxu0 0.0
    %939 = vmatpush1.msra.mxu0 0.0
    %940 = vmatprep.subr.mxu0 0.0
    %941 = vmatpush1.msra.mxu0 0.0
    %942 = vmatprep.subr.mxu0 0.0
    %943 = vmatpush1.msra.mxu0 0.0
    %944 = vmatprep.subr.mxu0 0.0
    %945 = vmatpush1.msra.mxu0 0.0
    %946 = vmatprep.subr.mxu0 0.0
    %947 = vmatpush1.msra.mxu0 0.0
    %948 = vmatprep.subr.mxu0 0.0
    %949 = vmatpush1.msra.mxu0 0.0
    %950 = vmatprep.subr.mxu0 0.0
    %951 = vmatpush1.msra.mxu0 0.0
    %952 = vmatprep.subr.mxu0 0.0
    %953 = vmatpush1.msra.mxu0 0.0
    %954 = vmatprep.subr.mxu0 0.0
    %955 = vmatpush1.msra.mxu0 %v509
    %956 = vmatprep.subr.mxu0 0.0
    %957 = vmatpush2.msra.mxu0 0.0
    %958 = vmatprep.subr.mxu0 0.0
    %959 = vmatpush2.msra.mxu0 0.0
    %960 = vmatprep.subr.mxu0 0.0
    %961 = vmatpush2.msra.mxu0 0.0
    %962 = vmatprep.subr.mxu0 0.0
    %963 = vmatpush2.msra.mxu0 0.0
    %964 = vmatprep.subr.mxu0 0.0
    %965 = vmatpush2.msra.mxu0 0.0
    %966 = vmatprep.subr.mxu0 0.0
    %967 = vmatpush2.msra.mxu0 0.0
    %968 = vmatprep.subr.mxu0 0.0
    %969 = vmatpush2.msra.mxu0 0.0
    %970 = vmatprep.subr.mxu0 0.0
    %971 = vmatpush2.msra.mxu0 0.0
    %972 = vmatprep.subr.mxu0 0.0
    %973 = vmatpush2.msra.mxu0 0.0
    %974 = vmatprep.subr.mxu0 0.0
    %975 = vmatpush2.msra.mxu0 0.0
    %976 = vmatprep.subr.mxu0 0.0
    %977 = vmatpush2.msra.mxu0 0.0
    %978 = vmatprep.subr.mxu0 0.0
    %979 = vmatpush2.msra.mxu0 0.0
    %980 = vmatprep.subr.mxu0 0.0
    %981 = vmatpush2.msra.mxu0 0.0
    %982 = vmatprep.subr.mxu0 0.0
    %983 = vmatpush2.msra.mxu0 0.0
    %984 = vmatprep.subr.mxu0 0.0
    %985 = vmatpush2.msra.mxu0 0.0
    %986 = vmatprep.subr.mxu0 0.0
    %987 = vmatpush2.msra.mxu0 0.0
    %988 = vmatprep.mubr.f32.mxu0 0.0
    %989 = vmatmul.mubr.f32.gmra.mxu0 %v922
    %v990 = vpop.f32.mrf.mxu0
    %v991 = vadd.f32 %v918, %v990
    %v992 = vpop.f32.mrf.mxu0
    %993 = vdwg.mxu0
    %994 = vrot.lane.b32.xlu0 %v501, 112
    %v995 = vpop.permute.xlu0 %994
    %996 = vrot.lane.b32.xlu0 %v501, 80
    %v997 = vpop.permute.xlu0 %996
    %v998 = vsel %vm517, %v995, 0
    %v1000 = vsel %vm517, %v997, 0
    %1002 = vmatprep.subr.mxu0 0.0
    %1003 = vmatpush1.xpose.msra.mxu0 0.0
    %1004 = vmatprep.subr.mxu0 0.0
    %1005 = vmatpush1.xpose.msra.mxu0 0.0
    %1006 = vmatprep.subr.mxu0 0.0
    %1007 = vmatpush1.xpose.msra.mxu0 0.0
    %1008 = vmatprep.subr.mxu0 0.0
    %1009 = vmatpush1.xpose.msra.mxu0 0.0
    %1010 = vmatprep.subr.mxu0 0.0
    %1011 = vmatpush1.xpose.msra.mxu0 0.0
    %1012 = vmatprep.subr.mxu0 0.0
    %1013 = vmatpush1.xpose.msra.mxu0 0.0
    %1014 = vmatprep.subr.mxu0 0.0
    %1015 = vmatpush1.xpose.msra.mxu0 0.0
    %1016 = vmatprep.subr.mxu0 0.0
    %1017 = vmatpush1.xpose.msra.mxu0 0.0
    %1018 = vmatprep.subr.mxu0 0.0
    %1019 = vmatpush1.xpose.msra.mxu0 0.0
    %1020 = vmatprep.subr.mxu0 0.0
    %1021 = vmatpush1.xpose.msra.mxu0 0.0
    %1022 = vmatprep.subr.mxu0 0.0
    %1023 = vmatpush1.xpose.msra.mxu0 0.0
    %1024 = vmatprep.subr.mxu0 0.0
    %1025 = vmatpush1.xpose.msra.mxu0 0.0
    %1026 = vmatprep.subr.mxu0 0.0
    %1027 = vmatpush1.xpose.msra.mxu0 0.0
    %1028 = vmatprep.subr.mxu0 0.0
    %1029 = vmatpush1.xpose.msra.mxu0 0.0
    %1030 = vmatprep.subr.mxu0 0.0
    %1031 = vmatpush1.xpose.msra.mxu0 0.0
    %1032 = vmatprep.subr.mxu0 0.0
    %1033 = vmatpush1.xpose.msra.mxu0 %v1000
    %1034 = vmatprep.subr.mxu0 0.0
    %1035 = vmatpush2.xpose.msra.mxu0 0.0
    %1036 = vmatprep.subr.mxu0 0.0
    %1037 = vmatpush2.xpose.msra.mxu0 0.0
    %1038 = vmatprep.subr.mxu0 0.0
    %1039 = vmatpush2.xpose.msra.mxu0 0.0
    %1040 = vmatprep.subr.mxu0 0.0
    %1041 = vmatpush2.xpose.msra.mxu0 0.0
    %1042 = vmatprep.subr.mxu0 0.0
    %1043 = vmatpush2.xpose.msra.mxu0 0.0
    %1044 = vmatprep.subr.mxu0 0.0
    %1045 = vmatpush2.xpose.msra.mxu0 0.0
    %1046 = vmatprep.subr.mxu0 0.0
    %1047 = vmatpush2.xpose.msra.mxu0 0.0
    %1048 = vmatprep.subr.mxu0 0.0
    %1049 = vmatpush2.xpose.msra.mxu0 0.0
    %1050 = vmatprep.subr.mxu0 0.0
    %1051 = vmatpush2.xpose.msra.mxu0 0.0
    %1052 = vmatprep.subr.mxu0 0.0
    %1053 = vmatpush2.xpose.msra.mxu0 0.0
    %1054 = vmatprep.subr.mxu0 0.0
    %1055 = vmatpush2.xpose.msra.mxu0 0.0
    %1056 = vmatprep.subr.mxu0 0.0
    %1057 = vmatpush2.xpose.msra.mxu0 0.0
    %1058 = vmatprep.subr.mxu0 0.0
    %1059 = vmatpush2.xpose.msra.mxu0 0.0
    %1060 = vmatprep.subr.mxu0 0.0
    %1061 = vmatpush2.xpose.msra.mxu0 0.0
    %1062 = vmatprep.subr.mxu0 0.0
    %1063 = vmatpush2.xpose.msra.mxu0 0.0
    %1064 = vmatprep.subr.mxu0 0.0
    %1065 = vmatpush2.xpose.msra.mxu0 0.0
    %1066 = vmatprep.mubr.f32.mxu0 0.0
    %1067 = vmatmul.mubr.f32.gmra.mxu0 %v998
    %v1068 = vpop.f32.mrf.mxu0
    %v1069 = vadd.f32 0.0, %v1068
    %v1070 = vpop.f32.mrf.mxu0
    %1071 = vdwg.mxu0
    %v1072 = vmul.f32 %v1069, 0.35355338
    %v1073 = vadd.f32 %v1072, %v263
    %v1074 = vsel %vm517, %v1073, -inf
    %1075 = vmax.xlane.f32.xlu0 %v1074
    %v1076 = vpop.xlane.xlu0 %1075
    %v1077 = vsub.f32 %v1073, %v1076
    %v1078 = vmul.f32 %v1077, 1.442695
    %v1079 = vpow.pop %v1078
    %v1080 = vsel %vm517, %v1079, 0.0
    %1081 = vadd.xlane.f32.xlu0 %v1080
    %v1082 = vpop.xlane.xlu0 %1081
    %v1083 = vrcp.pop %v1082
    %v1084 = vmul.f32 %v1079, %v1083
    %1085 = vrot.lane.b32.xlu0 %v501, 48
    %v1086 = vpop.permute.xlu0 %1085
    %v1089 = vsel %vm517, %v1084, 0
    %1091 = vmatprep.subr.mxu0 0.0
    %1092 = vmatpush1.msra.mxu0 0.0
    %1093 = vmatprep.subr.mxu0 0.0
    %1094 = vmatpush1.msra.mxu0 0.0
    %1095 = vmatprep.subr.mxu0 0.0
    %1096 = vmatpush1.msra.mxu0 0.0
    %1097 = vmatprep.subr.mxu0 0.0
    %1098 = vmatpush1.msra.mxu0 0.0
    %1099 = vmatprep.subr.mxu0 0.0
    %1100 = vmatpush1.msra.mxu0 0.0
    %1101 = vmatprep.subr.mxu0 0.0
    %1102 = vmatpush1.msra.mxu0 0.0
    %1103 = vmatprep.subr.mxu0 0.0
    %1104 = vmatpush1.msra.mxu0 0.0
    %1105 = vmatprep.subr.mxu0 0.0
    %1106 = vmatpush1.msra.mxu0 0.0
    %1107 = vmatprep.subr.mxu0 0.0
    %1108 = vmatpush1.msra.mxu0 0.0
    %1109 = vmatprep.subr.mxu0 0.0
    %1110 = vmatpush1.msra.mxu0 0.0
    %1111 = vmatprep.subr.mxu0 0.0
    %1112 = vmatpush1.msra.mxu0 0.0
    %1113 = vmatprep.subr.mxu0 0.0
    %1114 = vmatpush1.msra.mxu0 0.0
    %1115 = vmatprep.subr.mxu0 0.0
    %1116 = vmatpush1.msra.mxu0 0.0
    %1117 = vmatprep.subr.mxu0 0.0
    %1118 = vmatpush1.msra.mxu0 0.0
    %1119 = vmatprep.subr.mxu0 0.0
    %1120 = vmatpush1.msra.mxu0 0.0
    %1121 = vmatprep.subr.mxu0 0.0
    %1122 = vmatpush1.msra.mxu0 %v1086
    %1123 = vmatprep.subr.mxu0 0.0
    %1124 = vmatpush2.msra.mxu0 0.0
    %1125 = vmatprep.subr.mxu0 0.0
    %1126 = vmatpush2.msra.mxu0 0.0
    %1127 = vmatprep.subr.mxu0 0.0
    %1128 = vmatpush2.msra.mxu0 0.0
    %1129 = vmatprep.subr.mxu0 0.0
    %1130 = vmatpush2.msra.mxu0 0.0
    %1131 = vmatprep.subr.mxu0 0.0
    %1132 = vmatpush2.msra.mxu0 0.0
    %1133 = vmatprep.subr.mxu0 0.0
    %1134 = vmatpush2.msra.mxu0 0.0
    %1135 = vmatprep.subr.mxu0 0.0
    %1136 = vmatpush2.msra.mxu0 0.0
    %1137 = vmatprep.subr.mxu0 0.0
    %1138 = vmatpush2.msra.mxu0 0.0
    %1139 = vmatprep.subr.mxu0 0.0
    %1140 = vmatpush2.msra.mxu0 0.0
    %1141 = vmatprep.subr.mxu0 0.0
    %1142 = vmatpush2.msra.mxu0 0.0
    %1143 = vmatprep.subr.mxu0 0.0
    %1144 = vmatpush2.msra.mxu0 0.0
    %1145 = vmatprep.subr.mxu0 0.0
    %1146 = vmatpush2.msra.mxu0 0.0
    %1147 = vmatprep.subr.mxu0 0.0
    %1148 = vmatpush2.msra.mxu0 0.0
    %1149 = vmatprep.subr.mxu0 0.0
    %1150 = vmatpush2.msra.mxu0 0.0
    %1151 = vmatprep.subr.mxu0 0.0
    %1152 = vmatpush2.msra.mxu0 0.0
    %1153 = vmatprep.subr.mxu0 0.0
    %1154 = vmatpush2.msra.mxu0 0.0
    %1155 = vmatprep.mubr.f32.mxu0 0.0
    %1156 = vmatmul.mubr.f32.gmra.mxu0 %v1089
    %v1157 = vpop.f32.mrf.mxu0
    %v1158 = vadd.f32 0.0, %v1157
    %v1159 = vpop.f32.mrf.mxu0
    %1160 = vdwg.mxu0
    %v1162 = vsel %vm517, %v1158, 0
    %1164 = vmatprep.subr.mxu0 0.0
    %1165 = vmatpush1.msra.mxu0 0.0
    %1166 = vmatprep.subr.mxu0 0.0
    %1167 = vmatpush1.msra.mxu0 0.0
    %1168 = vmatprep.subr.mxu0 0.0
    %1169 = vmatpush1.msra.mxu0 0.0
    %1170 = vmatprep.subr.mxu0 0.0
    %1171 = vmatpush1.msra.mxu0 0.0
    %1172 = vmatprep.subr.mxu0 0.0
    %1173 = vmatpush1.msra.mxu0 0.0
    %1174 = vmatprep.subr.mxu0 0.0
    %1175 = vmatpush1.msra.mxu0 0.0
    %1176 = vmatprep.subr.mxu0 0.0
    %1177 = vmatpush1.msra.mxu0 0.0
    %1178 = vmatprep.subr.mxu0 0.0
    %1179 = vmatpush1.msra.mxu0 0.0
    %1180 = vmatprep.subr.mxu0 0.0
    %1181 = vmatpush1.msra.mxu0 0.0
    %1182 = vmatprep.subr.mxu0 0.0
    %1183 = vmatpush1.msra.mxu0 0.0
    %1184 = vmatprep.subr.mxu0 0.0
    %1185 = vmatpush1.msra.mxu0 0.0
    %1186 = vmatprep.subr.mxu0 0.0
    %1187 = vmatpush1.msra.mxu0 0.0
    %1188 = vmatprep.subr.mxu0 0.0
    %1189 = vmatpush1.msra.mxu0 0.0
    %1190 = vmatprep.subr.mxu0 0.0
    %1191 = vmatpush1.msra.mxu0 0.0
    %1192 = vmatprep.subr.mxu0 0.0
    %1193 = vmatpush1.msra.mxu0 0.0
    %1194 = vmatprep.subr.mxu0 0.0
    %1195 = vmatpush1.msra.mxu0 %v511
    %1196 = vmatprep.subr.mxu0 0.0
    %1197 = vmatpush2.msra.mxu0 0.0
    %1198 = vmatprep.subr.mxu0 0.0
    %1199 = vmatpush2.msra.mxu0 0.0
    %1200 = vmatprep.subr.mxu0 0.0
    %1201 = vmatpush2.msra.mxu0 0.0
    %1202 = vmatprep.subr.mxu0 0.0
    %1203 = vmatpush2.msra.mxu0 0.0
    %1204 = vmatprep.subr.mxu0 0.0
    %1205 = vmatpush2.msra.mxu0 0.0
    %1206 = vmatprep.subr.mxu0 0.0
    %1207 = vmatpush2.msra.mxu0 0.0
    %1208 = vmatprep.subr.mxu0 0.0
    %1209 = vmatpush2.msra.mxu0 0.0
    %1210 = vmatprep.subr.mxu0 0.0
    %1211 = vmatpush2.msra.mxu0 0.0
    %1212 = vmatprep.subr.mxu0 0.0
    %1213 = vmatpush2.msra.mxu0 0.0
    %1214 = vmatprep.subr.mxu0 0.0
    %1215 = vmatpush2.msra.mxu0 0.0
    %1216 = vmatprep.subr.mxu0 0.0
    %1217 = vmatpush2.msra.mxu0 0.0
    %1218 = vmatprep.subr.mxu0 0.0
    %1219 = vmatpush2.msra.mxu0 0.0
    %1220 = vmatprep.subr.mxu0 0.0
    %1221 = vmatpush2.msra.mxu0 0.0
    %1222 = vmatprep.subr.mxu0 0.0
    %1223 = vmatpush2.msra.mxu0 0.0
    %1224 = vmatprep.subr.mxu0 0.0
    %1225 = vmatpush2.msra.mxu0 0.0
    %1226 = vmatprep.subr.mxu0 0.0
    %1227 = vmatpush2.msra.mxu0 0.0
    %1228 = vmatprep.mubr.f32.mxu0 0.0
    %1229 = vmatmul.mubr.f32.gmra.mxu0 %v1162
    %v1230 = vpop.f32.mrf.mxu0
    %v1231 = vadd.f32 0.0, %v1230
    %v1232 = vpop.f32.mrf.mxu0
    %1233 = vdwg.mxu0
    %v1234 = vadd.f32 %v991, %v1231
    %1235 = vrot.lane.b32.xlu0 %v501, 104
    %v1236 = vpop.permute.xlu0 %1235
    %1237 = vrot.lane.b32.xlu0 %v501, 72
    %v1238 = vpop.permute.xlu0 %1237
    %v1239 = vsel %vm517, %v1236, 0
    %v1241 = vsel %vm517, %v1238, 0
    %1243 = vmatprep.subr.mxu0 0.0
    %1244 = vmatpush1.xpose.msra.mxu0 0.0
    %1245 = vmatprep.subr.mxu0 0.0
    %1246 = vmatpush1.xpose.msra.mxu0 0.0
    %1247 = vmatprep.subr.mxu0 0.0
    %1248 = vmatpush1.xpose.msra.mxu0 0.0
    %1249 = vmatprep.subr.mxu0 0.0
    %1250 = vmatpush1.xpose.msra.mxu0 0.0
    %1251 = vmatprep.subr.mxu0 0.0
    %1252 = vmatpush1.xpose.msra.mxu0 0.0
    %1253 = vmatprep.subr.mxu0 0.0
    %1254 = vmatpush1.xpose.msra.mxu0 0.0
    %1255 = vmatprep.subr.mxu0 0.0
    %1256 = vmatpush1.xpose.msra.mxu0 0.0
    %1257 = vmatprep.subr.mxu0 0.0
    %1258 = vmatpush1.xpose.msra.mxu0 0.0
    %1259 = vmatprep.subr.mxu0 0.0
    %1260 = vmatpush1.xpose.msra.mxu0 0.0
    %1261 = vmatprep.subr.mxu0 0.0
    %1262 = vmatpush1.xpose.msra.mxu0 0.0
    %1263 = vmatprep.subr.mxu0 0.0
    %1264 = vmatpush1.xpose.msra.mxu0 0.0
    %1265 = vmatprep.subr.mxu0 0.0
    %1266 = vmatpush1.xpose.msra.mxu0 0.0
    %1267 = vmatprep.subr.mxu0 0.0
    %1268 = vmatpush1.xpose.msra.mxu0 0.0
    %1269 = vmatprep.subr.mxu0 0.0
    %1270 = vmatpush1.xpose.msra.mxu0 0.0
    %1271 = vmatprep.subr.mxu0 0.0
    %1272 = vmatpush1.xpose.msra.mxu0 0.0
    %1273 = vmatprep.subr.mxu0 0.0
    %1274 = vmatpush1.xpose.msra.mxu0 %v1241
    %1275 = vmatprep.subr.mxu0 0.0
    %1276 = vmatpush2.xpose.msra.mxu0 0.0
    %1277 = vmatprep.subr.mxu0 0.0
    %1278 = vmatpush2.xpose.msra.mxu0 0.0
    %1279 = vmatprep.subr.mxu0 0.0
    %1280 = vmatpush2.xpose.msra.mxu0 0.0
    %1281 = vmatprep.subr.mxu0 0.0
    %1282 = vmatpush2.xpose.msra.mxu0 0.0
    %1283 = vmatprep.subr.mxu0 0.0
    %1284 = vmatpush2.xpose.msra.mxu0 0.0
    %1285 = vmatprep.subr.mxu0 0.0
    %1286 = vmatpush2.xpose.msra.mxu0 0.0
    %1287 = vmatprep.subr.mxu0 0.0
    %1288 = vmatpush2.xpose.msra.mxu0 0.0
    %1289 = vmatprep.subr.mxu0 0.0
    %1290 = vmatpush2.xpose.msra.mxu0 0.0
    %1291 = vmatprep.subr.mxu0 0.0
    %1292 = vmatpush2.xpose.msra.mxu0 0.0
    %1293 = vmatprep.subr.mxu0 0.0
    %1294 = vmatpush2.xpose.msra.mxu0 0.0
    %1295 = vmatprep.subr.mxu0 0.0
    %1296 = vmatpush2.xpose.msra.mxu0 0.0
    %1297 = vmatprep.subr.mxu0 0.0
    %1298 = vmatpush2.xpose.msra.mxu0 0.0
    %1299 = vmatprep.subr.mxu0 0.0
    %1300 = vmatpush2.xpose.msra.mxu0 0.0
    %1301 = vmatprep.subr.mxu0 0.0
    %1302 = vmatpush2.xpose.msra.mxu0 0.0
    %1303 = vmatprep.subr.mxu0 0.0
    %1304 = vmatpush2.xpose.msra.mxu0 0.0
    %1305 = vmatprep.subr.mxu0 0.0
    %1306 = vmatpush2.xpose.msra.mxu0 0.0
    %1307 = vmatprep.mubr.f32.mxu0 0.0
    %1308 = vmatmul.mubr.f32.gmra.mxu0 %v1239
    %v1309 = vpop.f32.mrf.mxu0
    %v1310 = vadd.f32 0.0, %v1309
    %v1311 = vpop.f32.mrf.mxu0
    %1312 = vdwg.mxu0
    %v1313 = vmul.f32 %v1310, 0.35355338
    %v1314 = vadd.f32 %v1313, %v263
    %v1315 = vsel %vm517, %v1314, -inf
    %1316 = vmax.xlane.f32.xlu0 %v1315
    %v1317 = vpop.xlane.xlu0 %1316
    %v1318 = vsub.f32 %v1314, %v1317
    %v1319 = vmul.f32 %v1318, 1.442695
    %v1320 = vpow.pop %v1319
    %v1321 = vsel %vm517, %v1320, 0.0
    %1322 = vadd.xlane.f32.xlu0 %v1321
    %v1323 = vpop.xlane.xlu0 %1322
    %v1324 = vrcp.pop %v1323
    %v1325 = vmul.f32 %v1320, %v1324
    %1326 = vrot.lane.b32.xlu0 %v501, 40
    %v1327 = vpop.permute.xlu0 %1326
    %v1330 = vsel %vm517, %v1325, 0
    %1332 = vmatprep.subr.mxu0 0.0
    %1333 = vmatpush1.msra.mxu0 0.0
    %1334 = vmatprep.subr.mxu0 0.0
    %1335 = vmatpush1.msra.mxu0 0.0
    %1336 = vmatprep.subr.mxu0 0.0
    %1337 = vmatpush1.msra.mxu0 0.0
    %1338 = vmatprep.subr.mxu0 0.0
    %1339 = vmatpush1.msra.mxu0 0.0
    %1340 = vmatprep.subr.mxu0 0.0
    %1341 = vmatpush1.msra.mxu0 0.0
    %1342 = vmatprep.subr.mxu0 0.0
    %1343 = vmatpush1.msra.mxu0 0.0
    %1344 = vmatprep.subr.mxu0 0.0
    %1345 = vmatpush1.msra.mxu0 0.0
    %1346 = vmatprep.subr.mxu0 0.0
    %1347 = vmatpush1.msra.mxu0 0.0
    %1348 = vmatprep.subr.mxu0 0.0
    %1349 = vmatpush1.msra.mxu0 0.0
    %1350 = vmatprep.subr.mxu0 0.0
    %1351 = vmatpush1.msra.mxu0 0.0
    %1352 = vmatprep.subr.mxu0 0.0
    %1353 = vmatpush1.msra.mxu0 0.0
    %1354 = vmatprep.subr.mxu0 0.0
    %1355 = vmatpush1.msra.mxu0 0.0
    %1356 = vmatprep.subr.mxu0 0.0
    %1357 = vmatpush1.msra.mxu0 0.0
    %1358 = vmatprep.subr.mxu0 0.0
    %1359 = vmatpush1.msra.mxu0 0.0
    %1360 = vmatprep.subr.mxu0 0.0
    %1361 = vmatpush1.msra.mxu0 0.0
    %1362 = vmatprep.subr.mxu0 0.0
    %1363 = vmatpush1.msra.mxu0 %v1327
    %1364 = vmatprep.subr.mxu0 0.0
    %1365 = vmatpush2.msra.mxu0 0.0
    %1366 = vmatprep.subr.mxu0 0.0
    %1367 = vmatpush2.msra.mxu0 0.0
    %1368 = vmatprep.subr.mxu0 0.0
    %1369 = vmatpush2.msra.mxu0 0.0
    %1370 = vmatprep.subr.mxu0 0.0
    %1371 = vmatpush2.msra.mxu0 0.0
    %1372 = vmatprep.subr.mxu0 0.0
    %1373 = vmatpush2.msra.mxu0 0.0
    %1374 = vmatprep.subr.mxu0 0.0
    %1375 = vmatpush2.msra.mxu0 0.0
    %1376 = vmatprep.subr.mxu0 0.0
    %1377 = vmatpush2.msra.mxu0 0.0
    %1378 = vmatprep.subr.mxu0 0.0
    %1379 = vmatpush2.msra.mxu0 0.0
    %1380 = vmatprep.subr.mxu0 0.0
    %1381 = vmatpush2.msra.mxu0 0.0
    %1382 = vmatprep.subr.mxu0 0.0
    %1383 = vmatpush2.msra.mxu0 0.0
    %1384 = vmatprep.subr.mxu0 0.0
    %1385 = vmatpush2.msra.mxu0 0.0
    %1386 = vmatprep.subr.mxu0 0.0
    %1387 = vmatpush2.msra.mxu0 0.0
    %1388 = vmatprep.subr.mxu0 0.0
    %1389 = vmatpush2.msra.mxu0 0.0
    %1390 = vmatprep.subr.mxu0 0.0
    %1391 = vmatpush2.msra.mxu0 0.0
    %1392 = vmatprep.subr.mxu0 0.0
    %1393 = vmatpush2.msra.mxu0 0.0
    %1394 = vmatprep.subr.mxu0 0.0
    %1395 = vmatpush2.msra.mxu0 0.0
    %1396 = vmatprep.mubr.f32.mxu0 0.0
    %1397 = vmatmul.mubr.f32.gmra.mxu0 %v1330
    %v1398 = vpop.f32.mrf.mxu0
    %v1399 = vadd.f32 0.0, %v1398
    %v1400 = vpop.f32.mrf.mxu0
    %1401 = vdwg.mxu0
    %v1403 = vsel %vm517, %v1399, 0
    %1405 = vmatprep.subr.mxu0 0.0
    %1406 = vmatpush1.msra.mxu0 0.0
    %1407 = vmatprep.subr.mxu0 0.0
    %1408 = vmatpush1.msra.mxu0 0.0
    %1409 = vmatprep.subr.mxu0 0.0
    %1410 = vmatpush1.msra.mxu0 0.0
    %1411 = vmatprep.subr.mxu0 0.0
    %1412 = vmatpush1.msra.mxu0 0.0
    %1413 = vmatprep.subr.mxu0 0.0
    %1414 = vmatpush1.msra.mxu0 0.0
    %1415 = vmatprep.subr.mxu0 0.0
    %1416 = vmatpush1.msra.mxu0 0.0
    %1417 = vmatprep.subr.mxu0 0.0
    %1418 = vmatpush1.msra.mxu0 0.0
    %1419 = vmatprep.subr.mxu0 0.0
    %1420 = vmatpush1.msra.mxu0 0.0
    %1421 = vmatprep.subr.mxu0 0.0
    %1422 = vmatpush1.msra.mxu0 0.0
    %1423 = vmatprep.subr.mxu0 0.0
    %1424 = vmatpush1.msra.mxu0 0.0
    %1425 = vmatprep.subr.mxu0 0.0
    %1426 = vmatpush1.msra.mxu0 0.0
    %1427 = vmatprep.subr.mxu0 0.0
    %1428 = vmatpush1.msra.mxu0 0.0
    %1429 = vmatprep.subr.mxu0 0.0
    %1430 = vmatpush1.msra.mxu0 0.0
    %1431 = vmatprep.subr.mxu0 0.0
    %1432 = vmatpush1.msra.mxu0 0.0
    %1433 = vmatprep.subr.mxu0 0.0
    %1434 = vmatpush1.msra.mxu0 0.0
    %1435 = vmatprep.subr.mxu0 0.0
    %1436 = vmatpush1.msra.mxu0 %v512
    %1437 = vmatprep.subr.mxu0 0.0
    %1438 = vmatpush2.msra.mxu0 0.0
    %1439 = vmatprep.subr.mxu0 0.0
    %1440 = vmatpush2.msra.mxu0 0.0
    %1441 = vmatprep.subr.mxu0 0.0
    %1442 = vmatpush2.msra.mxu0 0.0
    %1443 = vmatprep.subr.mxu0 0.0
    %1444 = vmatpush2.msra.mxu0 0.0
    %1445 = vmatprep.subr.mxu0 0.0
    %1446 = vmatpush2.msra.mxu0 0.0
    %1447 = vmatprep.subr.mxu0 0.0
    %1448 = vmatpush2.msra.mxu0 0.0
    %1449 = vmatprep.subr.mxu0 0.0
    %1450 = vmatpush2.msra.mxu0 0.0
    %1451 = vmatprep.subr.mxu0 0.0
    %1452 = vmatpush2.msra.mxu0 0.0
    %1453 = vmatprep.subr.mxu0 0.0
    %1454 = vmatpush2.msra.mxu0 0.0
    %1455 = vmatprep.subr.mxu0 0.0
    %1456 = vmatpush2.msra.mxu0 0.0
    %1457 = vmatprep.subr.mxu0 0.0
    %1458 = vmatpush2.msra.mxu0 0.0
    %1459 = vmatprep.subr.mxu0 0.0
    %1460 = vmatpush2.msra.mxu0 0.0
    %1461 = vmatprep.subr.mxu0 0.0
    %1462 = vmatpush2.msra.mxu0 0.0
    %1463 = vmatprep.subr.mxu0 0.0
    %1464 = vmatpush2.msra.mxu0 0.0
    %1465 = vmatprep.subr.mxu0 0.0
    %1466 = vmatpush2.msra.mxu0 0.0
    %1467 = vmatprep.subr.mxu0 0.0
    %1468 = vmatpush2.msra.mxu0 0.0
    %1469 = vmatprep.mubr.f32.mxu0 0.0
    %1470 = vmatmul.mubr.f32.gmra.mxu0 %v1403
    %v1471 = vpop.f32.mrf.mxu0
    %v1472 = vadd.f32 0.0, %v1471
    %v1473 = vpop.f32.mrf.mxu0
    %1474 = vdwg.mxu0
    %v1475 = vadd.f32 %v1234, %v1472
    %v1477 = vlaneseq
    %v1478 = vshrl.u32 %v1477, 7
    %v1479 = vsub.s32 0, %v1478
    %v1480 = vrot.slane %v513, %v1479
    %v1482 = vadd.f32 %v1475, %v1480
    %1484 = vrot.lane.b32.xlu0 %v506, 96
    %v1485 = vpop.permute.xlu0 %1484
    %v1486 = vsel %vm517, %v506, 0
    %v1488 = vsel %vm517, %v1485, 0
    %1490 = vmatprep.subr.mxu0 0.0
    %1491 = vmatpush1.xpose.msra.mxu0 0.0
    %1492 = vmatprep.subr.mxu0 0.0
    %1493 = vmatpush1.xpose.msra.mxu0 0.0
    %1494 = vmatprep.subr.mxu0 0.0
    %1495 = vmatpush1.xpose.msra.mxu0 0.0
    %1496 = vmatprep.subr.mxu0 0.0
    %1497 = vmatpush1.xpose.msra.mxu0 0.0
    %1498 = vmatprep.subr.mxu0 0.0
    %1499 = vmatpush1.xpose.msra.mxu0 0.0
    %1500 = vmatprep.subr.mxu0 0.0
    %1501 = vmatpush1.xpose.msra.mxu0 0.0
    %1502 = vmatprep.subr.mxu0 0.0
    %1503 = vmatpush1.xpose.msra.mxu0 0.0
    %1504 = vmatprep.subr.mxu0 0.0
    %1505 = vmatpush1.xpose.msra.mxu0 0.0
    %1506 = vmatprep.subr.mxu0 0.0
    %1507 = vmatpush1.xpose.msra.mxu0 0.0
    %1508 = vmatprep.subr.mxu0 0.0
    %1509 = vmatpush1.xpose.msra.mxu0 0.0
    %1510 = vmatprep.subr.mxu0 0.0
    %1511 = vmatpush1.xpose.msra.mxu0 0.0
    %1512 = vmatprep.subr.mxu0 0.0
    %1513 = vmatpush1.xpose.msra.mxu0 0.0
    %1514 = vmatprep.subr.mxu0 0.0
    %1515 = vmatpush1.xpose.msra.mxu0 0.0
    %1516 = vmatprep.subr.mxu0 0.0
    %1517 = vmatpush1.xpose.msra.mxu0 0.0
    %1518 = vmatprep.subr.mxu0 0.0
    %1519 = vmatpush1.xpose.msra.mxu0 0.0
    %1520 = vmatprep.subr.mxu0 0.0
    %1521 = vmatpush1.xpose.msra.mxu0 %v1488
    %1522 = vmatprep.subr.mxu0 0.0
    %1523 = vmatpush2.xpose.msra.mxu0 0.0
    %1524 = vmatprep.subr.mxu0 0.0
    %1525 = vmatpush2.xpose.msra.mxu0 0.0
    %1526 = vmatprep.subr.mxu0 0.0
    %1527 = vmatpush2.xpose.msra.mxu0 0.0
    %1528 = vmatprep.subr.mxu0 0.0
    %1529 = vmatpush2.xpose.msra.mxu0 0.0
    %1530 = vmatprep.subr.mxu0 0.0
    %1531 = vmatpush2.xpose.msra.mxu0 0.0
    %1532 = vmatprep.subr.mxu0 0.0
    %1533 = vmatpush2.xpose.msra.mxu0 0.0
    %1534 = vmatprep.subr.mxu0 0.0
    %1535 = vmatpush2.xpose.msra.mxu0 0.0
    %1536 = vmatprep.subr.mxu0 0.0
    %1537 = vmatpush2.xpose.msra.mxu0 0.0
    %1538 = vmatprep.subr.mxu0 0.0
    %1539 = vmatpush2.xpose.msra.mxu0 0.0
    %1540 = vmatprep.subr.mxu0 0.0
    %1541 = vmatpush2.xpose.msra.mxu0 0.0
    %1542 = vmatprep.subr.mxu0 0.0
    %1543 = vmatpush2.xpose.msra.mxu0 0.0
    %1544 = vmatprep.subr.mxu0 0.0
    %1545 = vmatpush2.xpose.msra.mxu0 0.0
    %1546 = vmatprep.subr.mxu0 0.0
    %1547 = vmatpush2.xpose.msra.mxu0 0.0
    %1548 = vmatprep.subr.mxu0 0.0
    %1549 = vmatpush2.xpose.msra.mxu0 0.0
    %1550 = vmatprep.subr.mxu0 0.0
    %1551 = vmatpush2.xpose.msra.mxu0 0.0
    %1552 = vmatprep.subr.mxu0 0.0
    %1553 = vmatpush2.xpose.msra.mxu0 0.0
    %1554 = vmatprep.mubr.f32.mxu0 0.0
    %1555 = vmatmul.mubr.f32.gmra.mxu0 %v1486
    %v1556 = vpop.f32.mrf.mxu0
    %v1557 = vadd.f32 0.0, %v1556
    %v1558 = vpop.f32.mrf.mxu0
    %1559 = vdwg.mxu0
    %v1560 = vmul.f32 %v1557, 0.35355338
    %v1561 = vadd.f32 %v1560, %v264
    %v1562 = vsel %vm517, %v1561, -inf
    %1563 = vmax.xlane.f32.xlu0 %v1562
    %v1564 = vpop.xlane.xlu0 %1563
    %v1565 = vsub.f32 %v1561, %v1564
    %v1566 = vmul.f32 %v1565, 1.442695
    %v1567 = vpow.pop %v1566
    %v1568 = vsel %vm517, %v1567, 0.0
    %1569 = vadd.xlane.f32.xlu0 %v1568
    %v1570 = vpop.xlane.xlu0 %1569
    %v1571 = vrcp.pop %v1570
    %v1572 = vmul.f32 %v1567, %v1571
    %1573 = vrot.lane.b32.xlu0 %v506, 64
    %v1574 = vpop.permute.xlu0 %1573
    %v1577 = vsel %vm517, %v1572, 0
    %1579 = vmatprep.subr.mxu0 0.0
    %1580 = vmatpush1.msra.mxu0 0.0
    %1581 = vmatprep.subr.mxu0 0.0
    %1582 = vmatpush1.msra.mxu0 0.0
    %1583 = vmatprep.subr.mxu0 0.0
    %1584 = vmatpush1.msra.mxu0 0.0
    %1585 = vmatprep.subr.mxu0 0.0
    %1586 = vmatpush1.msra.mxu0 0.0
    %1587 = vmatprep.subr.mxu0 0.0
    %1588 = vmatpush1.msra.mxu0 0.0
    %1589 = vmatprep.subr.mxu0 0.0
    %1590 = vmatpush1.msra.mxu0 0.0
    %1591 = vmatprep.subr.mxu0 0.0
    %1592 = vmatpush1.msra.mxu0 0.0
    %1593 = vmatprep.subr.mxu0 0.0
    %1594 = vmatpush1.msra.mxu0 0.0
    %1595 = vmatprep.subr.mxu0 0.0
    %1596 = vmatpush1.msra.mxu0 0.0
    %1597 = vmatprep.subr.mxu0 0.0
    %1598 = vmatpush1.msra.mxu0 0.0
    %1599 = vmatprep.subr.mxu0 0.0
    %1600 = vmatpush1.msra.mxu0 0.0
    %1601 = vmatprep.subr.mxu0 0.0
    %1602 = vmatpush1.msra.mxu0 0.0
    %1603 = vmatprep.subr.mxu0 0.0
    %1604 = vmatpush1.msra.mxu0 0.0
    %1605 = vmatprep.subr.mxu0 0.0
    %1606 = vmatpush1.msra.mxu0 0.0
    %1607 = vmatprep.subr.mxu0 0.0
    %1608 = vmatpush1.msra.mxu0 0.0
    %1609 = vmatprep.subr.mxu0 0.0
    %1610 = vmatpush1.msra.mxu0 %v1574
    %1611 = vmatprep.subr.mxu0 0.0
    %1612 = vmatpush2.msra.mxu0 0.0
    %1613 = vmatprep.subr.mxu0 0.0
    %1614 = vmatpush2.msra.mxu0 0.0
    %1615 = vmatprep.subr.mxu0 0.0
    %1616 = vmatpush2.msra.mxu0 0.0
    %1617 = vmatprep.subr.mxu0 0.0
    %1618 = vmatpush2.msra.mxu0 0.0
    %1619 = vmatprep.subr.mxu0 0.0
    %1620 = vmatpush2.msra.mxu0 0.0
    %1621 = vmatprep.subr.mxu0 0.0
    %1622 = vmatpush2.msra.mxu0 0.0
    %1623 = vmatprep.subr.mxu0 0.0
    %1624 = vmatpush2.msra.mxu0 0.0
    %1625 = vmatprep.subr.mxu0 0.0
    %1626 = vmatpush2.msra.mxu0 0.0
    %1627 = vmatprep.subr.mxu0 0.0
    %1628 = vmatpush2.msra.mxu0 0.0
    %1629 = vmatprep.subr.mxu0 0.0
    %1630 = vmatpush2.msra.mxu0 0.0
    %1631 = vmatprep.subr.mxu0 0.0
    %1632 = vmatpush2.msra.mxu0 0.0
    %1633 = vmatprep.subr.mxu0 0.0
    %1634 = vmatpush2.msra.mxu0 0.0
    %1635 = vmatprep.subr.mxu0 0.0
    %1636 = vmatpush2.msra.mxu0 0.0
    %1637 = vmatprep.subr.mxu0 0.0
    %1638 = vmatpush2.msra.mxu0 0.0
    %1639 = vmatprep.subr.mxu0 0.0
    %1640 = vmatpush2.msra.mxu0 0.0
    %1641 = vmatprep.subr.mxu0 0.0
    %1642 = vmatpush2.msra.mxu0 0.0
    %1643 = vmatprep.mubr.f32.mxu0 0.0
    %1644 = vmatmul.mubr.f32.gmra.mxu0 %v1577
    %v1645 = vpop.f32.mrf.mxu0
    %v1646 = vadd.f32 0.0, %v1645
    %v1647 = vpop.f32.mrf.mxu0
    %1648 = vdwg.mxu0
    %1649 = vrot.lane.b32.xlu0 %v506, 120
    %v1650 = vpop.permute.xlu0 %1649
    %1651 = vrot.lane.b32.xlu0 %v506, 88
    %v1652 = vpop.permute.xlu0 %1651
    %v1653 = vsel %vm517, %v1650, 0
    %v1655 = vsel %vm517, %v1652, 0
    %1657 = vmatprep.subr.mxu0 0.0
    %1658 = vmatpush1.xpose.msra.mxu0 0.0
    %1659 = vmatprep.subr.mxu0 0.0
    %1660 = vmatpush1.xpose.msra.mxu0 0.0
    %1661 = vmatprep.subr.mxu0 0.0
    %1662 = vmatpush1.xpose.msra.mxu0 0.0
    %1663 = vmatprep.subr.mxu0 0.0
    %1664 = vmatpush1.xpose.msra.mxu0 0.0
    %1665 = vmatprep.subr.mxu0 0.0
    %1666 = vmatpush1.xpose.msra.mxu0 0.0
    %1667 = vmatprep.subr.mxu0 0.0
    %1668 = vmatpush1.xpose.msra.mxu0 0.0
    %1669 = vmatprep.subr.mxu0 0.0
    %1670 = vmatpush1.xpose.msra.mxu0 0.0
    %1671 = vmatprep.subr.mxu0 0.0
    %1672 = vmatpush1.xpose.msra.mxu0 0.0
    %1673 = vmatprep.subr.mxu0 0.0
    %1674 = vmatpush1.xpose.msra.mxu0 0.0
    %1675 = vmatprep.subr.mxu0 0.0
    %1676 = vmatpush1.xpose.msra.mxu0 0.0
    %1677 = vmatprep.subr.mxu0 0.0
    %1678 = vmatpush1.xpose.msra.mxu0 0.0
    %1679 = vmatprep.subr.mxu0 0.0
    %1680 = vmatpush1.xpose.msra.mxu0 0.0
    %1681 = vmatprep.subr.mxu0 0.0
    %1682 = vmatpush1.xpose.msra.mxu0 0.0
    %1683 = vmatprep.subr.mxu0 0.0
    %1684 = vmatpush1.xpose.msra.mxu0 0.0
    %1685 = vmatprep.subr.mxu0 0.0
    %1686 = vmatpush1.xpose.msra.mxu0 0.0
    %1687 = vmatprep.subr.mxu0 0.0
    %1688 = vmatpush1.xpose.msra.mxu0 %v1655
    %1689 = vmatprep.subr.mxu0 0.0
    %1690 = vmatpush2.xpose.msra.mxu0 0.0
    %1691 = vmatprep.subr.mxu0 0.0
    %1692 = vmatpush2.xpose.msra.mxu0 0.0
    %1693 = vmatprep.subr.mxu0 0.0
    %1694 = vmatpush2.xpose.msra.mxu0 0.0
    %1695 = vmatprep.subr.mxu0 0.0
    %1696 = vmatpush2.xpose.msra.mxu0 0.0
    %1697 = vmatprep.subr.mxu0 0.0
    %1698 = vmatpush2.xpose.msra.mxu0 0.0
    %1699 = vmatprep.subr.mxu0 0.0
    %1700 = vmatpush2.xpose.msra.mxu0 0.0
    %1701 = vmatprep.subr.mxu0 0.0
    %1702 = vmatpush2.xpose.msra.mxu0 0.0
    %1703 = vmatprep.subr.mxu0 0.0
    %1704 = vmatpush2.xpose.msra.mxu0 0.0
    %1705 = vmatprep.subr.mxu0 0.0
    %1706 = vmatpush2.xpose.msra.mxu0 0.0
    %1707 = vmatprep.subr.mxu0 0.0
    %1708 = vmatpush2.xpose.msra.mxu0 0.0
    %1709 = vmatprep.subr.mxu0 0.0
    %1710 = vmatpush2.xpose.msra.mxu0 0.0
    %1711 = vmatprep.subr.mxu0 0.0
    %1712 = vmatpush2.xpose.msra.mxu0 0.0
    %1713 = vmatprep.subr.mxu0 0.0
    %1714 = vmatpush2.xpose.msra.mxu0 0.0
    %1715 = vmatprep.subr.mxu0 0.0
    %1716 = vmatpush2.xpose.msra.mxu0 0.0
    %1717 = vmatprep.subr.mxu0 0.0
    %1718 = vmatpush2.xpose.msra.mxu0 0.0
    %1719 = vmatprep.subr.mxu0 0.0
    %1720 = vmatpush2.xpose.msra.mxu0 0.0
    %1721 = vmatprep.mubr.f32.mxu0 0.0
    %1722 = vmatmul.mubr.f32.gmra.mxu0 %v1653
    %v1723 = vpop.f32.mrf.mxu0
    %v1724 = vadd.f32 0.0, %v1723
    %v1725 = vpop.f32.mrf.mxu0
    %1726 = vdwg.mxu0
    %v1727 = vmul.f32 %v1724, 0.35355338
    %v1728 = vadd.f32 %v1727, %v264
    %v1729 = vsel %vm517, %v1728, -inf
    %1730 = vmax.xlane.f32.xlu0 %v1729
    %v1731 = vpop.xlane.xlu0 %1730
    %v1732 = vsub.f32 %v1728, %v1731
    %v1733 = vmul.f32 %v1732, 1.442695
    %v1734 = vpow.pop %v1733
    %v1735 = vsel %vm517, %v1734, 0.0
    %1736 = vadd.xlane.f32.xlu0 %v1735
    %v1737 = vpop.xlane.xlu0 %1736
    %v1738 = vrcp.pop %v1737
    %v1739 = vmul.f32 %v1734, %v1738
    %1740 = vrot.lane.b32.xlu0 %v506, 56
    %v1741 = vpop.permute.xlu0 %1740
    %v1744 = vsel %vm517, %v1739, 0
    %1746 = vmatprep.subr.mxu0 0.0
    %1747 = vmatpush1.msra.mxu0 0.0
    %1748 = vmatprep.subr.mxu0 0.0
    %1749 = vmatpush1.msra.mxu0 0.0
    %1750 = vmatprep.subr.mxu0 0.0
    %1751 = vmatpush1.msra.mxu0 0.0
    %1752 = vmatprep.subr.mxu0 0.0
    %1753 = vmatpush1.msra.mxu0 0.0
    %1754 = vmatprep.subr.mxu0 0.0
    %1755 = vmatpush1.msra.mxu0 0.0
    %1756 = vmatprep.subr.mxu0 0.0
    %1757 = vmatpush1.msra.mxu0 0.0
    %1758 = vmatprep.subr.mxu0 0.0
    %1759 = vmatpush1.msra.mxu0 0.0
    %1760 = vmatprep.subr.mxu0 0.0
    %1761 = vmatpush1.msra.mxu0 0.0
    %1762 = vmatprep.subr.mxu0 0.0
    %1763 = vmatpush1.msra.mxu0 0.0
    %1764 = vmatprep.subr.mxu0 0.0
    %1765 = vmatpush1.msra.mxu0 0.0
    %1766 = vmatprep.subr.mxu0 0.0
    %1767 = vmatpush1.msra.mxu0 0.0
    %1768 = vmatprep.subr.mxu0 0.0
    %1769 = vmatpush1.msra.mxu0 0.0
    %1770 = vmatprep.subr.mxu0 0.0
    %1771 = vmatpush1.msra.mxu0 0.0
    %1772 = vmatprep.subr.mxu0 0.0
    %1773 = vmatpush1.msra.mxu0 0.0
    %1774 = vmatprep.subr.mxu0 0.0
    %1775 = vmatpush1.msra.mxu0 0.0
    %1776 = vmatprep.subr.mxu0 0.0
    %1777 = vmatpush1.msra.mxu0 %v1741
    %1778 = vmatprep.subr.mxu0 0.0
    %1779 = vmatpush2.msra.mxu0 0.0
    %1780 = vmatprep.subr.mxu0 0.0
    %1781 = vmatpush2.msra.mxu0 0.0
    %1782 = vmatprep.subr.mxu0 0.0
    %1783 = vmatpush2.msra.mxu0 0.0
    %1784 = vmatprep.subr.mxu0 0.0
    %1785 = vmatpush2.msra.mxu0 0.0
    %1786 = vmatprep.subr.mxu0 0.0
    %1787 = vmatpush2.msra.mxu0 0.0
    %1788 = vmatprep.subr.mxu0 0.0
    %1789 = vmatpush2.msra.mxu0 0.0
    %1790 = vmatprep.subr.mxu0 0.0
    %1791 = vmatpush2.msra.mxu0 0.0
    %1792 = vmatprep.subr.mxu0 0.0
    %1793 = vmatpush2.msra.mxu0 0.0
    %1794 = vmatprep.subr.mxu0 0.0
    %1795 = vmatpush2.msra.mxu0 0.0
    %1796 = vmatprep.subr.mxu0 0.0
    %1797 = vmatpush2.msra.mxu0 0.0
    %1798 = vmatprep.subr.mxu0 0.0
    %1799 = vmatpush2.msra.mxu0 0.0
    %1800 = vmatprep.subr.mxu0 0.0
    %1801 = vmatpush2.msra.mxu0 0.0
    %1802 = vmatprep.subr.mxu0 0.0
    %1803 = vmatpush2.msra.mxu0 0.0
    %1804 = vmatprep.subr.mxu0 0.0
    %1805 = vmatpush2.msra.mxu0 0.0
    %1806 = vmatprep.subr.mxu0 0.0
    %1807 = vmatpush2.msra.mxu0 0.0
    %1808 = vmatprep.subr.mxu0 0.0
    %1809 = vmatpush2.msra.mxu0 0.0
    %1810 = vmatprep.mubr.f32.mxu0 0.0
    %1811 = vmatmul.mubr.f32.gmra.mxu0 %v1744
    %v1812 = vpop.f32.mrf.mxu0
    %v1813 = vadd.f32 0.0, %v1812
    %v1814 = vpop.f32.mrf.mxu0
    %1815 = vdwg.mxu0
    %v1817 = vsel %vm517, %v1813, 0
    %1819 = vmatprep.subr.mxu0 0.0
    %1820 = vmatpush1.msra.mxu0 0.0
    %1821 = vmatprep.subr.mxu0 0.0
    %1822 = vmatpush1.msra.mxu0 0.0
    %1823 = vmatprep.subr.mxu0 0.0
    %1824 = vmatpush1.msra.mxu0 0.0
    %1825 = vmatprep.subr.mxu0 0.0
    %1826 = vmatpush1.msra.mxu0 0.0
    %1827 = vmatprep.subr.mxu0 0.0
    %1828 = vmatpush1.msra.mxu0 0.0
    %1829 = vmatprep.subr.mxu0 0.0
    %1830 = vmatpush1.msra.mxu0 0.0
    %1831 = vmatprep.subr.mxu0 0.0
    %1832 = vmatpush1.msra.mxu0 0.0
    %1833 = vmatprep.subr.mxu0 0.0
    %1834 = vmatpush1.msra.mxu0 0.0
    %1835 = vmatprep.subr.mxu0 0.0
    %1836 = vmatpush1.msra.mxu0 0.0
    %1837 = vmatprep.subr.mxu0 0.0
    %1838 = vmatpush1.msra.mxu0 0.0
    %1839 = vmatprep.subr.mxu0 0.0
    %1840 = vmatpush1.msra.mxu0 0.0
    %1841 = vmatprep.subr.mxu0 0.0
    %1842 = vmatpush1.msra.mxu0 0.0
    %1843 = vmatprep.subr.mxu0 0.0
    %1844 = vmatpush1.msra.mxu0 0.0
    %1845 = vmatprep.subr.mxu0 0.0
    %1846 = vmatpush1.msra.mxu0 0.0
    %1847 = vmatprep.subr.mxu0 0.0
    %1848 = vmatpush1.msra.mxu0 0.0
    %1849 = vmatprep.subr.mxu0 0.0
    %1850 = vmatpush1.msra.mxu0 %v510
    %1851 = vmatprep.subr.mxu0 0.0
    %1852 = vmatpush2.msra.mxu0 0.0
    %1853 = vmatprep.subr.mxu0 0.0
    %1854 = vmatpush2.msra.mxu0 0.0
    %1855 = vmatprep.subr.mxu0 0.0
    %1856 = vmatpush2.msra.mxu0 0.0
    %1857 = vmatprep.subr.mxu0 0.0
    %1858 = vmatpush2.msra.mxu0 0.0
    %1859 = vmatprep.subr.mxu0 0.0
    %1860 = vmatpush2.msra.mxu0 0.0
    %1861 = vmatprep.subr.mxu0 0.0
    %1862 = vmatpush2.msra.mxu0 0.0
    %1863 = vmatprep.subr.mxu0 0.0
    %1864 = vmatpush2.msra.mxu0 0.0
    %1865 = vmatprep.subr.mxu0 0.0
    %1866 = vmatpush2.msra.mxu0 0.0
    %1867 = vmatprep.subr.mxu0 0.0
    %1868 = vmatpush2.msra.mxu0 0.0
    %1869 = vmatprep.subr.mxu0 0.0
    %1870 = vmatpush2.msra.mxu0 0.0
    %1871 = vmatprep.subr.mxu0 0.0
    %1872 = vmatpush2.msra.mxu0 0.0
    %1873 = vmatprep.subr.mxu0 0.0
    %1874 = vmatpush2.msra.mxu0 0.0
    %1875 = vmatprep.subr.mxu0 0.0
    %1876 = vmatpush2.msra.mxu0 0.0
    %1877 = vmatprep.subr.mxu0 0.0
    %1878 = vmatpush2.msra.mxu0 0.0
    %1879 = vmatprep.subr.mxu0 0.0
    %1880 = vmatpush2.msra.mxu0 0.0
    %1881 = vmatprep.subr.mxu0 0.0
    %1882 = vmatpush2.msra.mxu0 0.0
    %1883 = vmatprep.mubr.f32.mxu0 0.0
    %1884 = vmatmul.mubr.f32.gmra.mxu0 %v1817
    %v1885 = vpop.f32.mrf.mxu0
    %v1886 = vadd.f32 0.0, %v1885
    %v1887 = vpop.f32.mrf.mxu0
    %1888 = vdwg.mxu0
    %v1890 = vsel %vm517, %v1646, 0
    %1892 = vmatprep.subr.mxu0 0.0
    %1893 = vmatpush1.msra.mxu0 0.0
    %1894 = vmatprep.subr.mxu0 0.0
    %1895 = vmatpush1.msra.mxu0 0.0
    %1896 = vmatprep.subr.mxu0 0.0
    %1897 = vmatpush1.msra.mxu0 0.0
    %1898 = vmatprep.subr.mxu0 0.0
    %1899 = vmatpush1.msra.mxu0 0.0
    %1900 = vmatprep.subr.mxu0 0.0
    %1901 = vmatpush1.msra.mxu0 0.0
    %1902 = vmatprep.subr.mxu0 0.0
    %1903 = vmatpush1.msra.mxu0 0.0
    %1904 = vmatprep.subr.mxu0 0.0
    %1905 = vmatpush1.msra.mxu0 0.0
    %1906 = vmatprep.subr.mxu0 0.0
    %1907 = vmatpush1.msra.mxu0 0.0
    %1908 = vmatprep.subr.mxu0 0.0
    %1909 = vmatpush1.msra.mxu0 0.0
    %1910 = vmatprep.subr.mxu0 0.0
    %1911 = vmatpush1.msra.mxu0 0.0
    %1912 = vmatprep.subr.mxu0 0.0
    %1913 = vmatpush1.msra.mxu0 0.0
    %1914 = vmatprep.subr.mxu0 0.0
    %1915 = vmatpush1.msra.mxu0 0.0
    %1916 = vmatprep.subr.mxu0 0.0
    %1917 = vmatpush1.msra.mxu0 0.0
    %1918 = vmatprep.subr.mxu0 0.0
    %1919 = vmatpush1.msra.mxu0 0.0
    %1920 = vmatprep.subr.mxu0 0.0
    %1921 = vmatpush1.msra.mxu0 0.0
    %1922 = vmatprep.subr.mxu0 0.0
    %1923 = vmatpush1.msra.mxu0 %v509
    %1924 = vmatprep.subr.mxu0 0.0
    %1925 = vmatpush2.msra.mxu0 0.0
    %1926 = vmatprep.subr.mxu0 0.0
    %1927 = vmatpush2.msra.mxu0 0.0
    %1928 = vmatprep.subr.mxu0 0.0
    %1929 = vmatpush2.msra.mxu0 0.0
    %1930 = vmatprep.subr.mxu0 0.0
    %1931 = vmatpush2.msra.mxu0 0.0
    %1932 = vmatprep.subr.mxu0 0.0
    %1933 = vmatpush2.msra.mxu0 0.0
    %1934 = vmatprep.subr.mxu0 0.0
    %1935 = vmatpush2.msra.mxu0 0.0
    %1936 = vmatprep.subr.mxu0 0.0
    %1937 = vmatpush2.msra.mxu0 0.0
    %1938 = vmatprep.subr.mxu0 0.0
    %1939 = vmatpush2.msra.mxu0 0.0
    %1940 = vmatprep.subr.mxu0 0.0
    %1941 = vmatpush2.msra.mxu0 0.0
    %1942 = vmatprep.subr.mxu0 0.0
    %1943 = vmatpush2.msra.mxu0 0.0
    %1944 = vmatprep.subr.mxu0 0.0
    %1945 = vmatpush2.msra.mxu0 0.0
    %1946 = vmatprep.subr.mxu0 0.0
    %1947 = vmatpush2.msra.mxu0 0.0
    %1948 = vmatprep.subr.mxu0 0.0
    %1949 = vmatpush2.msra.mxu0 0.0
    %1950 = vmatprep.subr.mxu0 0.0
    %1951 = vmatpush2.msra.mxu0 0.0
    %1952 = vmatprep.subr.mxu0 0.0
    %1953 = vmatpush2.msra.mxu0 0.0
    %1954 = vmatprep.subr.mxu0 0.0
    %1955 = vmatpush2.msra.mxu0 0.0
    %1956 = vmatprep.mubr.f32.mxu0 0.0
    %1957 = vmatmul.mubr.f32.gmra.mxu0 %v1890
    %v1958 = vpop.f32.mrf.mxu0
    %v1959 = vadd.f32 %v1886, %v1958
    %v1960 = vpop.f32.mrf.mxu0
    %1961 = vdwg.mxu0
    %1962 = vrot.lane.b32.xlu0 %v506, 112
    %v1963 = vpop.permute.xlu0 %1962
    %1964 = vrot.lane.b32.xlu0 %v506, 80
    %v1965 = vpop.permute.xlu0 %1964
    %v1966 = vsel %vm517, %v1963, 0
    %v1968 = vsel %vm517, %v1965, 0
    %1970 = vmatprep.subr.mxu0 0.0
    %1971 = vmatpush1.xpose.msra.mxu0 0.0
    %1972 = vmatprep.subr.mxu0 0.0
    %1973 = vmatpush1.xpose.msra.mxu0 0.0
    %1974 = vmatprep.subr.mxu0 0.0
    %1975 = vmatpush1.xpose.msra.mxu0 0.0
    %1976 = vmatprep.subr.mxu0 0.0
    %1977 = vmatpush1.xpose.msra.mxu0 0.0
    %1978 = vmatprep.subr.mxu0 0.0
    %1979 = vmatpush1.xpose.msra.mxu0 0.0
    %1980 = vmatprep.subr.mxu0 0.0
    %1981 = vmatpush1.xpose.msra.mxu0 0.0
    %1982 = vmatprep.subr.mxu0 0.0
    %1983 = vmatpush1.xpose.msra.mxu0 0.0
    %1984 = vmatprep.subr.mxu0 0.0
    %1985 = vmatpush1.xpose.msra.mxu0 0.0
    %1986 = vmatprep.subr.mxu0 0.0
    %1987 = vmatpush1.xpose.msra.mxu0 0.0
    %1988 = vmatprep.subr.mxu0 0.0
    %1989 = vmatpush1.xpose.msra.mxu0 0.0
    %1990 = vmatprep.subr.mxu0 0.0
    %1991 = vmatpush1.xpose.msra.mxu0 0.0
    %1992 = vmatprep.subr.mxu0 0.0
    %1993 = vmatpush1.xpose.msra.mxu0 0.0
    %1994 = vmatprep.subr.mxu0 0.0
    %1995 = vmatpush1.xpose.msra.mxu0 0.0
    %1996 = vmatprep.subr.mxu0 0.0
    %1997 = vmatpush1.xpose.msra.mxu0 0.0
    %1998 = vmatprep.subr.mxu0 0.0
    %1999 = vmatpush1.xpose.msra.mxu0 0.0
    %2000 = vmatprep.subr.mxu0 0.0
    %2001 = vmatpush1.xpose.msra.mxu0 %v1968
    %2002 = vmatprep.subr.mxu0 0.0
    %2003 = vmatpush2.xpose.msra.mxu0 0.0
    %2004 = vmatprep.subr.mxu0 0.0
    %2005 = vmatpush2.xpose.msra.mxu0 0.0
    %2006 = vmatprep.subr.mxu0 0.0
    %2007 = vmatpush2.xpose.msra.mxu0 0.0
    %2008 = vmatprep.subr.mxu0 0.0
    %2009 = vmatpush2.xpose.msra.mxu0 0.0
    %2010 = vmatprep.subr.mxu0 0.0
    %2011 = vmatpush2.xpose.msra.mxu0 0.0
    %2012 = vmatprep.subr.mxu0 0.0
    %2013 = vmatpush2.xpose.msra.mxu0 0.0
    %2014 = vmatprep.subr.mxu0 0.0
    %2015 = vmatpush2.xpose.msra.mxu0 0.0
    %2016 = vmatprep.subr.mxu0 0.0
    %2017 = vmatpush2.xpose.msra.mxu0 0.0
    %2018 = vmatprep.subr.mxu0 0.0
    %2019 = vmatpush2.xpose.msra.mxu0 0.0
    %2020 = vmatprep.subr.mxu0 0.0
    %2021 = vmatpush2.xpose.msra.mxu0 0.0
    %2022 = vmatprep.subr.mxu0 0.0
    %2023 = vmatpush2.xpose.msra.mxu0 0.0
    %2024 = vmatprep.subr.mxu0 0.0
    %2025 = vmatpush2.xpose.msra.mxu0 0.0
    %2026 = vmatprep.subr.mxu0 0.0
    %2027 = vmatpush2.xpose.msra.mxu0 0.0
    %2028 = vmatprep.subr.mxu0 0.0
    %2029 = vmatpush2.xpose.msra.mxu0 0.0
    %2030 = vmatprep.subr.mxu0 0.0
    %2031 = vmatpush2.xpose.msra.mxu0 0.0
    %2032 = vmatprep.subr.mxu0 0.0
    %2033 = vmatpush2.xpose.msra.mxu0 0.0
    %2034 = vmatprep.mubr.f32.mxu0 0.0
    %2035 = vmatmul.mubr.f32.gmra.mxu0 %v1966
    %v2036 = vpop.f32.mrf.mxu0
    %v2037 = vadd.f32 0.0, %v2036
    %v2038 = vpop.f32.mrf.mxu0
    %2039 = vdwg.mxu0
    %v2040 = vmul.f32 %v2037, 0.35355338
    %v2041 = vadd.f32 %v2040, %v264
    %v2042 = vsel %vm517, %v2041, -inf
    %2043 = vmax.xlane.f32.xlu0 %v2042
    %v2044 = vpop.xlane.xlu0 %2043
    %v2045 = vsub.f32 %v2041, %v2044
    %v2046 = vmul.f32 %v2045, 1.442695
    %v2047 = vpow.pop %v2046
    %v2048 = vsel %vm517, %v2047, 0.0
    %2049 = vadd.xlane.f32.xlu0 %v2048
    %v2050 = vpop.xlane.xlu0 %2049
    %v2051 = vrcp.pop %v2050
    %v2052 = vmul.f32 %v2047, %v2051
    %2053 = vrot.lane.b32.xlu0 %v506, 48
    %v2054 = vpop.permute.xlu0 %2053
    %v2057 = vsel %vm517, %v2052, 0
    %2059 = vmatprep.subr.mxu0 0.0
    %2060 = vmatpush1.msra.mxu0 0.0
    %2061 = vmatprep.subr.mxu0 0.0
    %2062 = vmatpush1.msra.mxu0 0.0
    %2063 = vmatprep.subr.mxu0 0.0
    %2064 = vmatpush1.msra.mxu0 0.0
    %2065 = vmatprep.subr.mxu0 0.0
    %2066 = vmatpush1.msra.mxu0 0.0
    %2067 = vmatprep.subr.mxu0 0.0
    %2068 = vmatpush1.msra.mxu0 0.0
    %2069 = vmatprep.subr.mxu0 0.0
    %2070 = vmatpush1.msra.mxu0 0.0
    %2071 = vmatprep.subr.mxu0 0.0
    %2072 = vmatpush1.msra.mxu0 0.0
    %2073 = vmatprep.subr.mxu0 0.0
    %2074 = vmatpush1.msra.mxu0 0.0
    %2075 = vmatprep.subr.mxu0 0.0
    %2076 = vmatpush1.msra.mxu0 0.0
    %2077 = vmatprep.subr.mxu0 0.0
    %2078 = vmatpush1.msra.mxu0 0.0
    %2079 = vmatprep.subr.mxu0 0.0
    %2080 = vmatpush1.msra.mxu0 0.0
    %2081 = vmatprep.subr.mxu0 0.0
    %2082 = vmatpush1.msra.mxu0 0.0
    %2083 = vmatprep.subr.mxu0 0.0
    %2084 = vmatpush1.msra.mxu0 0.0
    %2085 = vmatprep.subr.mxu0 0.0
    %2086 = vmatpush1.msra.mxu0 0.0
    %2087 = vmatprep.subr.mxu0 0.0
    %2088 = vmatpush1.msra.mxu0 0.0
    %2089 = vmatprep.subr.mxu0 0.0
    %2090 = vmatpush1.msra.mxu0 %v2054
    %2091 = vmatprep.subr.mxu0 0.0
    %2092 = vmatpush2.msra.mxu0 0.0
    %2093 = vmatprep.subr.mxu0 0.0
    %2094 = vmatpush2.msra.mxu0 0.0
    %2095 = vmatprep.subr.mxu0 0.0
    %2096 = vmatpush2.msra.mxu0 0.0
    %2097 = vmatprep.subr.mxu0 0.0
    %2098 = vmatpush2.msra.mxu0 0.0
    %2099 = vmatprep.subr.mxu0 0.0
    %2100 = vmatpush2.msra.mxu0 0.0
    %2101 = vmatprep.subr.mxu0 0.0
    %2102 = vmatpush2.msra.mxu0 0.0
    %2103 = vmatprep.subr.mxu0 0.0
    %2104 = vmatpush2.msra.mxu0 0.0
    %2105 = vmatprep.subr.mxu0 0.0
    %2106 = vmatpush2.msra.mxu0 0.0
    %2107 = vmatprep.subr.mxu0 0.0
    %2108 = vmatpush2.msra.mxu0 0.0
    %2109 = vmatprep.subr.mxu0 0.0
    %2110 = vmatpush2.msra.mxu0 0.0
    %2111 = vmatprep.subr.mxu0 0.0
    %2112 = vmatpush2.msra.mxu0 0.0
    %2113 = vmatprep.subr.mxu0 0.0
    %2114 = vmatpush2.msra.mxu0 0.0
    %2115 = vmatprep.subr.mxu0 0.0
    %2116 = vmatpush2.msra.mxu0 0.0
    %2117 = vmatprep.subr.mxu0 0.0
    %2118 = vmatpush2.msra.mxu0 0.0
    %2119 = vmatprep.subr.mxu0 0.0
    %2120 = vmatpush2.msra.mxu0 0.0
    %2121 = vmatprep.subr.mxu0 0.0
    %2122 = vmatpush2.msra.mxu0 0.0
    %2123 = vmatprep.mubr.f32.mxu0 0.0
    %2124 = vmatmul.mubr.f32.gmra.mxu0 %v2057
    %v2125 = vpop.f32.mrf.mxu0
    %v2126 = vadd.f32 0.0, %v2125
    %v2127 = vpop.f32.mrf.mxu0
    %2128 = vdwg.mxu0
    %v2130 = vsel %vm517, %v2126, 0
    %2132 = vmatprep.subr.mxu0 0.0
    %2133 = vmatpush1.msra.mxu0 0.0
    %2134 = vmatprep.subr.mxu0 0.0
    %2135 = vmatpush1.msra.mxu0 0.0
    %2136 = vmatprep.subr.mxu0 0.0
    %2137 = vmatpush1.msra.mxu0 0.0
    %2138 = vmatprep.subr.mxu0 0.0
    %2139 = vmatpush1.msra.mxu0 0.0
    %2140 = vmatprep.subr.mxu0 0.0
    %2141 = vmatpush1.msra.mxu0 0.0
    %2142 = vmatprep.subr.mxu0 0.0
    %2143 = vmatpush1.msra.mxu0 0.0
    %2144 = vmatprep.subr.mxu0 0.0
    %2145 = vmatpush1.msra.mxu0 0.0
    %2146 = vmatprep.subr.mxu0 0.0
    %2147 = vmatpush1.msra.mxu0 0.0
    %2148 = vmatprep.subr.mxu0 0.0
    %2149 = vmatpush1.msra.mxu0 0.0
    %2150 = vmatprep.subr.mxu0 0.0
    %2151 = vmatpush1.msra.mxu0 0.0
    %2152 = vmatprep.subr.mxu0 0.0
    %2153 = vmatpush1.msra.mxu0 0.0
    %2154 = vmatprep.subr.mxu0 0.0
    %2155 = vmatpush1.msra.mxu0 0.0
    %2156 = vmatprep.subr.mxu0 0.0
    %2157 = vmatpush1.msra.mxu0 0.0
    %2158 = vmatprep.subr.mxu0 0.0
    %2159 = vmatpush1.msra.mxu0 0.0
    %2160 = vmatprep.subr.mxu0 0.0
    %2161 = vmatpush1.msra.mxu0 0.0
    %2162 = vmatprep.subr.mxu0 0.0
    %2163 = vmatpush1.msra.mxu0 %v511
    %2164 = vmatprep.subr.mxu0 0.0
    %2165 = vmatpush2.msra.mxu0 0.0
    %2166 = vmatprep.subr.mxu0 0.0
    %2167 = vmatpush2.msra.mxu0 0.0
    %2168 = vmatprep.subr.mxu0 0.0
    %2169 = vmatpush2.msra.mxu0 0.0
    %2170 = vmatprep.subr.mxu0 0.0
    %2171 = vmatpush2.msra.mxu0 0.0
    %2172 = vmatprep.subr.mxu0 0.0
    %2173 = vmatpush2.msra.mxu0 0.0
    %2174 = vmatprep.subr.mxu0 0.0
    %2175 = vmatpush2.msra.mxu0 0.0
    %2176 = vmatprep.subr.mxu0 0.0
    %2177 = vmatpush2.msra.mxu0 0.0
    %2178 = vmatprep.subr.mxu0 0.0
    %2179 = vmatpush2.msra.mxu0 0.0
    %2180 = vmatprep.subr.mxu0 0.0
    %2181 = vmatpush2.msra.mxu0 0.0
    %2182 = vmatprep.subr.mxu0 0.0
    %2183 = vmatpush2.msra.mxu0 0.0
    %2184 = vmatprep.subr.mxu0 0.0
    %2185 = vmatpush2.msra.mxu0 0.0
    %2186 = vmatprep.subr.mxu0 0.0
    %2187 = vmatpush2.msra.mxu0 0.0
    %2188 = vmatprep.subr.mxu0 0.0
    %2189 = vmatpush2.msra.mxu0 0.0
    %2190 = vmatprep.subr.mxu0 0.0
    %2191 = vmatpush2.msra.mxu0 0.0
    %2192 = vmatprep.subr.mxu0 0.0
    %2193 = vmatpush2.msra.mxu0 0.0
    %2194 = vmatprep.subr.mxu0 0.0
    %2195 = vmatpush2.msra.mxu0 0.0
    %2196 = vmatprep.mubr.f32.mxu0 0.0
    %2197 = vmatmul.mubr.f32.gmra.mxu0 %v2130
    %v2198 = vpop.f32.mrf.mxu0
    %v2199 = vadd.f32 0.0, %v2198
    %v2200 = vpop.f32.mrf.mxu0
    %2201 = vdwg.mxu0
    %v2202 = vadd.f32 %v1959, %v2199
    %2203 = vrot.lane.b32.xlu0 %v506, 104
    %v2204 = vpop.permute.xlu0 %2203
    %2205 = vrot.lane.b32.xlu0 %v506, 72
    %v2206 = vpop.permute.xlu0 %2205
    %v2207 = vsel %vm517, %v2204, 0
    %v2209 = vsel %vm517, %v2206, 0
    %2211 = vmatprep.subr.mxu0 0.0
    %2212 = vmatpush1.xpose.msra.mxu0 0.0
    %2213 = vmatprep.subr.mxu0 0.0
    %2214 = vmatpush1.xpose.msra.mxu0 0.0
    %2215 = vmatprep.subr.mxu0 0.0
    %2216 = vmatpush1.xpose.msra.mxu0 0.0
    %2217 = vmatprep.subr.mxu0 0.0
    %2218 = vmatpush1.xpose.msra.mxu0 0.0
    %2219 = vmatprep.subr.mxu0 0.0
    %2220 = vmatpush1.xpose.msra.mxu0 0.0
    %2221 = vmatprep.subr.mxu0 0.0
    %2222 = vmatpush1.xpose.msra.mxu0 0.0
    %2223 = vmatprep.subr.mxu0 0.0
    %2224 = vmatpush1.xpose.msra.mxu0 0.0
    %2225 = vmatprep.subr.mxu0 0.0
    %2226 = vmatpush1.xpose.msra.mxu0 0.0
    %2227 = vmatprep.subr.mxu0 0.0
    %2228 = vmatpush1.xpose.msra.mxu0 0.0
    %2229 = vmatprep.subr.mxu0 0.0
    %2230 = vmatpush1.xpose.msra.mxu0 0.0
    %2231 = vmatprep.subr.mxu0 0.0
    %2232 = vmatpush1.xpose.msra.mxu0 0.0
    %2233 = vmatprep.subr.mxu0 0.0
    %2234 = vmatpush1.xpose.msra.mxu0 0.0
    %2235 = vmatprep.subr.mxu0 0.0
    %2236 = vmatpush1.xpose.msra.mxu0 0.0
    %2237 = vmatprep.subr.mxu0 0.0
    %2238 = vmatpush1.xpose.msra.mxu0 0.0
    %2239 = vmatprep.subr.mxu0 0.0
    %2240 = vmatpush1.xpose.msra.mxu0 0.0
    %2241 = vmatprep.subr.mxu0 0.0
    %2242 = vmatpush1.xpose.msra.mxu0 %v2209
    %2243 = vmatprep.subr.mxu0 0.0
    %2244 = vmatpush2.xpose.msra.mxu0 0.0
    %2245 = vmatprep.subr.mxu0 0.0
    %2246 = vmatpush2.xpose.msra.mxu0 0.0
    %2247 = vmatprep.subr.mxu0 0.0
    %2248 = vmatpush2.xpose.msra.mxu0 0.0
    %2249 = vmatprep.subr.mxu0 0.0
    %2250 = vmatpush2.xpose.msra.mxu0 0.0
    %2251 = vmatprep.subr.mxu0 0.0
    %2252 = vmatpush2.xpose.msra.mxu0 0.0
    %2253 = vmatprep.subr.mxu0 0.0
    %2254 = vmatpush2.xpose.msra.mxu0 0.0
    %2255 = vmatprep.subr.mxu0 0.0
    %2256 = vmatpush2.xpose.msra.mxu0 0.0
    %2257 = vmatprep.subr.mxu0 0.0
    %2258 = vmatpush2.xpose.msra.mxu0 0.0
    %2259 = vmatprep.subr.mxu0 0.0
    %2260 = vmatpush2.xpose.msra.mxu0 0.0
    %2261 = vmatprep.subr.mxu0 0.0
    %2262 = vmatpush2.xpose.msra.mxu0 0.0
    %2263 = vmatprep.subr.mxu0 0.0
    %2264 = vmatpush2.xpose.msra.mxu0 0.0
    %2265 = vmatprep.subr.mxu0 0.0
    %2266 = vmatpush2.xpose.msra.mxu0 0.0
    %2267 = vmatprep.subr.mxu0 0.0
    %2268 = vmatpush2.xpose.msra.mxu0 0.0
    %2269 = vmatprep.subr.mxu0 0.0
    %2270 = vmatpush2.xpose.msra.mxu0 0.0
    %2271 = vmatprep.subr.mxu0 0.0
    %2272 = vmatpush2.xpose.msra.mxu0 0.0
    %2273 = vmatprep.subr.mxu0 0.0
    %2274 = vmatpush2.xpose.msra.mxu0 0.0
    %2275 = vmatprep.mubr.f32.mxu0 0.0
    %2276 = vmatmul.mubr.f32.gmra.mxu0 %v2207
    %v2277 = vpop.f32.mrf.mxu0
    %v2278 = vadd.f32 0.0, %v2277
    %v2279 = vpop.f32.mrf.mxu0
    %2280 = vdwg.mxu0
    %v2281 = vmul.f32 %v2278, 0.35355338
    %v2282 = vadd.f32 %v2281, %v264
    %v2283 = vsel %vm517, %v2282, -inf
    %2284 = vmax.xlane.f32.xlu0 %v2283
    %v2285 = vpop.xlane.xlu0 %2284
    %v2286 = vsub.f32 %v2282, %v2285
    %v2287 = vmul.f32 %v2286, 1.442695
    %v2288 = vpow.pop %v2287
    %v2289 = vsel %vm517, %v2288, 0.0
    %2290 = vadd.xlane.f32.xlu0 %v2289
    %v2291 = vpop.xlane.xlu0 %2290
    %v2292 = vrcp.pop %v2291
    %v2293 = vmul.f32 %v2288, %v2292
    %2294 = vrot.lane.b32.xlu0 %v506, 40
    %v2295 = vpop.permute.xlu0 %2294
    %v2298 = vsel %vm517, %v2293, 0
    %2300 = vmatprep.subr.mxu0 0.0
    %2301 = vmatpush1.msra.mxu0 0.0
    %2302 = vmatprep.subr.mxu0 0.0
    %2303 = vmatpush1.msra.mxu0 0.0
    %2304 = vmatprep.subr.mxu0 0.0
    %2305 = vmatpush1.msra.mxu0 0.0
    %2306 = vmatprep.subr.mxu0 0.0
    %2307 = vmatpush1.msra.mxu0 0.0
    %2308 = vmatprep.subr.mxu0 0.0
    %2309 = vmatpush1.msra.mxu0 0.0
    %2310 = vmatprep.subr.mxu0 0.0
    %2311 = vmatpush1.msra.mxu0 0.0
    %2312 = vmatprep.subr.mxu0 0.0
    %2313 = vmatpush1.msra.mxu0 0.0
    %2314 = vmatprep.subr.mxu0 0.0
    %2315 = vmatpush1.msra.mxu0 0.0
    %2316 = vmatprep.subr.mxu0 0.0
    %2317 = vmatpush1.msra.mxu0 0.0
    %2318 = vmatprep.subr.mxu0 0.0
    %2319 = vmatpush1.msra.mxu0 0.0
    %2320 = vmatprep.subr.mxu0 0.0
    %2321 = vmatpush1.msra.mxu0 0.0
    %2322 = vmatprep.subr.mxu0 0.0
    %2323 = vmatpush1.msra.mxu0 0.0
    %2324 = vmatprep.subr.mxu0 0.0
    %2325 = vmatpush1.msra.mxu0 0.0
    %2326 = vmatprep.subr.mxu0 0.0
    %2327 = vmatpush1.msra.mxu0 0.0
    %2328 = vmatprep.subr.mxu0 0.0
    %2329 = vmatpush1.msra.mxu0 0.0
    %2330 = vmatprep.subr.mxu0 0.0
    %2331 = vmatpush1.msra.mxu0 %v2295
    %2332 = vmatprep.subr.mxu0 0.0
    %2333 = vmatpush2.msra.mxu0 0.0
    %2334 = vmatprep.subr.mxu0 0.0
    %2335 = vmatpush2.msra.mxu0 0.0
    %2336 = vmatprep.subr.mxu0 0.0
    %2337 = vmatpush2.msra.mxu0 0.0
    %2338 = vmatprep.subr.mxu0 0.0
    %2339 = vmatpush2.msra.mxu0 0.0
    %2340 = vmatprep.subr.mxu0 0.0
    %2341 = vmatpush2.msra.mxu0 0.0
    %2342 = vmatprep.subr.mxu0 0.0
    %2343 = vmatpush2.msra.mxu0 0.0
    %2344 = vmatprep.subr.mxu0 0.0
    %2345 = vmatpush2.msra.mxu0 0.0
    %2346 = vmatprep.subr.mxu0 0.0
    %2347 = vmatpush2.msra.mxu0 0.0
    %2348 = vmatprep.subr.mxu0 0.0
    %2349 = vmatpush2.msra.mxu0 0.0
    %2350 = vmatprep.subr.mxu0 0.0
    %2351 = vmatpush2.msra.mxu0 0.0
    %2352 = vmatprep.subr.mxu0 0.0
    %2353 = vmatpush2.msra.mxu0 0.0
    %2354 = vmatprep.subr.mxu0 0.0
    %2355 = vmatpush2.msra.mxu0 0.0
    %2356 = vmatprep.subr.mxu0 0.0
    %2357 = vmatpush2.msra.mxu0 0.0
    %2358 = vmatprep.subr.mxu0 0.0
    %2359 = vmatpush2.msra.mxu0 0.0
    %2360 = vmatprep.subr.mxu0 0.0
    %2361 = vmatpush2.msra.mxu0 0.0
    %2362 = vmatprep.subr.mxu0 0.0
    %2363 = vmatpush2.msra.mxu0 0.0
    %2364 = vmatprep.mubr.f32.mxu0 0.0
    %2365 = vmatmul.mubr.f32.gmra.mxu0 %v2298
    %v2366 = vpop.f32.mrf.mxu0
    %v2367 = vadd.f32 0.0, %v2366
    %v2368 = vpop.f32.mrf.mxu0
    %2369 = vdwg.mxu0
    %v2371 = vsel %vm517, %v2367, 0
    %2373 = vmatprep.subr.mxu0 0.0
    %2374 = vmatpush1.msra.mxu0 0.0
    %2375 = vmatprep.subr.mxu0 0.0
    %2376 = vmatpush1.msra.mxu0 0.0
    %2377 = vmatprep.subr.mxu0 0.0
    %2378 = vmatpush1.msra.mxu0 0.0
    %2379 = vmatprep.subr.mxu0 0.0
    %2380 = vmatpush1.msra.mxu0 0.0
    %2381 = vmatprep.subr.mxu0 0.0
    %2382 = vmatpush1.msra.mxu0 0.0
    %2383 = vmatprep.subr.mxu0 0.0
    %2384 = vmatpush1.msra.mxu0 0.0
    %2385 = vmatprep.subr.mxu0 0.0
    %2386 = vmatpush1.msra.mxu0 0.0
    %2387 = vmatprep.subr.mxu0 0.0
    %2388 = vmatpush1.msra.mxu0 0.0
    %2389 = vmatprep.subr.mxu0 0.0
    %2390 = vmatpush1.msra.mxu0 0.0
    %2391 = vmatprep.subr.mxu0 0.0
    %2392 = vmatpush1.msra.mxu0 0.0
    %2393 = vmatprep.subr.mxu0 0.0
    %2394 = vmatpush1.msra.mxu0 0.0
    %2395 = vmatprep.subr.mxu0 0.0
    %2396 = vmatpush1.msra.mxu0 0.0
    %2397 = vmatprep.subr.mxu0 0.0
    %2398 = vmatpush1.msra.mxu0 0.0
    %2399 = vmatprep.subr.mxu0 0.0
    %2400 = vmatpush1.msra.mxu0 0.0
    %2401 = vmatprep.subr.mxu0 0.0
    %2402 = vmatpush1.msra.mxu0 0.0
    %2403 = vmatprep.subr.mxu0 0.0
    %2404 = vmatpush1.msra.mxu0 %v512
    %2405 = vmatprep.subr.mxu0 0.0
    %2406 = vmatpush2.msra.mxu0 0.0
    %2407 = vmatprep.subr.mxu0 0.0
    %2408 = vmatpush2.msra.mxu0 0.0
    %2409 = vmatprep.subr.mxu0 0.0
    %2410 = vmatpush2.msra.mxu0 0.0
    %2411 = vmatprep.subr.mxu0 0.0
    %2412 = vmatpush2.msra.mxu0 0.0
    %2413 = vmatprep.subr.mxu0 0.0
    %2414 = vmatpush2.msra.mxu0 0.0
    %2415 = vmatprep.subr.mxu0 0.0
    %2416 = vmatpush2.msra.mxu0 0.0
    %2417 = vmatprep.subr.mxu0 0.0
    %2418 = vmatpush2.msra.mxu0 0.0
    %2419 = vmatprep.subr.mxu0 0.0
    %2420 = vmatpush2.msra.mxu0 0.0
    %2421 = vmatprep.subr.mxu0 0.0
    %2422 = vmatpush2.msra.mxu0 0.0
    %2423 = vmatprep.subr.mxu0 0.0
    %2424 = vmatpush2.msra.mxu0 0.0
    %2425 = vmatprep.subr.mxu0 0.0
    %2426 = vmatpush2.msra.mxu0 0.0
    %2427 = vmatprep.subr.mxu0 0.0
    %2428 = vmatpush2.msra.mxu0 0.0
    %2429 = vmatprep.subr.mxu0 0.0
    %2430 = vmatpush2.msra.mxu0 0.0
    %2431 = vmatprep.subr.mxu0 0.0
    %2432 = vmatpush2.msra.mxu0 0.0
    %2433 = vmatprep.subr.mxu0 0.0
    %2434 = vmatpush2.msra.mxu0 0.0
    %2435 = vmatprep.subr.mxu0 0.0
    %2436 = vmatpush2.msra.mxu0 0.0
    %2437 = vmatprep.mubr.f32.mxu0 0.0
    %2438 = vmatmul.mubr.f32.gmra.mxu0 %v2371
    %v2439 = vpop.f32.mrf.mxu0
    %v2440 = vadd.f32 0.0, %v2439
    %v2441 = vpop.f32.mrf.mxu0
    %2442 = vdwg.mxu0
    %v2443 = vadd.f32 %v2202, %v2440
    %v2444 = vadd.f32 %v2443, %v1480
    %v2445 = vadd.f32 %v253, %v1482
    %v2446 = vadd.f32 %v254, %v2444
    %v2447 = vsel %vm282, %v2445, 0.0
    %2448 = vadd.xlane.f32.xlu0 %v2447
    %v2449 = vpop.xlane.xlu0 %2448
    %v2450 = vsel %vm282, %v2446, 0.0
    %2451 = vadd.xlane.f32.xlu0 %v2450
    %v2452 = vpop.xlane.xlu0 %2451
    %v2453 = vmul.f32 %v2449, %v370
    %v2454 = vmul.f32 %v2452, %v370
    %v2455 = vsub.f32 %v2445, %v2453
    %v2456 = vsub.f32 %v2446, %v2454
    %v2457 = vmul.f32 %v2455, %v2455
    %v2458 = vmul.f32 %v2456, %v2456
    %v2459 = vsel %vm282, %v2457, 0.0
    %2460 = vadd.xlane.f32.xlu0 %v2459
    %v2461 = vpop.xlane.xlu0 %2460
    %v2462 = vsel %vm282, %v2458, 0.0
    %2463 = vadd.xlane.f32.xlu0 %v2462
    %v2464 = vpop.xlane.xlu0 %2463
    %v2465 = vmul.f32 %v2461, 0.032258064
    %v2466 = vmul.f32 %v2464, 0.032258064
    %v2467 = vrsqrt.pop %v2465
    %v2468 = vmul.f32 %v2465, %v2467
    %vm2469 = vcmp.eq.f32.partialorder %v2465, inf
    %v2470 = vsel %vm2469, %v2465, %v2468
    %vm2471 = vcmp.eq.f32.partialorder %v2465, 0.0
    %v2472 = vand.u32 %v2465, 2147483648
    %v2473 = vsel %vm2471, %v2472, %v2470
    %v2474 = vrsqrt.pop %v2466
    %v2475 = vmul.f32 %v2466, %v2474
    %vm2476 = vcmp.eq.f32.partialorder %v2466, inf
    %v2477 = vsel %vm2476, %v2466, %v2475
    %vm2478 = vcmp.eq.f32.partialorder %v2466, 0.0
    %v2479 = vand.u32 %v2466, 2147483648
    %v2480 = vsel %vm2478, %v2479, %v2477
    %v2481 = vlaneseq
    %v2482 = vshrl.u32 %v2481, 7
    %v2483 = vsub.s32 1, %v2482
    %v2484 = vrot.slane %v257, %v2483
    %v2485 = vmul.f32 %v2484, %v2455
    %v2486 = vmul.f32 %v2484, %v2456
    %v2487 = vadd.f32 %v2473, 1e-06
    %v2488 = vadd.f32 %v2480, 1e-06
    %v2489 = vrcp.pop %v2487
    %v2490 = vmul.f32 %v2485, %v2489
    %v2491 = vrcp.pop %v2488
    %v2492 = vmul.f32 %v2486, %v2491
    %v2493 = vlaneseq
    %v2494 = vshrl.u32 %v2493, 7
    %v2495 = vsub.s32 1, %v2494
    %v2496 = vrot.slane %v258, %v2495
    %v2497 = vadd.f32 %v2490, %v2496
    %v2498 = vadd.f32 %v2492, %v2496
    %v2499 = vld [vmem:[%s8] sm:$0xff]
    %v2500 = vld [vmem:[%s8 + $0x8] sm:$0xff]
    %v2501 = vld [vmem:[%s8 + $0x10] sm:$0xff]
    %v2502 = vld [vmem:[%s8 + $0x18] sm:$0xff]
    %v2503 = vld [vmem:[#allocation13] sm:$0x1]
    %v2505 = vlaneseq
    %v2506 = vshrl.u32 %v2505, 7
    %v2507 = vsub.s32 0, %v2506
    %v2508 = vrot.slane %v2503, %v2507
    %v2511 = vsel %vm282, %v2497, 0
    %v2514 = vsel %vm282, %v2498, 0
    %2516 = vmatprep.subr.mxu0 0.0
    %2517 = vmatpush1.msra.mxu0 0.0
    %2518 = vmatprep.subr.mxu0 0.0
    %2519 = vmatpush1.msra.mxu0 0.0
    %2520 = vmatprep.subr.mxu0 0.0
    %2521 = vmatpush1.msra.mxu0 0.0
    %2522 = vmatprep.subr.mxu0 0.0
    %2523 = vmatpush1.msra.mxu0 0.0
    %2524 = vmatprep.subr.mxu0 0.0
    %2525 = vmatpush1.msra.mxu0 0.0
    %2526 = vmatprep.subr.mxu0 0.0
    %2527 = vmatpush1.msra.mxu0 0.0
    %2528 = vmatprep.subr.mxu0 0.0
    %2529 = vmatpush1.msra.mxu0 0.0
    %2530 = vmatprep.subr.mxu0 0.0
    %2531 = vmatpush1.msra.mxu0 0.0
    %2532 = vmatprep.subr.mxu0 0.0
    %2533 = vmatpush1.msra.mxu0 0.0
    %2534 = vmatprep.subr.mxu0 0.0
    %2535 = vmatpush1.msra.mxu0 0.0
    %2536 = vmatprep.subr.mxu0 0.0
    %2537 = vmatpush1.msra.mxu0 0.0
    %2538 = vmatprep.subr.mxu0 0.0
    %2539 = vmatpush1.msra.mxu0 0.0
    %2540 = vmatprep.subr.mxu0 0.0
    %2541 = vmatpush1.msra.mxu0 %v2502
    %2542 = vmatprep.subr.mxu0 0.0
    %2543 = vmatpush1.msra.mxu0 %v2501
    %2544 = vmatprep.subr.mxu0 0.0
    %2545 = vmatpush1.msra.mxu0 %v2500
    %2546 = vmatprep.subr.mxu0 0.0
    %2547 = vmatpush1.msra.mxu0 %v2499
    %2548 = vmatprep.subr.mxu0 0.0
    %2549 = vmatpush2.msra.mxu0 0.0
    %2550 = vmatprep.subr.mxu0 0.0
    %2551 = vmatpush2.msra.mxu0 0.0
    %2552 = vmatprep.subr.mxu0 0.0
    %2553 = vmatpush2.msra.mxu0 0.0
    %2554 = vmatprep.subr.mxu0 0.0
    %2555 = vmatpush2.msra.mxu0 0.0
    %2556 = vmatprep.subr.mxu0 0.0
    %2557 = vmatpush2.msra.mxu0 0.0
    %2558 = vmatprep.subr.mxu0 0.0
    %2559 = vmatpush2.msra.mxu0 0.0
    %2560 = vmatprep.subr.mxu0 0.0
    %2561 = vmatpush2.msra.mxu0 0.0
    %2562 = vmatprep.subr.mxu0 0.0
    %2563 = vmatpush2.msra.mxu0 0.0
    %2564 = vmatprep.subr.mxu0 0.0
    %2565 = vmatpush2.msra.mxu0 0.0
    %2566 = vmatprep.subr.mxu0 0.0
    %2567 = vmatpush2.msra.mxu0 0.0
    %2568 = vmatprep.subr.mxu0 0.0
    %2569 = vmatpush2.msra.mxu0 0.0
    %2570 = vmatprep.subr.mxu0 0.0
    %2571 = vmatpush2.msra.mxu0 0.0
    %2572 = vmatprep.subr.mxu0 0.0
    %2573 = vmatpush2.msra.mxu0 0.0
    %2574 = vmatprep.subr.mxu0 0.0
    %2575 = vmatpush2.msra.mxu0 0.0
    %2576 = vmatprep.subr.mxu0 0.0
    %2577 = vmatpush2.msra.mxu0 0.0
    %2578 = vmatprep.subr.mxu0 0.0
    %2579 = vmatpush2.msra.mxu0 0.0
    %2580 = vmatprep.mubr.f32.mxu0 0.0
    %2581 = vmatmul.mubr.f32.gmra.mxu0 %v2511
    %v2582 = vpop.f32.mrf.mxu0
    %v2583 = vadd.f32 %v2508, %v2582
    %v2584 = vpop.f32.mrf.mxu0
    %2585 = vmatprep.mubr.f32.mxu0 0.0
    %2586 = vmatmul.mubr.f32.gmra.mxu0 %v2514
    %v2587 = vpop.f32.mrf.mxu0
    %v2588 = vadd.f32 %v2508, %v2587
    %v2589 = vpop.f32.mrf.mxu0
    %2590 = vdwg.mxu0
    %v2591 = vld [vmem:[#allocation17] sm:$0xff]
    %v2592 = vld [vmem:[#allocation17 + $0x8] sm:$0xff]
    %v2593 = vld [vmem:[#allocation17 + $0x10] sm:$0xff]
    %v2594 = vld [vmem:[#allocation17 + $0x18] sm:$0xff]
    %v2595 = vld [vmem:[#allocation19] sm:$0x1]
    %v2597 = vsel %vm517, %v2583, 0
    %v2600 = vsel %vm517, %v356, 0
    %2602 = vmatprep.subr.mxu0 0.0
    %2603 = vmatpush1.xpose.msra.mxu0 0.0
    %2604 = vmatprep.subr.mxu0 0.0
    %2605 = vmatpush1.xpose.msra.mxu0 0.0
    %2606 = vmatprep.subr.mxu0 0.0
    %2607 = vmatpush1.xpose.msra.mxu0 0.0
    %2608 = vmatprep.subr.mxu0 0.0
    %2609 = vmatpush1.xpose.msra.mxu0 0.0
    %2610 = vmatprep.subr.mxu0 0.0
    %2611 = vmatpush1.xpose.msra.mxu0 0.0
    %2612 = vmatprep.subr.mxu0 0.0
    %2613 = vmatpush1.xpose.msra.mxu0 0.0
    %2614 = vmatprep.subr.mxu0 0.0
    %2615 = vmatpush1.xpose.msra.mxu0 0.0
    %2616 = vmatprep.subr.mxu0 0.0
    %2617 = vmatpush1.xpose.msra.mxu0 0.0
    %2618 = vmatprep.subr.mxu0 0.0
    %2619 = vmatpush1.xpose.msra.mxu0 0.0
    %2620 = vmatprep.subr.mxu0 0.0
    %2621 = vmatpush1.xpose.msra.mxu0 0.0
    %2622 = vmatprep.subr.mxu0 0.0
    %2623 = vmatpush1.xpose.msra.mxu0 0.0
    %2624 = vmatprep.subr.mxu0 0.0
    %2625 = vmatpush1.xpose.msra.mxu0 0.0
    %2626 = vmatprep.subr.mxu0 0.0
    %2627 = vmatpush1.xpose.msra.mxu0 0.0
    %2628 = vmatprep.subr.mxu0 0.0
    %2629 = vmatpush1.xpose.msra.mxu0 0.0
    %2630 = vmatprep.subr.mxu0 0.0
    %2631 = vmatpush1.xpose.msra.mxu0 0.0
    %2632 = vmatprep.subr.mxu0 0.0
    %2633 = vmatpush1.xpose.msra.mxu0 %v2600
    %2634 = vmatprep.subr.mxu0 0.0
    %2635 = vmatpush2.xpose.msra.mxu0 0.0
    %2636 = vmatprep.subr.mxu0 0.0
    %2637 = vmatpush2.xpose.msra.mxu0 0.0
    %2638 = vmatprep.subr.mxu0 0.0
    %2639 = vmatpush2.xpose.msra.mxu0 0.0
    %2640 = vmatprep.subr.mxu0 0.0
    %2641 = vmatpush2.xpose.msra.mxu0 0.0
    %2642 = vmatprep.subr.mxu0 0.0
    %2643 = vmatpush2.xpose.msra.mxu0 0.0
    %2644 = vmatprep.subr.mxu0 0.0
    %2645 = vmatpush2.xpose.msra.mxu0 0.0
    %2646 = vmatprep.subr.mxu0 0.0
    %2647 = vmatpush2.xpose.msra.mxu0 0.0
    %2648 = vmatprep.subr.mxu0 0.0
    %2649 = vmatpush2.xpose.msra.mxu0 0.0
    %2650 = vmatprep.subr.mxu0 0.0
    %2651 = vmatpush2.xpose.msra.mxu0 0.0
    %2652 = vmatprep.subr.mxu0 0.0
    %2653 = vmatpush2.xpose.msra.mxu0 0.0
    %2654 = vmatprep.subr.mxu0 0.0
    %2655 = vmatpush2.xpose.msra.mxu0 0.0
    %2656 = vmatprep.subr.mxu0 0.0
    %2657 = vmatpush2.xpose.msra.mxu0 0.0
    %2658 = vmatprep.subr.mxu0 0.0
    %2659 = vmatpush2.xpose.msra.mxu0 0.0
    %2660 = vmatprep.subr.mxu0 0.0
    %2661 = vmatpush2.xpose.msra.mxu0 0.0
    %2662 = vmatprep.subr.mxu0 0.0
    %2663 = vmatpush2.xpose.msra.mxu0 0.0
    %2664 = vmatprep.subr.mxu0 0.0
    %2665 = vmatpush2.xpose.msra.mxu0 0.0
    %2666 = vmatprep.mubr.f32.mxu0 0.0
    %2667 = vmatmul.mubr.f32.gmra.mxu0 %v2597
    %v2668 = vpop.f32.mrf.mxu0
    %v2669 = vadd.f32 0.0, %v2668
    %v2670 = vpop.f32.mrf.mxu0
    %2671 = vdwg.mxu0
    %v2672 = vmul.f32 %v2669, 0.35355338
    %v2673 = vadd.f32 %v2672, %v269
    %v2674 = vsel %vm517, %v2673, -inf
    %2675 = vmax.xlane.f32.xlu0 %v2674
    %v2676 = vpop.xlane.xlu0 %2675
    %v2677 = vsub.f32 %v2673, %v2676
    %v2678 = vmul.f32 %v2677, 1.442695
    %v2679 = vpow.pop %v2678
    %v2680 = vsel %vm517, %v2679, 0.0
    %2681 = vadd.xlane.f32.xlu0 %v2680
    %v2682 = vpop.xlane.xlu0 %2681
    %v2683 = vrcp.pop %v2682
    %v2684 = vmul.f32 %v2679, %v2683
    %2685 = vrot.lane.b32.xlu0 %v356, 96
    %v2686 = vpop.permute.xlu0 %2685
    %v2689 = vsel %vm517, %v2684, 0
    %2691 = vmatprep.subr.mxu0 0.0
    %2692 = vmatpush1.msra.mxu0 0.0
    %2693 = vmatprep.subr.mxu0 0.0
    %2694 = vmatpush1.msra.mxu0 0.0
    %2695 = vmatprep.subr.mxu0 0.0
    %2696 = vmatpush1.msra.mxu0 0.0
    %2697 = vmatprep.subr.mxu0 0.0
    %2698 = vmatpush1.msra.mxu0 0.0
    %2699 = vmatprep.subr.mxu0 0.0
    %2700 = vmatpush1.msra.mxu0 0.0
    %2701 = vmatprep.subr.mxu0 0.0
    %2702 = vmatpush1.msra.mxu0 0.0
    %2703 = vmatprep.subr.mxu0 0.0
    %2704 = vmatpush1.msra.mxu0 0.0
    %2705 = vmatprep.subr.mxu0 0.0
    %2706 = vmatpush1.msra.mxu0 0.0
    %2707 = vmatprep.subr.mxu0 0.0
    %2708 = vmatpush1.msra.mxu0 0.0
    %2709 = vmatprep.subr.mxu0 0.0
    %2710 = vmatpush1.msra.mxu0 0.0
    %2711 = vmatprep.subr.mxu0 0.0
    %2712 = vmatpush1.msra.mxu0 0.0
    %2713 = vmatprep.subr.mxu0 0.0
    %2714 = vmatpush1.msra.mxu0 0.0
    %2715 = vmatprep.subr.mxu0 0.0
    %2716 = vmatpush1.msra.mxu0 0.0
    %2717 = vmatprep.subr.mxu0 0.0
    %2718 = vmatpush1.msra.mxu0 0.0
    %2719 = vmatprep.subr.mxu0 0.0
    %2720 = vmatpush1.msra.mxu0 0.0
    %2721 = vmatprep.subr.mxu0 0.0
    %2722 = vmatpush1.msra.mxu0 %v2686
    %2723 = vmatprep.subr.mxu0 0.0
    %2724 = vmatpush2.msra.mxu0 0.0
    %2725 = vmatprep.subr.mxu0 0.0
    %2726 = vmatpush2.msra.mxu0 0.0
    %2727 = vmatprep.subr.mxu0 0.0
    %2728 = vmatpush2.msra.mxu0 0.0
    %2729 = vmatprep.subr.mxu0 0.0
    %2730 = vmatpush2.msra.mxu0 0.0
    %2731 = vmatprep.subr.mxu0 0.0
    %2732 = vmatpush2.msra.mxu0 0.0
    %2733 = vmatprep.subr.mxu0 0.0
    %2734 = vmatpush2.msra.mxu0 0.0
    %2735 = vmatprep.subr.mxu0 0.0
    %2736 = vmatpush2.msra.mxu0 0.0
    %2737 = vmatprep.subr.mxu0 0.0
    %2738 = vmatpush2.msra.mxu0 0.0
    %2739 = vmatprep.subr.mxu0 0.0
    %2740 = vmatpush2.msra.mxu0 0.0
    %2741 = vmatprep.subr.mxu0 0.0
    %2742 = vmatpush2.msra.mxu0 0.0
    %2743 = vmatprep.subr.mxu0 0.0
    %2744 = vmatpush2.msra.mxu0 0.0
    %2745 = vmatprep.subr.mxu0 0.0
    %2746 = vmatpush2.msra.mxu0 0.0
    %2747 = vmatprep.subr.mxu0 0.0
    %2748 = vmatpush2.msra.mxu0 0.0
    %2749 = vmatprep.subr.mxu0 0.0
    %2750 = vmatpush2.msra.mxu0 0.0
    %2751 = vmatprep.subr.mxu0 0.0
    %2752 = vmatpush2.msra.mxu0 0.0
    %2753 = vmatprep.subr.mxu0 0.0
    %2754 = vmatpush2.msra.mxu0 0.0
    %2755 = vmatprep.mubr.f32.mxu0 0.0
    %2756 = vmatmul.mubr.f32.gmra.mxu0 %v2689
    %v2757 = vpop.f32.mrf.mxu0
    %v2758 = vadd.f32 0.0, %v2757
    %v2759 = vpop.f32.mrf.mxu0
    %2760 = vdwg.mxu0
    %2761 = vrot.lane.b32.xlu0 %v2583, 120
    %v2762 = vpop.permute.xlu0 %2761
    %2763 = vrot.lane.b32.xlu0 %v356, 120
    %v2764 = vpop.permute.xlu0 %2763
    %v2765 = vsel %vm517, %v2762, 0
    %v2767 = vsel %vm517, %v2764, 0
    %2769 = vmatprep.subr.mxu0 0.0
    %2770 = vmatpush1.xpose.msra.mxu0 0.0
    %2771 = vmatprep.subr.mxu0 0.0
    %2772 = vmatpush1.xpose.msra.mxu0 0.0
    %2773 = vmatprep.subr.mxu0 0.0
    %2774 = vmatpush1.xpose.msra.mxu0 0.0
    %2775 = vmatprep.subr.mxu0 0.0
    %2776 = vmatpush1.xpose.msra.mxu0 0.0
    %2777 = vmatprep.subr.mxu0 0.0
    %2778 = vmatpush1.xpose.msra.mxu0 0.0
    %2779 = vmatprep.subr.mxu0 0.0
    %2780 = vmatpush1.xpose.msra.mxu0 0.0
    %2781 = vmatprep.subr.mxu0 0.0
    %2782 = vmatpush1.xpose.msra.mxu0 0.0
    %2783 = vmatprep.subr.mxu0 0.0
    %2784 = vmatpush1.xpose.msra.mxu0 0.0
    %2785 = vmatprep.subr.mxu0 0.0
    %2786 = vmatpush1.xpose.msra.mxu0 0.0
    %2787 = vmatprep.subr.mxu0 0.0
    %2788 = vmatpush1.xpose.msra.mxu0 0.0
    %2789 = vmatprep.subr.mxu0 0.0
    %2790 = vmatpush1.xpose.msra.mxu0 0.0
    %2791 = vmatprep.subr.mxu0 0.0
    %2792 = vmatpush1.xpose.msra.mxu0 0.0
    %2793 = vmatprep.subr.mxu0 0.0
    %2794 = vmatpush1.xpose.msra.mxu0 0.0
    %2795 = vmatprep.subr.mxu0 0.0
    %2796 = vmatpush1.xpose.msra.mxu0 0.0
    %2797 = vmatprep.subr.mxu0 0.0
    %2798 = vmatpush1.xpose.msra.mxu0 0.0
    %2799 = vmatprep.subr.mxu0 0.0
    %2800 = vmatpush1.xpose.msra.mxu0 %v2767
    %2801 = vmatprep.subr.mxu0 0.0
    %2802 = vmatpush2.xpose.msra.mxu0 0.0
    %2803 = vmatprep.subr.mxu0 0.0
    %2804 = vmatpush2.xpose.msra.mxu0 0.0
    %2805 = vmatprep.subr.mxu0 0.0
    %2806 = vmatpush2.xpose.msra.mxu0 0.0
    %2807 = vmatprep.subr.mxu0 0.0
    %2808 = vmatpush2.xpose.msra.mxu0 0.0
    %2809 = vmatprep.subr.mxu0 0.0
    %2810 = vmatpush2.xpose.msra.mxu0 0.0
    %2811 = vmatprep.subr.mxu0 0.0
    %2812 = vmatpush2.xpose.msra.mxu0 0.0
    %2813 = vmatprep.subr.mxu0 0.0
    %2814 = vmatpush2.xpose.msra.mxu0 0.0
    %2815 = vmatprep.subr.mxu0 0.0
    %2816 = vmatpush2.xpose.msra.mxu0 0.0
    %2817 = vmatprep.subr.mxu0 0.0
    %2818 = vmatpush2.xpose.msra.mxu0 0.0
    %2819 = vmatprep.subr.mxu0 0.0
    %2820 = vmatpush2.xpose.msra.mxu0 0.0
    %2821 = vmatprep.subr.mxu0 0.0
    %2822 = vmatpush2.xpose.msra.mxu0 0.0
    %2823 = vmatprep.subr.mxu0 0.0
    %2824 = vmatpush2.xpose.msra.mxu0 0.0
    %2825 = vmatprep.subr.mxu0 0.0
    %2826 = vmatpush2.xpose.msra.mxu0 0.0
    %2827 = vmatprep.subr.mxu0 0.0
    %2828 = vmatpush2.xpose.msra.mxu0 0.0
    %2829 = vmatprep.subr.mxu0 0.0
    %2830 = vmatpush2.xpose.msra.mxu0 0.0
    %2831 = vmatprep.subr.mxu0 0.0
    %2832 = vmatpush2.xpose.msra.mxu0 0.0
    %2833 = vmatprep.mubr.f32.mxu0 0.0
    %2834 = vmatmul.mubr.f32.gmra.mxu0 %v2765
    %v2835 = vpop.f32.mrf.mxu0
    %v2836 = vadd.f32 0.0, %v2835
    %v2837 = vpop.f32.mrf.mxu0
    %2838 = vdwg.mxu0
    %v2839 = vmul.f32 %v2836, 0.35355338
    %v2840 = vadd.f32 %v2839, %v269
    %v2841 = vsel %vm517, %v2840, -inf
    %2842 = vmax.xlane.f32.xlu0 %v2841
    %v2843 = vpop.xlane.xlu0 %2842
    %v2844 = vsub.f32 %v2840, %v2843
    %v2845 = vmul.f32 %v2844, 1.442695
    %v2846 = vpow.pop %v2845
    %v2847 = vsel %vm517, %v2846, 0.0
    %2848 = vadd.xlane.f32.xlu0 %v2847
    %v2849 = vpop.xlane.xlu0 %2848
    %v2850 = vrcp.pop %v2849
    %v2851 = vmul.f32 %v2846, %v2850
    %2852 = vrot.lane.b32.xlu0 %v356, 88
    %v2853 = vpop.permute.xlu0 %2852
    %v2856 = vsel %vm517, %v2851, 0
    %2858 = vmatprep.subr.mxu0 0.0
    %2859 = vmatpush1.msra.mxu0 0.0
    %2860 = vmatprep.subr.mxu0 0.0
    %2861 = vmatpush1.msra.mxu0 0.0
    %2862 = vmatprep.subr.mxu0 0.0
    %2863 = vmatpush1.msra.mxu0 0.0
    %2864 = vmatprep.subr.mxu0 0.0
    %2865 = vmatpush1.msra.mxu0 0.0
    %2866 = vmatprep.subr.mxu0 0.0
    %2867 = vmatpush1.msra.mxu0 0.0
    %2868 = vmatprep.subr.mxu0 0.0
    %2869 = vmatpush1.msra.mxu0 0.0
    %2870 = vmatprep.subr.mxu0 0.0
    %2871 = vmatpush1.msra.mxu0 0.0
    %2872 = vmatprep.subr.mxu0 0.0
    %2873 = vmatpush1.msra.mxu0 0.0
    %2874 = vmatprep.subr.mxu0 0.0
    %2875 = vmatpush1.msra.mxu0 0.0
    %2876 = vmatprep.subr.mxu0 0.0
    %2877 = vmatpush1.msra.mxu0 0.0
    %2878 = vmatprep.subr.mxu0 0.0
    %2879 = vmatpush1.msra.mxu0 0.0
    %2880 = vmatprep.subr.mxu0 0.0
    %2881 = vmatpush1.msra.mxu0 0.0
    %2882 = vmatprep.subr.mxu0 0.0
    %2883 = vmatpush1.msra.mxu0 0.0
    %2884 = vmatprep.subr.mxu0 0.0
    %2885 = vmatpush1.msra.mxu0 0.0
    %2886 = vmatprep.subr.mxu0 0.0
    %2887 = vmatpush1.msra.mxu0 0.0
    %2888 = vmatprep.subr.mxu0 0.0
    %2889 = vmatpush1.msra.mxu0 %v2853
    %2890 = vmatprep.subr.mxu0 0.0
    %2891 = vmatpush2.msra.mxu0 0.0
    %2892 = vmatprep.subr.mxu0 0.0
    %2893 = vmatpush2.msra.mxu0 0.0
    %2894 = vmatprep.subr.mxu0 0.0
    %2895 = vmatpush2.msra.mxu0 0.0
    %2896 = vmatprep.subr.mxu0 0.0
    %2897 = vmatpush2.msra.mxu0 0.0
    %2898 = vmatprep.subr.mxu0 0.0
    %2899 = vmatpush2.msra.mxu0 0.0
    %2900 = vmatprep.subr.mxu0 0.0
    %2901 = vmatpush2.msra.mxu0 0.0
    %2902 = vmatprep.subr.mxu0 0.0
    %2903 = vmatpush2.msra.mxu0 0.0
    %2904 = vmatprep.subr.mxu0 0.0
    %2905 = vmatpush2.msra.mxu0 0.0
    %2906 = vmatprep.subr.mxu0 0.0
    %2907 = vmatpush2.msra.mxu0 0.0
    %2908 = vmatprep.subr.mxu0 0.0
    %2909 = vmatpush2.msra.mxu0 0.0
    %2910 = vmatprep.subr.mxu0 0.0
    %2911 = vmatpush2.msra.mxu0 0.0
    %2912 = vmatprep.subr.mxu0 0.0
    %2913 = vmatpush2.msra.mxu0 0.0
    %2914 = vmatprep.subr.mxu0 0.0
    %2915 = vmatpush2.msra.mxu0 0.0
    %2916 = vmatprep.subr.mxu0 0.0
    %2917 = vmatpush2.msra.mxu0 0.0
    %2918 = vmatprep.subr.mxu0 0.0
    %2919 = vmatpush2.msra.mxu0 0.0
    %2920 = vmatprep.subr.mxu0 0.0
    %2921 = vmatpush2.msra.mxu0 0.0
    %2922 = vmatprep.mubr.f32.mxu0 0.0
    %2923 = vmatmul.mubr.f32.gmra.mxu0 %v2856
    %v2924 = vpop.f32.mrf.mxu0
    %v2925 = vadd.f32 0.0, %v2924
    %v2926 = vpop.f32.mrf.mxu0
    %2927 = vdwg.mxu0
    %v2929 = vsel %vm517, %v2925, 0
    %2931 = vmatprep.subr.mxu0 0.0
    %2932 = vmatpush1.msra.mxu0 0.0
    %2933 = vmatprep.subr.mxu0 0.0
    %2934 = vmatpush1.msra.mxu0 0.0
    %2935 = vmatprep.subr.mxu0 0.0
    %2936 = vmatpush1.msra.mxu0 0.0
    %2937 = vmatprep.subr.mxu0 0.0
    %2938 = vmatpush1.msra.mxu0 0.0
    %2939 = vmatprep.subr.mxu0 0.0
    %2940 = vmatpush1.msra.mxu0 0.0
    %2941 = vmatprep.subr.mxu0 0.0
    %2942 = vmatpush1.msra.mxu0 0.0
    %2943 = vmatprep.subr.mxu0 0.0
    %2944 = vmatpush1.msra.mxu0 0.0
    %2945 = vmatprep.subr.mxu0 0.0
    %2946 = vmatpush1.msra.mxu0 0.0
    %2947 = vmatprep.subr.mxu0 0.0
    %2948 = vmatpush1.msra.mxu0 0.0
    %2949 = vmatprep.subr.mxu0 0.0
    %2950 = vmatpush1.msra.mxu0 0.0
    %2951 = vmatprep.subr.mxu0 0.0
    %2952 = vmatpush1.msra.mxu0 0.0
    %2953 = vmatprep.subr.mxu0 0.0
    %2954 = vmatpush1.msra.mxu0 0.0
    %2955 = vmatprep.subr.mxu0 0.0
    %2956 = vmatpush1.msra.mxu0 0.0
    %2957 = vmatprep.subr.mxu0 0.0
    %2958 = vmatpush1.msra.mxu0 0.0
    %2959 = vmatprep.subr.mxu0 0.0
    %2960 = vmatpush1.msra.mxu0 0.0
    %2961 = vmatprep.subr.mxu0 0.0
    %2962 = vmatpush1.msra.mxu0 %v2592
    %2963 = vmatprep.subr.mxu0 0.0
    %2964 = vmatpush2.msra.mxu0 0.0
    %2965 = vmatprep.subr.mxu0 0.0
    %2966 = vmatpush2.msra.mxu0 0.0
    %2967 = vmatprep.subr.mxu0 0.0
    %2968 = vmatpush2.msra.mxu0 0.0
    %2969 = vmatprep.subr.mxu0 0.0
    %2970 = vmatpush2.msra.mxu0 0.0
    %2971 = vmatprep.subr.mxu0 0.0
    %2972 = vmatpush2.msra.mxu0 0.0
    %2973 = vmatprep.subr.mxu0 0.0
    %2974 = vmatpush2.msra.mxu0 0.0
    %2975 = vmatprep.subr.mxu0 0.0
    %2976 = vmatpush2.msra.mxu0 0.0
    %2977 = vmatprep.subr.mxu0 0.0
    %2978 = vmatpush2.msra.mxu0 0.0
    %2979 = vmatprep.subr.mxu0 0.0
    %2980 = vmatpush2.msra.mxu0 0.0
    %2981 = vmatprep.subr.mxu0 0.0
    %2982 = vmatpush2.msra.mxu0 0.0
    %2983 = vmatprep.subr.mxu0 0.0
    %2984 = vmatpush2.msra.mxu0 0.0
    %2985 = vmatprep.subr.mxu0 0.0
    %2986 = vmatpush2.msra.mxu0 0.0
    %2987 = vmatprep.subr.mxu0 0.0
    %2988 = vmatpush2.msra.mxu0 0.0
    %2989 = vmatprep.subr.mxu0 0.0
    %2990 = vmatpush2.msra.mxu0 0.0
    %2991 = vmatprep.subr.mxu0 0.0
    %2992 = vmatpush2.msra.mxu0 0.0
    %2993 = vmatprep.subr.mxu0 0.0
    %2994 = vmatpush2.msra.mxu0 0.0
    %2995 = vmatprep.mubr.f32.mxu0 0.0
    %2996 = vmatmul.mubr.f32.gmra.mxu0 %v2929
    %v2997 = vpop.f32.mrf.mxu0
    %v2998 = vadd.f32 0.0, %v2997
    %v2999 = vpop.f32.mrf.mxu0
    %3000 = vdwg.mxu0
    %v3002 = vsel %vm517, %v2758, 0
    %3004 = vmatprep.subr.mxu0 0.0
    %3005 = vmatpush1.msra.mxu0 0.0
    %3006 = vmatprep.subr.mxu0 0.0
    %3007 = vmatpush1.msra.mxu0 0.0
    %3008 = vmatprep.subr.mxu0 0.0
    %3009 = vmatpush1.msra.mxu0 0.0
    %3010 = vmatprep.subr.mxu0 0.0
    %3011 = vmatpush1.msra.mxu0 0.0
    %3012 = vmatprep.subr.mxu0 0.0
    %3013 = vmatpush1.msra.mxu0 0.0
    %3014 = vmatprep.subr.mxu0 0.0
    %3015 = vmatpush1.msra.mxu0 0.0
    %3016 = vmatprep.subr.mxu0 0.0
    %3017 = vmatpush1.msra.mxu0 0.0
    %3018 = vmatprep.subr.mxu0 0.0
    %3019 = vmatpush1.msra.mxu0 0.0
    %3020 = vmatprep.subr.mxu0 0.0
    %3021 = vmatpush1.msra.mxu0 0.0
    %3022 = vmatprep.subr.mxu0 0.0
    %3023 = vmatpush1.msra.mxu0 0.0
    %3024 = vmatprep.subr.mxu0 0.0
    %3025 = vmatpush1.msra.mxu0 0.0
    %3026 = vmatprep.subr.mxu0 0.0
    %3027 = vmatpush1.msra.mxu0 0.0
    %3028 = vmatprep.subr.mxu0 0.0
    %3029 = vmatpush1.msra.mxu0 0.0
    %3030 = vmatprep.subr.mxu0 0.0
    %3031 = vmatpush1.msra.mxu0 0.0
    %3032 = vmatprep.subr.mxu0 0.0
    %3033 = vmatpush1.msra.mxu0 0.0
    %3034 = vmatprep.subr.mxu0 0.0
    %3035 = vmatpush1.msra.mxu0 %v2591
    %3036 = vmatprep.subr.mxu0 0.0
    %3037 = vmatpush2.msra.mxu0 0.0
    %3038 = vmatprep.subr.mxu0 0.0
    %3039 = vmatpush2.msra.mxu0 0.0
    %3040 = vmatprep.subr.mxu0 0.0
    %3041 = vmatpush2.msra.mxu0 0.0
    %3042 = vmatprep.subr.mxu0 0.0
    %3043 = vmatpush2.msra.mxu0 0.0
    %3044 = vmatprep.subr.mxu0 0.0
    %3045 = vmatpush2.msra.mxu0 0.0
    %3046 = vmatprep.subr.mxu0 0.0
    %3047 = vmatpush2.msra.mxu0 0.0
    %3048 = vmatprep.subr.mxu0 0.0
    %3049 = vmatpush2.msra.mxu0 0.0
    %3050 = vmatprep.subr.mxu0 0.0
    %3051 = vmatpush2.msra.mxu0 0.0
    %3052 = vmatprep.subr.mxu0 0.0
    %3053 = vmatpush2.msra.mxu0 0.0
    %3054 = vmatprep.subr.mxu0 0.0
    %3055 = vmatpush2.msra.mxu0 0.0
    %3056 = vmatprep.subr.mxu0 0.0
    %3057 = vmatpush2.msra.mxu0 0.0
    %3058 = vmatprep.subr.mxu0 0.0
    %3059 = vmatpush2.msra.mxu0 0.0
    %3060 = vmatprep.subr.mxu0 0.0
    %3061 = vmatpush2.msra.mxu0 0.0
    %3062 = vmatprep.subr.mxu0 0.0
    %3063 = vmatpush2.msra.mxu0 0.0
    %3064 = vmatprep.subr.mxu0 0.0
    %3065 = vmatpush2.msra.mxu0 0.0
    %3066 = vmatprep.subr.mxu0 0.0
    %3067 = vmatpush2.msra.mxu0 0.0
    %3068 = vmatprep.mubr.f32.mxu0 0.0
    %3069 = vmatmul.mubr.f32.gmra.mxu0 %v3002
    %v3070 = vpop.f32.mrf.mxu0
    %v3071 = vadd.f32 %v2998, %v3070
    %v3072 = vpop.f32.mrf.mxu0
    %3073 = vdwg.mxu0
    %3074 = vrot.lane.b32.xlu0 %v2583, 112
    %v3075 = vpop.permute.xlu0 %3074
    %3076 = vrot.lane.b32.xlu0 %v356, 112
    %v3077 = vpop.permute.xlu0 %3076
    %v3078 = vsel %vm517, %v3075, 0
    %v3080 = vsel %vm517, %v3077, 0
    %3082 = vmatprep.subr.mxu0 0.0
    %3083 = vmatpush1.xpose.msra.mxu0 0.0
    %3084 = vmatprep.subr.mxu0 0.0
    %3085 = vmatpush1.xpose.msra.mxu0 0.0
    %3086 = vmatprep.subr.mxu0 0.0
    %3087 = vmatpush1.xpose.msra.mxu0 0.0
    %3088 = vmatprep.subr.mxu0 0.0
    %3089 = vmatpush1.xpose.msra.mxu0 0.0
    %3090 = vmatprep.subr.mxu0 0.0
    %3091 = vmatpush1.xpose.msra.mxu0 0.0
    %3092 = vmatprep.subr.mxu0 0.0
    %3093 = vmatpush1.xpose.msra.mxu0 0.0
    %3094 = vmatprep.subr.mxu0 0.0
    %3095 = vmatpush1.xpose.msra.mxu0 0.0
    %3096 = vmatprep.subr.mxu0 0.0
    %3097 = vmatpush1.xpose.msra.mxu0 0.0
    %3098 = vmatprep.subr.mxu0 0.0
    %3099 = vmatpush1.xpose.msra.mxu0 0.0
    %3100 = vmatprep.subr.mxu0 0.0
    %3101 = vmatpush1.xpose.msra.mxu0 0.0
    %3102 = vmatprep.subr.mxu0 0.0
    %3103 = vmatpush1.xpose.msra.mxu0 0.0
    %3104 = vmatprep.subr.mxu0 0.0
    %3105 = vmatpush1.xpose.msra.mxu0 0.0
    %3106 = vmatprep.subr.mxu0 0.0
    %3107 = vmatpush1.xpose.msra.mxu0 0.0
    %3108 = vmatprep.subr.mxu0 0.0
    %3109 = vmatpush1.xpose.msra.mxu0 0.0
    %3110 = vmatprep.subr.mxu0 0.0
    %3111 = vmatpush1.xpose.msra.mxu0 0.0
    %3112 = vmatprep.subr.mxu0 0.0
    %3113 = vmatpush1.xpose.msra.mxu0 %v3080
    %3114 = vmatprep.subr.mxu0 0.0
    %3115 = vmatpush2.xpose.msra.mxu0 0.0
    %3116 = vmatprep.subr.mxu0 0.0
    %3117 = vmatpush2.xpose.msra.mxu0 0.0
    %3118 = vmatprep.subr.mxu0 0.0
    %3119 = vmatpush2.xpose.msra.mxu0 0.0
    %3120 = vmatprep.subr.mxu0 0.0
    %3121 = vmatpush2.xpose.msra.mxu0 0.0
    %3122 = vmatprep.subr.mxu0 0.0
    %3123 = vmatpush2.xpose.msra.mxu0 0.0
    %3124 = vmatprep.subr.mxu0 0.0
    %3125 = vmatpush2.xpose.msra.mxu0 0.0
    %3126 = vmatprep.subr.mxu0 0.0
    %3127 = vmatpush2.xpose.msra.mxu0 0.0
    %3128 = vmatprep.subr.mxu0 0.0
    %3129 = vmatpush2.xpose.msra.mxu0 0.0
    %3130 = vmatprep.subr.mxu0 0.0
    %3131 = vmatpush2.xpose.msra.mxu0 0.0
    %3132 = vmatprep.subr.mxu0 0.0
    %3133 = vmatpush2.xpose.msra.mxu0 0.0
    %3134 = vmatprep.subr.mxu0 0.0
    %3135 = vmatpush2.xpose.msra.mxu0 0.0
    %3136 = vmatprep.subr.mxu0 0.0
    %3137 = vmatpush2.xpose.msra.mxu0 0.0
    %3138 = vmatprep.subr.mxu0 0.0
    %3139 = vmatpush2.xpose.msra.mxu0 0.0
    %3140 = vmatprep.subr.mxu0 0.0
    %3141 = vmatpush2.xpose.msra.mxu0 0.0
    %3142 = vmatprep.subr.mxu0 0.0
    %3143 = vmatpush2.xpose.msra.mxu0 0.0
    %3144 = vmatprep.subr.mxu0 0.0
    %3145 = vmatpush2.xpose.msra.mxu0 0.0
    %3146 = vmatprep.mubr.f32.mxu0 0.0
    %3147 = vmatmul.mubr.f32.gmra.mxu0 %v3078
    %v3148 = vpop.f32.mrf.mxu0
    %v3149 = vadd.f32 0.0, %v3148
    %v3150 = vpop.f32.mrf.mxu0
    %3151 = vdwg.mxu0
    %v3152 = vmul.f32 %v3149, 0.35355338
    %v3153 = vadd.f32 %v3152, %v269
    %v3154 = vsel %vm517, %v3153, -inf
    %3155 = vmax.xlane.f32.xlu0 %v3154
    %v3156 = vpop.xlane.xlu0 %3155
    %v3157 = vsub.f32 %v3153, %v3156
    %v3158 = vmul.f32 %v3157, 1.442695
    %v3159 = vpow.pop %v3158
    %v3160 = vsel %vm517, %v3159, 0.0
    %3161 = vadd.xlane.f32.xlu0 %v3160
    %v3162 = vpop.xlane.xlu0 %3161
    %v3163 = vrcp.pop %v3162
    %v3164 = vmul.f32 %v3159, %v3163
    %3165 = vrot.lane.b32.xlu0 %v356, 80
    %v3166 = vpop.permute.xlu0 %3165
    %v3169 = vsel %vm517, %v3164, 0
    %3171 = vmatprep.subr.mxu0 0.0
    %3172 = vmatpush1.msra.mxu0 0.0
    %3173 = vmatprep.subr.mxu0 0.0
    %3174 = vmatpush1.msra.mxu0 0.0
    %3175 = vmatprep.subr.mxu0 0.0
    %3176 = vmatpush1.msra.mxu0 0.0
    %3177 = vmatprep.subr.mxu0 0.0
    %3178 = vmatpush1.msra.mxu0 0.0
    %3179 = vmatprep.subr.mxu0 0.0
    %3180 = vmatpush1.msra.mxu0 0.0
    %3181 = vmatprep.subr.mxu0 0.0
    %3182 = vmatpush1.msra.mxu0 0.0
    %3183 = vmatprep.subr.mxu0 0.0
    %3184 = vmatpush1.msra.mxu0 0.0
    %3185 = vmatprep.subr.mxu0 0.0
    %3186 = vmatpush1.msra.mxu0 0.0
    %3187 = vmatprep.subr.mxu0 0.0
    %3188 = vmatpush1.msra.mxu0 0.0
    %3189 = vmatprep.subr.mxu0 0.0
    %3190 = vmatpush1.msra.mxu0 0.0
    %3191 = vmatprep.subr.mxu0 0.0
    %3192 = vmatpush1.msra.mxu0 0.0
    %3193 = vmatprep.subr.mxu0 0.0
    %3194 = vmatpush1.msra.mxu0 0.0
    %3195 = vmatprep.subr.mxu0 0.0
    %3196 = vmatpush1.msra.mxu0 0.0
    %3197 = vmatprep.subr.mxu0 0.0
    %3198 = vmatpush1.msra.mxu0 0.0
    %3199 = vmatprep.subr.mxu0 0.0
    %3200 = vmatpush1.msra.mxu0 0.0
    %3201 = vmatprep.subr.mxu0 0.0
    %3202 = vmatpush1.msra.mxu0 %v3166
    %3203 = vmatprep.subr.mxu0 0.0
    %3204 = vmatpush2.msra.mxu0 0.0
    %3205 = vmatprep.subr.mxu0 0.0
    %3206 = vmatpush2.msra.mxu0 0.0
    %3207 = vmatprep.subr.mxu0 0.0
    %3208 = vmatpush2.msra.mxu0 0.0
    %3209 = vmatprep.subr.mxu0 0.0
    %3210 = vmatpush2.msra.mxu0 0.0
    %3211 = vmatprep.subr.mxu0 0.0
    %3212 = vmatpush2.msra.mxu0 0.0
    %3213 = vmatprep.subr.mxu0 0.0
    %3214 = vmatpush2.msra.mxu0 0.0
    %3215 = vmatprep.subr.mxu0 0.0
    %3216 = vmatpush2.msra.mxu0 0.0
    %3217 = vmatprep.subr.mxu0 0.0
    %3218 = vmatpush2.msra.mxu0 0.0
    %3219 = vmatprep.subr.mxu0 0.0
    %3220 = vmatpush2.msra.mxu0 0.0
    %3221 = vmatprep.subr.mxu0 0.0
    %3222 = vmatpush2.msra.mxu0 0.0
    %3223 = vmatprep.subr.mxu0 0.0
    %3224 = vmatpush2.msra.mxu0 0.0
    %3225 = vmatprep.subr.mxu0 0.0
    %3226 = vmatpush2.msra.mxu0 0.0
    %3227 = vmatprep.subr.mxu0 0.0
    %3228 = vmatpush2.msra.mxu0 0.0
    %3229 = vmatprep.subr.mxu0 0.0
    %3230 = vmatpush2.msra.mxu0 0.0
    %3231 = vmatprep.subr.mxu0 0.0
    %3232 = vmatpush2.msra.mxu0 0.0
    %3233 = vmatprep.subr.mxu0 0.0
    %3234 = vmatpush2.msra.mxu0 0.0
    %3235 = vmatprep.mubr.f32.mxu0 0.0
    %3236 = vmatmul.mubr.f32.gmra.mxu0 %v3169
    %v3237 = vpop.f32.mrf.mxu0
    %v3238 = vadd.f32 0.0, %v3237
    %v3239 = vpop.f32.mrf.mxu0
    %3240 = vdwg.mxu0
    %v3242 = vsel %vm517, %v3238, 0
    %3244 = vmatprep.subr.mxu0 0.0
    %3245 = vmatpush1.msra.mxu0 0.0
    %3246 = vmatprep.subr.mxu0 0.0
    %3247 = vmatpush1.msra.mxu0 0.0
    %3248 = vmatprep.subr.mxu0 0.0
    %3249 = vmatpush1.msra.mxu0 0.0
    %3250 = vmatprep.subr.mxu0 0.0
    %3251 = vmatpush1.msra.mxu0 0.0
    %3252 = vmatprep.subr.mxu0 0.0
    %3253 = vmatpush1.msra.mxu0 0.0
    %3254 = vmatprep.subr.mxu0 0.0
    %3255 = vmatpush1.msra.mxu0 0.0
    %3256 = vmatprep.subr.mxu0 0.0
    %3257 = vmatpush1.msra.mxu0 0.0
    %3258 = vmatprep.subr.mxu0 0.0
    %3259 = vmatpush1.msra.mxu0 0.0
    %3260 = vmatprep.subr.mxu0 0.0
    %3261 = vmatpush1.msra.mxu0 0.0
    %3262 = vmatprep.subr.mxu0 0.0
    %3263 = vmatpush1.msra.mxu0 0.0
    %3264 = vmatprep.subr.mxu0 0.0
    %3265 = vmatpush1.msra.mxu0 0.0
    %3266 = vmatprep.subr.mxu0 0.0
    %3267 = vmatpush1.msra.mxu0 0.0
    %3268 = vmatprep.subr.mxu0 0.0
    %3269 = vmatpush1.msra.mxu0 0.0
    %3270 = vmatprep.subr.mxu0 0.0
    %3271 = vmatpush1.msra.mxu0 0.0
    %3272 = vmatprep.subr.mxu0 0.0
    %3273 = vmatpush1.msra.mxu0 0.0
    %3274 = vmatprep.subr.mxu0 0.0
    %3275 = vmatpush1.msra.mxu0 %v2593
    %3276 = vmatprep.subr.mxu0 0.0
    %3277 = vmatpush2.msra.mxu0 0.0
    %3278 = vmatprep.subr.mxu0 0.0
    %3279 = vmatpush2.msra.mxu0 0.0
    %3280 = vmatprep.subr.mxu0 0.0
    %3281 = vmatpush2.msra.mxu0 0.0
    %3282 = vmatprep.subr.mxu0 0.0
    %3283 = vmatpush2.msra.mxu0 0.0
    %3284 = vmatprep.subr.mxu0 0.0
    %3285 = vmatpush2.msra.mxu0 0.0
    %3286 = vmatprep.subr.mxu0 0.0
    %3287 = vmatpush2.msra.mxu0 0.0
    %3288 = vmatprep.subr.mxu0 0.0
    %3289 = vmatpush2.msra.mxu0 0.0
    %3290 = vmatprep.subr.mxu0 0.0
    %3291 = vmatpush2.msra.mxu0 0.0
    %3292 = vmatprep.subr.mxu0 0.0
    %3293 = vmatpush2.msra.mxu0 0.0
    %3294 = vmatprep.subr.mxu0 0.0
    %3295 = vmatpush2.msra.mxu0 0.0
    %3296 = vmatprep.subr.mxu0 0.0
    %3297 = vmatpush2.msra.mxu0 0.0
    %3298 = vmatprep.subr.mxu0 0.0
    %3299 = vmatpush2.msra.mxu0 0.0
    %3300 = vmatprep.subr.mxu0 0.0
    %3301 = vmatpush2.msra.mxu0 0.0
    %3302 = vmatprep.subr.mxu0 0.0
    %3303 = vmatpush2.msra.mxu0 0.0
    %3304 = vmatprep.subr.mxu0 0.0
    %3305 = vmatpush2.msra.mxu0 0.0
    %3306 = vmatprep.subr.mxu0 0.0
    %3307 = vmatpush2.msra.mxu0 0.0
    %3308 = vmatprep.mubr.f32.mxu0 0.0
    %3309 = vmatmul.mubr.f32.gmra.mxu0 %v3242
    %v3310 = vpop.f32.mrf.mxu0
    %v3311 = vadd.f32 0.0, %v3310
    %v3312 = vpop.f32.mrf.mxu0
    %3313 = vdwg.mxu0
    %v3314 = vadd.f32 %v3071, %v3311
    %3315 = vrot.lane.b32.xlu0 %v2583, 104
    %v3316 = vpop.permute.xlu0 %3315
    %3317 = vrot.lane.b32.xlu0 %v356, 104
    %v3318 = vpop.permute.xlu0 %3317
    %v3319 = vsel %vm517, %v3316, 0
    %v3321 = vsel %vm517, %v3318, 0
    %3323 = vmatprep.subr.mxu0 0.0
    %3324 = vmatpush1.xpose.msra.mxu0 0.0
    %3325 = vmatprep.subr.mxu0 0.0
    %3326 = vmatpush1.xpose.msra.mxu0 0.0
    %3327 = vmatprep.subr.mxu0 0.0
    %3328 = vmatpush1.xpose.msra.mxu0 0.0
    %3329 = vmatprep.subr.mxu0 0.0
    %3330 = vmatpush1.xpose.msra.mxu0 0.0
    %3331 = vmatprep.subr.mxu0 0.0
    %3332 = vmatpush1.xpose.msra.mxu0 0.0
    %3333 = vmatprep.subr.mxu0 0.0
    %3334 = vmatpush1.xpose.msra.mxu0 0.0
    %3335 = vmatprep.subr.mxu0 0.0
    %3336 = vmatpush1.xpose.msra.mxu0 0.0
    %3337 = vmatprep.subr.mxu0 0.0
    %3338 = vmatpush1.xpose.msra.mxu0 0.0
    %3339 = vmatprep.subr.mxu0 0.0
    %3340 = vmatpush1.xpose.msra.mxu0 0.0
    %3341 = vmatprep.subr.mxu0 0.0
    %3342 = vmatpush1.xpose.msra.mxu0 0.0
    %3343 = vmatprep.subr.mxu0 0.0
    %3344 = vmatpush1.xpose.msra.mxu0 0.0
    %3345 = vmatprep.subr.mxu0 0.0
    %3346 = vmatpush1.xpose.msra.mxu0 0.0
    %3347 = vmatprep.subr.mxu0 0.0
    %3348 = vmatpush1.xpose.msra.mxu0 0.0
    %3349 = vmatprep.subr.mxu0 0.0
    %3350 = vmatpush1.xpose.msra.mxu0 0.0
    %3351 = vmatprep.subr.mxu0 0.0
    %3352 = vmatpush1.xpose.msra.mxu0 0.0
    %3353 = vmatprep.subr.mxu0 0.0
    %3354 = vmatpush1.xpose.msra.mxu0 %v3321
    %3355 = vmatprep.subr.mxu0 0.0
    %3356 = vmatpush2.xpose.msra.mxu0 0.0
    %3357 = vmatprep.subr.mxu0 0.0
    %3358 = vmatpush2.xpose.msra.mxu0 0.0
    %3359 = vmatprep.subr.mxu0 0.0
    %3360 = vmatpush2.xpose.msra.mxu0 0.0
    %3361 = vmatprep.subr.mxu0 0.0
    %3362 = vmatpush2.xpose.msra.mxu0 0.0
    %3363 = vmatprep.subr.mxu0 0.0
    %3364 = vmatpush2.xpose.msra.mxu0 0.0
    %3365 = vmatprep.subr.mxu0 0.0
    %3366 = vmatpush2.xpose.msra.mxu0 0.0
    %3367 = vmatprep.subr.mxu0 0.0
    %3368 = vmatpush2.xpose.msra.mxu0 0.0
    %3369 = vmatprep.subr.mxu0 0.0
    %3370 = vmatpush2.xpose.msra.mxu0 0.0
    %3371 = vmatprep.subr.mxu0 0.0
    %3372 = vmatpush2.xpose.msra.mxu0 0.0
    %3373 = vmatprep.subr.mxu0 0.0
    %3374 = vmatpush2.xpose.msra.mxu0 0.0
    %3375 = vmatprep.subr.mxu0 0.0
    %3376 = vmatpush2.xpose.msra.mxu0 0.0
    %3377 = vmatprep.subr.mxu0 0.0
    %3378 = vmatpush2.xpose.msra.mxu0 0.0
    %3379 = vmatprep.subr.mxu0 0.0
    %3380 = vmatpush2.xpose.msra.mxu0 0.0
    %3381 = vmatprep.subr.mxu0 0.0
    %3382 = vmatpush2.xpose.msra.mxu0 0.0
    %3383 = vmatprep.subr.mxu0 0.0
    %3384 = vmatpush2.xpose.msra.mxu0 0.0
    %3385 = vmatprep.subr.mxu0 0.0
    %3386 = vmatpush2.xpose.msra.mxu0 0.0
    %3387 = vmatprep.mubr.f32.mxu0 0.0
    %3388 = vmatmul.mubr.f32.gmra.mxu0 %v3319
    %v3389 = vpop.f32.mrf.mxu0
    %v3390 = vadd.f32 0.0, %v3389
    %v3391 = vpop.f32.mrf.mxu0
    %3392 = vdwg.mxu0
    %v3393 = vmul.f32 %v3390, 0.35355338
    %v3394 = vadd.f32 %v3393, %v269
    %v3395 = vsel %vm517, %v3394, -inf
    %3396 = vmax.xlane.f32.xlu0 %v3395
    %v3397 = vpop.xlane.xlu0 %3396
    %v3398 = vsub.f32 %v3394, %v3397
    %v3399 = vmul.f32 %v3398, 1.442695
    %v3400 = vpow.pop %v3399
    %v3401 = vsel %vm517, %v3400, 0.0
    %3402 = vadd.xlane.f32.xlu0 %v3401
    %v3403 = vpop.xlane.xlu0 %3402
    %v3404 = vrcp.pop %v3403
    %v3405 = vmul.f32 %v3400, %v3404
    %3406 = vrot.lane.b32.xlu0 %v356, 72
    %v3407 = vpop.permute.xlu0 %3406
    %v3410 = vsel %vm517, %v3405, 0
    %3412 = vmatprep.subr.mxu0 0.0
    %3413 = vmatpush1.msra.mxu0 0.0
    %3414 = vmatprep.subr.mxu0 0.0
    %3415 = vmatpush1.msra.mxu0 0.0
    %3416 = vmatprep.subr.mxu0 0.0
    %3417 = vmatpush1.msra.mxu0 0.0
    %3418 = vmatprep.subr.mxu0 0.0
    %3419 = vmatpush1.msra.mxu0 0.0
    %3420 = vmatprep.subr.mxu0 0.0
    %3421 = vmatpush1.msra.mxu0 0.0
    %3422 = vmatprep.subr.mxu0 0.0
    %3423 = vmatpush1.msra.mxu0 0.0
    %3424 = vmatprep.subr.mxu0 0.0
    %3425 = vmatpush1.msra.mxu0 0.0
    %3426 = vmatprep.subr.mxu0 0.0
    %3427 = vmatpush1.msra.mxu0 0.0
    %3428 = vmatprep.subr.mxu0 0.0
    %3429 = vmatpush1.msra.mxu0 0.0
    %3430 = vmatprep.subr.mxu0 0.0
    %3431 = vmatpush1.msra.mxu0 0.0
    %3432 = vmatprep.subr.mxu0 0.0
    %3433 = vmatpush1.msra.mxu0 0.0
    %3434 = vmatprep.subr.mxu0 0.0
    %3435 = vmatpush1.msra.mxu0 0.0
    %3436 = vmatprep.subr.mxu0 0.0
    %3437 = vmatpush1.msra.mxu0 0.0
    %3438 = vmatprep.subr.mxu0 0.0
    %3439 = vmatpush1.msra.mxu0 0.0
    %3440 = vmatprep.subr.mxu0 0.0
    %3441 = vmatpush1.msra.mxu0 0.0
    %3442 = vmatprep.subr.mxu0 0.0
    %3443 = vmatpush1.msra.mxu0 %v3407
    %3444 = vmatprep.subr.mxu0 0.0
    %3445 = vmatpush2.msra.mxu0 0.0
    %3446 = vmatprep.subr.mxu0 0.0
    %3447 = vmatpush2.msra.mxu0 0.0
    %3448 = vmatprep.subr.mxu0 0.0
    %3449 = vmatpush2.msra.mxu0 0.0
    %3450 = vmatprep.subr.mxu0 0.0
    %3451 = vmatpush2.msra.mxu0 0.0
    %3452 = vmatprep.subr.mxu0 0.0
    %3453 = vmatpush2.msra.mxu0 0.0
    %3454 = vmatprep.subr.mxu0 0.0
    %3455 = vmatpush2.msra.mxu0 0.0
    %3456 = vmatprep.subr.mxu0 0.0
    %3457 = vmatpush2.msra.mxu0 0.0
    %3458 = vmatprep.subr.mxu0 0.0
    %3459 = vmatpush2.msra.mxu0 0.0
    %3460 = vmatprep.subr.mxu0 0.0
    %3461 = vmatpush2.msra.mxu0 0.0
    %3462 = vmatprep.subr.mxu0 0.0
    %3463 = vmatpush2.msra.mxu0 0.0
    %3464 = vmatprep.subr.mxu0 0.0
    %3465 = vmatpush2.msra.mxu0 0.0
    %3466 = vmatprep.subr.mxu0 0.0
    %3467 = vmatpush2.msra.mxu0 0.0
    %3468 = vmatprep.subr.mxu0 0.0
    %3469 = vmatpush2.msra.mxu0 0.0
    %3470 = vmatprep.subr.mxu0 0.0
    %3471 = vmatpush2.msra.mxu0 0.0
    %3472 = vmatprep.subr.mxu0 0.0
    %3473 = vmatpush2.msra.mxu0 0.0
    %3474 = vmatprep.subr.mxu0 0.0
    %3475 = vmatpush2.msra.mxu0 0.0
    %3476 = vmatprep.mubr.f32.mxu0 0.0
    %3477 = vmatmul.mubr.f32.gmra.mxu0 %v3410
    %v3478 = vpop.f32.mrf.mxu0
    %v3479 = vadd.f32 0.0, %v3478
    %v3480 = vpop.f32.mrf.mxu0
    %3481 = vdwg.mxu0
    %v3483 = vsel %vm517, %v3479, 0
    %3485 = vmatprep.subr.mxu0 0.0
    %3486 = vmatpush1.msra.mxu0 0.0
    %3487 = vmatprep.subr.mxu0 0.0
    %3488 = vmatpush1.msra.mxu0 0.0
    %3489 = vmatprep.subr.mxu0 0.0
    %3490 = vmatpush1.msra.mxu0 0.0
    %3491 = vmatprep.subr.mxu0 0.0
    %3492 = vmatpush1.msra.mxu0 0.0
    %3493 = vmatprep.subr.mxu0 0.0
    %3494 = vmatpush1.msra.mxu0 0.0
    %3495 = vmatprep.subr.mxu0 0.0
    %3496 = vmatpush1.msra.mxu0 0.0
    %3497 = vmatprep.subr.mxu0 0.0
    %3498 = vmatpush1.msra.mxu0 0.0
    %3499 = vmatprep.subr.mxu0 0.0
    %3500 = vmatpush1.msra.mxu0 0.0
    %3501 = vmatprep.subr.mxu0 0.0
    %3502 = vmatpush1.msra.mxu0 0.0
    %3503 = vmatprep.subr.mxu0 0.0
    %3504 = vmatpush1.msra.mxu0 0.0
    %3505 = vmatprep.subr.mxu0 0.0
    %3506 = vmatpush1.msra.mxu0 0.0
    %3507 = vmatprep.subr.mxu0 0.0
    %3508 = vmatpush1.msra.mxu0 0.0
    %3509 = vmatprep.subr.mxu0 0.0
    %3510 = vmatpush1.msra.mxu0 0.0
    %3511 = vmatprep.subr.mxu0 0.0
    %3512 = vmatpush1.msra.mxu0 0.0
    %3513 = vmatprep.subr.mxu0 0.0
    %3514 = vmatpush1.msra.mxu0 0.0
    %3515 = vmatprep.subr.mxu0 0.0
    %3516 = vmatpush1.msra.mxu0 %v2594
    %3517 = vmatprep.subr.mxu0 0.0
    %3518 = vmatpush2.msra.mxu0 0.0
    %3519 = vmatprep.subr.mxu0 0.0
    %3520 = vmatpush2.msra.mxu0 0.0
    %3521 = vmatprep.subr.mxu0 0.0
    %3522 = vmatpush2.msra.mxu0 0.0
    %3523 = vmatprep.subr.mxu0 0.0
    %3524 = vmatpush2.msra.mxu0 0.0
    %3525 = vmatprep.subr.mxu0 0.0
    %3526 = vmatpush2.msra.mxu0 0.0
    %3527 = vmatprep.subr.mxu0 0.0
    %3528 = vmatpush2.msra.mxu0 0.0
    %3529 = vmatprep.subr.mxu0 0.0
    %3530 = vmatpush2.msra.mxu0 0.0
    %3531 = vmatprep.subr.mxu0 0.0
    %3532 = vmatpush2.msra.mxu0 0.0
    %3533 = vmatprep.subr.mxu0 0.0
    %3534 = vmatpush2.msra.mxu0 0.0
    %3535 = vmatprep.subr.mxu0 0.0
    %3536 = vmatpush2.msra.mxu0 0.0
    %3537 = vmatprep.subr.mxu0 0.0
    %3538 = vmatpush2.msra.mxu0 0.0
    %3539 = vmatprep.subr.mxu0 0.0
    %3540 = vmatpush2.msra.mxu0 0.0
    %3541 = vmatprep.subr.mxu0 0.0
    %3542 = vmatpush2.msra.mxu0 0.0
    %3543 = vmatprep.subr.mxu0 0.0
    %3544 = vmatpush2.msra.mxu0 0.0
    %3545 = vmatprep.subr.mxu0 0.0
    %3546 = vmatpush2.msra.mxu0 0.0
    %3547 = vmatprep.subr.mxu0 0.0
    %3548 = vmatpush2.msra.mxu0 0.0
    %3549 = vmatprep.mubr.f32.mxu0 0.0
    %3550 = vmatmul.mubr.f32.gmra.mxu0 %v3483
    %v3551 = vpop.f32.mrf.mxu0
    %v3552 = vadd.f32 0.0, %v3551
    %v3553 = vpop.f32.mrf.mxu0
    %3554 = vdwg.mxu0
    %v3555 = vadd.f32 %v3314, %v3552
    %v3557 = vlaneseq
    %v3558 = vshrl.u32 %v3557, 7
    %v3559 = vsub.s32 0, %v3558
    %v3560 = vrot.slane %v2595, %v3559
    %v3562 = vadd.f32 %v3555, %v3560
    %v3564 = vsel %vm517, %v2588, 0
    %v3567 = vsel %vm517, %v361, 0
    %3569 = vmatprep.subr.mxu0 0.0
    %3570 = vmatpush1.xpose.msra.mxu0 0.0
    %3571 = vmatprep.subr.mxu0 0.0
    %3572 = vmatpush1.xpose.msra.mxu0 0.0
    %3573 = vmatprep.subr.mxu0 0.0
    %3574 = vmatpush1.xpose.msra.mxu0 0.0
    %3575 = vmatprep.subr.mxu0 0.0
    %3576 = vmatpush1.xpose.msra.mxu0 0.0
    %3577 = vmatprep.subr.mxu0 0.0
    %3578 = vmatpush1.xpose.msra.mxu0 0.0
    %3579 = vmatprep.subr.mxu0 0.0
    %3580 = vmatpush1.xpose.msra.mxu0 0.0
    %3581 = vmatprep.subr.mxu0 0.0
    %3582 = vmatpush1.xpose.msra.mxu0 0.0
    %3583 = vmatprep.subr.mxu0 0.0
    %3584 = vmatpush1.xpose.msra.mxu0 0.0
    %3585 = vmatprep.subr.mxu0 0.0
    %3586 = vmatpush1.xpose.msra.mxu0 0.0
    %3587 = vmatprep.subr.mxu0 0.0
    %3588 = vmatpush1.xpose.msra.mxu0 0.0
    %3589 = vmatprep.subr.mxu0 0.0
    %3590 = vmatpush1.xpose.msra.mxu0 0.0
    %3591 = vmatprep.subr.mxu0 0.0
    %3592 = vmatpush1.xpose.msra.mxu0 0.0
    %3593 = vmatprep.subr.mxu0 0.0
    %3594 = vmatpush1.xpose.msra.mxu0 0.0
    %3595 = vmatprep.subr.mxu0 0.0
    %3596 = vmatpush1.xpose.msra.mxu0 0.0
    %3597 = vmatprep.subr.mxu0 0.0
    %3598 = vmatpush1.xpose.msra.mxu0 0.0
    %3599 = vmatprep.subr.mxu0 0.0
    %3600 = vmatpush1.xpose.msra.mxu0 %v3567
    %3601 = vmatprep.subr.mxu0 0.0
    %3602 = vmatpush2.xpose.msra.mxu0 0.0
    %3603 = vmatprep.subr.mxu0 0.0
    %3604 = vmatpush2.xpose.msra.mxu0 0.0
    %3605 = vmatprep.subr.mxu0 0.0
    %3606 = vmatpush2.xpose.msra.mxu0 0.0
    %3607 = vmatprep.subr.mxu0 0.0
    %3608 = vmatpush2.xpose.msra.mxu0 0.0
    %3609 = vmatprep.subr.mxu0 0.0
    %3610 = vmatpush2.xpose.msra.mxu0 0.0
    %3611 = vmatprep.subr.mxu0 0.0
    %3612 = vmatpush2.xpose.msra.mxu0 0.0
    %3613 = vmatprep.subr.mxu0 0.0
    %3614 = vmatpush2.xpose.msra.mxu0 0.0
    %3615 = vmatprep.subr.mxu0 0.0
    %3616 = vmatpush2.xpose.msra.mxu0 0.0
    %3617 = vmatprep.subr.mxu0 0.0
    %3618 = vmatpush2.xpose.msra.mxu0 0.0
    %3619 = vmatprep.subr.mxu0 0.0
    %3620 = vmatpush2.xpose.msra.mxu0 0.0
    %3621 = vmatprep.subr.mxu0 0.0
    %3622 = vmatpush2.xpose.msra.mxu0 0.0
    %3623 = vmatprep.subr.mxu0 0.0
    %3624 = vmatpush2.xpose.msra.mxu0 0.0
    %3625 = vmatprep.subr.mxu0 0.0
    %3626 = vmatpush2.xpose.msra.mxu0 0.0
    %3627 = vmatprep.subr.mxu0 0.0
    %3628 = vmatpush2.xpose.msra.mxu0 0.0
    %3629 = vmatprep.subr.mxu0 0.0
    %3630 = vmatpush2.xpose.msra.mxu0 0.0
    %3631 = vmatprep.subr.mxu0 0.0
    %3632 = vmatpush2.xpose.msra.mxu0 0.0
    %3633 = vmatprep.mubr.f32.mxu0 0.0
    %3634 = vmatmul.mubr.f32.gmra.mxu0 %v3564
    %v3635 = vpop.f32.mrf.mxu0
    %v3636 = vadd.f32 0.0, %v3635
    %v3637 = vpop.f32.mrf.mxu0
    %3638 = vdwg.mxu0
    %v3639 = vmul.f32 %v3636, 0.35355338
    %v3640 = vadd.f32 %v3639, %v270
    %v3641 = vsel %vm517, %v3640, -inf
    %3642 = vmax.xlane.f32.xlu0 %v3641
    %v3643 = vpop.xlane.xlu0 %3642
    %v3644 = vsub.f32 %v3640, %v3643
    %v3645 = vmul.f32 %v3644, 1.442695
    %v3646 = vpow.pop %v3645
    %v3647 = vsel %vm517, %v3646, 0.0
    %3648 = vadd.xlane.f32.xlu0 %v3647
    %v3649 = vpop.xlane.xlu0 %3648
    %v3650 = vrcp.pop %v3649
    %v3651 = vmul.f32 %v3646, %v3650
    %3652 = vrot.lane.b32.xlu0 %v361, 96
    %v3653 = vpop.permute.xlu0 %3652
    %v3656 = vsel %vm517, %v3651, 0
    %3658 = vmatprep.subr.mxu0 0.0
    %3659 = vmatpush1.msra.mxu0 0.0
    %3660 = vmatprep.subr.mxu0 0.0
    %3661 = vmatpush1.msra.mxu0 0.0
    %3662 = vmatprep.subr.mxu0 0.0
    %3663 = vmatpush1.msra.mxu0 0.0
    %3664 = vmatprep.subr.mxu0 0.0
    %3665 = vmatpush1.msra.mxu0 0.0
    %3666 = vmatprep.subr.mxu0 0.0
    %3667 = vmatpush1.msra.mxu0 0.0
    %3668 = vmatprep.subr.mxu0 0.0
    %3669 = vmatpush1.msra.mxu0 0.0
    %3670 = vmatprep.subr.mxu0 0.0
    %3671 = vmatpush1.msra.mxu0 0.0
    %3672 = vmatprep.subr.mxu0 0.0
    %3673 = vmatpush1.msra.mxu0 0.0
    %3674 = vmatprep.subr.mxu0 0.0
    %3675 = vmatpush1.msra.mxu0 0.0
    %3676 = vmatprep.subr.mxu0 0.0
    %3677 = vmatpush1.msra.mxu0 0.0
    %3678 = vmatprep.subr.mxu0 0.0
    %3679 = vmatpush1.msra.mxu0 0.0
    %3680 = vmatprep.subr.mxu0 0.0
    %3681 = vmatpush1.msra.mxu0 0.0
    %3682 = vmatprep.subr.mxu0 0.0
    %3683 = vmatpush1.msra.mxu0 0.0
    %3684 = vmatprep.subr.mxu0 0.0
    %3685 = vmatpush1.msra.mxu0 0.0
    %3686 = vmatprep.subr.mxu0 0.0
    %3687 = vmatpush1.msra.mxu0 0.0
    %3688 = vmatprep.subr.mxu0 0.0
    %3689 = vmatpush1.msra.mxu0 %v3653
    %3690 = vmatprep.subr.mxu0 0.0
    %3691 = vmatpush2.msra.mxu0 0.0
    %3692 = vmatprep.subr.mxu0 0.0
    %3693 = vmatpush2.msra.mxu0 0.0
    %3694 = vmatprep.subr.mxu0 0.0
    %3695 = vmatpush2.msra.mxu0 0.0
    %3696 = vmatprep.subr.mxu0 0.0
    %3697 = vmatpush2.msra.mxu0 0.0
    %3698 = vmatprep.subr.mxu0 0.0
    %3699 = vmatpush2.msra.mxu0 0.0
    %3700 = vmatprep.subr.mxu0 0.0
    %3701 = vmatpush2.msra.mxu0 0.0
    %3702 = vmatprep.subr.mxu0 0.0
    %3703 = vmatpush2.msra.mxu0 0.0
    %3704 = vmatprep.subr.mxu0 0.0
    %3705 = vmatpush2.msra.mxu0 0.0
    %3706 = vmatprep.subr.mxu0 0.0
    %3707 = vmatpush2.msra.mxu0 0.0
    %3708 = vmatprep.subr.mxu0 0.0
    %3709 = vmatpush2.msra.mxu0 0.0
    %3710 = vmatprep.subr.mxu0 0.0
    %3711 = vmatpush2.msra.mxu0 0.0
    %3712 = vmatprep.subr.mxu0 0.0
    %3713 = vmatpush2.msra.mxu0 0.0
    %3714 = vmatprep.subr.mxu0 0.0
    %3715 = vmatpush2.msra.mxu0 0.0
    %3716 = vmatprep.subr.mxu0 0.0
    %3717 = vmatpush2.msra.mxu0 0.0
    %3718 = vmatprep.subr.mxu0 0.0
    %3719 = vmatpush2.msra.mxu0 0.0
    %3720 = vmatprep.subr.mxu0 0.0
    %3721 = vmatpush2.msra.mxu0 0.0
    %3722 = vmatprep.mubr.f32.mxu0 0.0
    %3723 = vmatmul.mubr.f32.gmra.mxu0 %v3656
    %v3724 = vpop.f32.mrf.mxu0
    %v3725 = vadd.f32 0.0, %v3724
    %v3726 = vpop.f32.mrf.mxu0
    %3727 = vdwg.mxu0
    %3728 = vrot.lane.b32.xlu0 %v2588, 120
    %v3729 = vpop.permute.xlu0 %3728
    %3730 = vrot.lane.b32.xlu0 %v361, 120
    %v3731 = vpop.permute.xlu0 %3730
    %v3732 = vsel %vm517, %v3729, 0
    %v3734 = vsel %vm517, %v3731, 0
    %3736 = vmatprep.subr.mxu0 0.0
    %3737 = vmatpush1.xpose.msra.mxu0 0.0
    %3738 = vmatprep.subr.mxu0 0.0
    %3739 = vmatpush1.xpose.msra.mxu0 0.0
    %3740 = vmatprep.subr.mxu0 0.0
    %3741 = vmatpush1.xpose.msra.mxu0 0.0
    %3742 = vmatprep.subr.mxu0 0.0
    %3743 = vmatpush1.xpose.msra.mxu0 0.0
    %3744 = vmatprep.subr.mxu0 0.0
    %3745 = vmatpush1.xpose.msra.mxu0 0.0
    %3746 = vmatprep.subr.mxu0 0.0
    %3747 = vmatpush1.xpose.msra.mxu0 0.0
    %3748 = vmatprep.subr.mxu0 0.0
    %3749 = vmatpush1.xpose.msra.mxu0 0.0
    %3750 = vmatprep.subr.mxu0 0.0
    %3751 = vmatpush1.xpose.msra.mxu0 0.0
    %3752 = vmatprep.subr.mxu0 0.0
    %3753 = vmatpush1.xpose.msra.mxu0 0.0
    %3754 = vmatprep.subr.mxu0 0.0
    %3755 = vmatpush1.xpose.msra.mxu0 0.0
    %3756 = vmatprep.subr.mxu0 0.0
    %3757 = vmatpush1.xpose.msra.mxu0 0.0
    %3758 = vmatprep.subr.mxu0 0.0
    %3759 = vmatpush1.xpose.msra.mxu0 0.0
    %3760 = vmatprep.subr.mxu0 0.0
    %3761 = vmatpush1.xpose.msra.mxu0 0.0
    %3762 = vmatprep.subr.mxu0 0.0
    %3763 = vmatpush1.xpose.msra.mxu0 0.0
    %3764 = vmatprep.subr.mxu0 0.0
    %3765 = vmatpush1.xpose.msra.mxu0 0.0
    %3766 = vmatprep.subr.mxu0 0.0
    %3767 = vmatpush1.xpose.msra.mxu0 %v3734
    %3768 = vmatprep.subr.mxu0 0.0
    %3769 = vmatpush2.xpose.msra.mxu0 0.0
    %3770 = vmatprep.subr.mxu0 0.0
    %3771 = vmatpush2.xpose.msra.mxu0 0.0
    %3772 = vmatprep.subr.mxu0 0.0
    %3773 = vmatpush2.xpose.msra.mxu0 0.0
    %3774 = vmatprep.subr.mxu0 0.0
    %3775 = vmatpush2.xpose.msra.mxu0 0.0
    %3776 = vmatprep.subr.mxu0 0.0
    %3777 = vmatpush2.xpose.msra.mxu0 0.0
    %3778 = vmatprep.subr.mxu0 0.0
    %3779 = vmatpush2.xpose.msra.mxu0 0.0
    %3780 = vmatprep.subr.mxu0 0.0
    %3781 = vmatpush2.xpose.msra.mxu0 0.0
    %3782 = vmatprep.subr.mxu0 0.0
    %3783 = vmatpush2.xpose.msra.mxu0 0.0
    %3784 = vmatprep.subr.mxu0 0.0
    %3785 = vmatpush2.xpose.msra.mxu0 0.0
    %3786 = vmatprep.subr.mxu0 0.0
    %3787 = vmatpush2.xpose.msra.mxu0 0.0
    %3788 = vmatprep.subr.mxu0 0.0
    %3789 = vmatpush2.xpose.msra.mxu0 0.0
    %3790 = vmatprep.subr.mxu0 0.0
    %3791 = vmatpush2.xpose.msra.mxu0 0.0
    %3792 = vmatprep.subr.mxu0 0.0
    %3793 = vmatpush2.xpose.msra.mxu0 0.0
    %3794 = vmatprep.subr.mxu0 0.0
    %3795 = vmatpush2.xpose.msra.mxu0 0.0
    %3796 = vmatprep.subr.mxu0 0.0
    %3797 = vmatpush2.xpose.msra.mxu0 0.0
    %3798 = vmatprep.subr.mxu0 0.0
    %3799 = vmatpush2.xpose.msra.mxu0 0.0
    %3800 = vmatprep.mubr.f32.mxu0 0.0
    %3801 = vmatmul.mubr.f32.gmra.mxu0 %v3732
    %v3802 = vpop.f32.mrf.mxu0
    %v3803 = vadd.f32 0.0, %v3802
    %v3804 = vpop.f32.mrf.mxu0
    %3805 = vdwg.mxu0
    %v3806 = vmul.f32 %v3803, 0.35355338
    %v3807 = vadd.f32 %v3806, %v270
    %v3808 = vsel %vm517, %v3807, -inf
    %3809 = vmax.xlane.f32.xlu0 %v3808
    %v3810 = vpop.xlane.xlu0 %3809
    %v3811 = vsub.f32 %v3807, %v3810
    %v3812 = vmul.f32 %v3811, 1.442695
    %v3813 = vpow.pop %v3812
    %v3814 = vsel %vm517, %v3813, 0.0
    %3815 = vadd.xlane.f32.xlu0 %v3814
    %v3816 = vpop.xlane.xlu0 %3815
    %v3817 = vrcp.pop %v3816
    %v3818 = vmul.f32 %v3813, %v3817
    %3819 = vrot.lane.b32.xlu0 %v361, 88
    %v3820 = vpop.permute.xlu0 %3819
    %v3823 = vsel %vm517, %v3818, 0
    %3825 = vmatprep.subr.mxu0 0.0
    %3826 = vmatpush1.msra.mxu0 0.0
    %3827 = vmatprep.subr.mxu0 0.0
    %3828 = vmatpush1.msra.mxu0 0.0
    %3829 = vmatprep.subr.mxu0 0.0
    %3830 = vmatpush1.msra.mxu0 0.0
    %3831 = vmatprep.subr.mxu0 0.0
    %3832 = vmatpush1.msra.mxu0 0.0
    %3833 = vmatprep.subr.mxu0 0.0
    %3834 = vmatpush1.msra.mxu0 0.0
    %3835 = vmatprep.subr.mxu0 0.0
    %3836 = vmatpush1.msra.mxu0 0.0
    %3837 = vmatprep.subr.mxu0 0.0
    %3838 = vmatpush1.msra.mxu0 0.0
    %3839 = vmatprep.subr.mxu0 0.0
    %3840 = vmatpush1.msra.mxu0 0.0
    %3841 = vmatprep.subr.mxu0 0.0
    %3842 = vmatpush1.msra.mxu0 0.0
    %3843 = vmatprep.subr.mxu0 0.0
    %3844 = vmatpush1.msra.mxu0 0.0
    %3845 = vmatprep.subr.mxu0 0.0
    %3846 = vmatpush1.msra.mxu0 0.0
    %3847 = vmatprep.subr.mxu0 0.0
    %3848 = vmatpush1.msra.mxu0 0.0
    %3849 = vmatprep.subr.mxu0 0.0
    %3850 = vmatpush1.msra.mxu0 0.0
    %3851 = vmatprep.subr.mxu0 0.0
    %3852 = vmatpush1.msra.mxu0 0.0
    %3853 = vmatprep.subr.mxu0 0.0
    %3854 = vmatpush1.msra.mxu0 0.0
    %3855 = vmatprep.subr.mxu0 0.0
    %3856 = vmatpush1.msra.mxu0 %v3820
    %3857 = vmatprep.subr.mxu0 0.0
    %3858 = vmatpush2.msra.mxu0 0.0
    %3859 = vmatprep.subr.mxu0 0.0
    %3860 = vmatpush2.msra.mxu0 0.0
    %3861 = vmatprep.subr.mxu0 0.0
    %3862 = vmatpush2.msra.mxu0 0.0
    %3863 = vmatprep.subr.mxu0 0.0
    %3864 = vmatpush2.msra.mxu0 0.0
    %3865 = vmatprep.subr.mxu0 0.0
    %3866 = vmatpush2.msra.mxu0 0.0
    %3867 = vmatprep.subr.mxu0 0.0
    %3868 = vmatpush2.msra.mxu0 0.0
    %3869 = vmatprep.subr.mxu0 0.0
    %3870 = vmatpush2.msra.mxu0 0.0
    %3871 = vmatprep.subr.mxu0 0.0
    %3872 = vmatpush2.msra.mxu0 0.0
    %3873 = vmatprep.subr.mxu0 0.0
    %3874 = vmatpush2.msra.mxu0 0.0
    %3875 = vmatprep.subr.mxu0 0.0
    %3876 = vmatpush2.msra.mxu0 0.0
    %3877 = vmatprep.subr.mxu0 0.0
    %3878 = vmatpush2.msra.mxu0 0.0
    %3879 = vmatprep.subr.mxu0 0.0
    %3880 = vmatpush2.msra.mxu0 0.0
    %3881 = vmatprep.subr.mxu0 0.0
    %3882 = vmatpush2.msra.mxu0 0.0
    %3883 = vmatprep.subr.mxu0 0.0
    %3884 = vmatpush2.msra.mxu0 0.0
    %3885 = vmatprep.subr.mxu0 0.0
    %3886 = vmatpush2.msra.mxu0 0.0
    %3887 = vmatprep.subr.mxu0 0.0
    %3888 = vmatpush2.msra.mxu0 0.0
    %3889 = vmatprep.mubr.f32.mxu0 0.0
    %3890 = vmatmul.mubr.f32.gmra.mxu0 %v3823
    %v3891 = vpop.f32.mrf.mxu0
    %v3892 = vadd.f32 0.0, %v3891
    %v3893 = vpop.f32.mrf.mxu0
    %3894 = vdwg.mxu0
    %v3896 = vsel %vm517, %v3892, 0
    %3898 = vmatprep.subr.mxu0 0.0
    %3899 = vmatpush1.msra.mxu0 0.0
    %3900 = vmatprep.subr.mxu0 0.0
    %3901 = vmatpush1.msra.mxu0 0.0
    %3902 = vmatprep.subr.mxu0 0.0
    %3903 = vmatpush1.msra.mxu0 0.0
    %3904 = vmatprep.subr.mxu0 0.0
    %3905 = vmatpush1.msra.mxu0 0.0
    %3906 = vmatprep.subr.mxu0 0.0
    %3907 = vmatpush1.msra.mxu0 0.0
    %3908 = vmatprep.subr.mxu0 0.0
    %3909 = vmatpush1.msra.mxu0 0.0
    %3910 = vmatprep.subr.mxu0 0.0
    %3911 = vmatpush1.msra.mxu0 0.0
    %3912 = vmatprep.subr.mxu0 0.0
    %3913 = vmatpush1.msra.mxu0 0.0
    %3914 = vmatprep.subr.mxu0 0.0
    %3915 = vmatpush1.msra.mxu0 0.0
    %3916 = vmatprep.subr.mxu0 0.0
    %3917 = vmatpush1.msra.mxu0 0.0
    %3918 = vmatprep.subr.mxu0 0.0
    %3919 = vmatpush1.msra.mxu0 0.0
    %3920 = vmatprep.subr.mxu0 0.0
    %3921 = vmatpush1.msra.mxu0 0.0
    %3922 = vmatprep.subr.mxu0 0.0
    %3923 = vmatpush1.msra.mxu0 0.0
    %3924 = vmatprep.subr.mxu0 0.0
    %3925 = vmatpush1.msra.mxu0 0.0
    %3926 = vmatprep.subr.mxu0 0.0
    %3927 = vmatpush1.msra.mxu0 0.0
    %3928 = vmatprep.subr.mxu0 0.0
    %3929 = vmatpush1.msra.mxu0 %v2592
    %3930 = vmatprep.subr.mxu0 0.0
    %3931 = vmatpush2.msra.mxu0 0.0
    %3932 = vmatprep.subr.mxu0 0.0
    %3933 = vmatpush2.msra.mxu0 0.0
    %3934 = vmatprep.subr.mxu0 0.0
    %3935 = vmatpush2.msra.mxu0 0.0
    %3936 = vmatprep.subr.mxu0 0.0
    %3937 = vmatpush2.msra.mxu0 0.0
    %3938 = vmatprep.subr.mxu0 0.0
    %3939 = vmatpush2.msra.mxu0 0.0
    %3940 = vmatprep.subr.mxu0 0.0
    %3941 = vmatpush2.msra.mxu0 0.0
    %3942 = vmatprep.subr.mxu0 0.0
    %3943 = vmatpush2.msra.mxu0 0.0
    %3944 = vmatprep.subr.mxu0 0.0
    %3945 = vmatpush2.msra.mxu0 0.0
    %3946 = vmatprep.subr.mxu0 0.0
    %3947 = vmatpush2.msra.mxu0 0.0
    %3948 = vmatprep.subr.mxu0 0.0
    %3949 = vmatpush2.msra.mxu0 0.0
    %3950 = vmatprep.subr.mxu0 0.0
    %3951 = vmatpush2.msra.mxu0 0.0
    %3952 = vmatprep.subr.mxu0 0.0
    %3953 = vmatpush2.msra.mxu0 0.0
    %3954 = vmatprep.subr.mxu0 0.0
    %3955 = vmatpush2.msra.mxu0 0.0
    %3956 = vmatprep.subr.mxu0 0.0
    %3957 = vmatpush2.msra.mxu0 0.0
    %3958 = vmatprep.subr.mxu0 0.0
    %3959 = vmatpush2.msra.mxu0 0.0
    %3960 = vmatprep.subr.mxu0 0.0
    %3961 = vmatpush2.msra.mxu0 0.0
    %3962 = vmatprep.mubr.f32.mxu0 0.0
    %3963 = vmatmul.mubr.f32.gmra.mxu0 %v3896
    %v3964 = vpop.f32.mrf.mxu0
    %v3965 = vadd.f32 0.0, %v3964
    %v3966 = vpop.f32.mrf.mxu0
    %3967 = vdwg.mxu0
    %v3969 = vsel %vm517, %v3725, 0
    %3971 = vmatprep.subr.mxu0 0.0
    %3972 = vmatpush1.msra.mxu0 0.0
    %3973 = vmatprep.subr.mxu0 0.0
    %3974 = vmatpush1.msra.mxu0 0.0
    %3975 = vmatprep.subr.mxu0 0.0
    %3976 = vmatpush1.msra.mxu0 0.0
    %3977 = vmatprep.subr.mxu0 0.0
    %3978 = vmatpush1.msra.mxu0 0.0
    %3979 = vmatprep.subr.mxu0 0.0
    %3980 = vmatpush1.msra.mxu0 0.0
    %3981 = vmatprep.subr.mxu0 0.0
    %3982 = vmatpush1.msra.mxu0 0.0
    %3983 = vmatprep.subr.mxu0 0.0
    %3984 = vmatpush1.msra.mxu0 0.0
    %3985 = vmatprep.subr.mxu0 0.0
    %3986 = vmatpush1.msra.mxu0 0.0
    %3987 = vmatprep.subr.mxu0 0.0
    %3988 = vmatpush1.msra.mxu0 0.0
    %3989 = vmatprep.subr.mxu0 0.0
    %3990 = vmatpush1.msra.mxu0 0.0
    %3991 = vmatprep.subr.mxu0 0.0
    %3992 = vmatpush1.msra.mxu0 0.0
    %3993 = vmatprep.subr.mxu0 0.0
    %3994 = vmatpush1.msra.mxu0 0.0
    %3995 = vmatprep.subr.mxu0 0.0
    %3996 = vmatpush1.msra.mxu0 0.0
    %3997 = vmatprep.subr.mxu0 0.0
    %3998 = vmatpush1.msra.mxu0 0.0
    %3999 = vmatprep.subr.mxu0 0.0
    %4000 = vmatpush1.msra.mxu0 0.0
    %4001 = vmatprep.subr.mxu0 0.0
    %4002 = vmatpush1.msra.mxu0 %v2591
    %4003 = vmatprep.subr.mxu0 0.0
    %4004 = vmatpush2.msra.mxu0 0.0
    %4005 = vmatprep.subr.mxu0 0.0
    %4006 = vmatpush2.msra.mxu0 0.0
    %4007 = vmatprep.subr.mxu0 0.0
    %4008 = vmatpush2.msra.mxu0 0.0
    %4009 = vmatprep.subr.mxu0 0.0
    %4010 = vmatpush2.msra.mxu0 0.0
    %4011 = vmatprep.subr.mxu0 0.0
    %4012 = vmatpush2.msra.mxu0 0.0
    %4013 = vmatprep.subr.mxu0 0.0
    %4014 = vmatpush2.msra.mxu0 0.0
    %4015 = vmatprep.subr.mxu0 0.0
    %4016 = vmatpush2.msra.mxu0 0.0
    %4017 = vmatprep.subr.mxu0 0.0
    %4018 = vmatpush2.msra.mxu0 0.0
    %4019 = vmatprep.subr.mxu0 0.0
    %4020 = vmatpush2.msra.mxu0 0.0
    %4021 = vmatprep.subr.mxu0 0.0
    %4022 = vmatpush2.msra.mxu0 0.0
    %4023 = vmatprep.subr.mxu0 0.0
    %4024 = vmatpush2.msra.mxu0 0.0
    %4025 = vmatprep.subr.mxu0 0.0
    %4026 = vmatpush2.msra.mxu0 0.0
    %4027 = vmatprep.subr.mxu0 0.0
    %4028 = vmatpush2.msra.mxu0 0.0
    %4029 = vmatprep.subr.mxu0 0.0
    %4030 = vmatpush2.msra.mxu0 0.0
    %4031 = vmatprep.subr.mxu0 0.0
    %4032 = vmatpush2.msra.mxu0 0.0
    %4033 = vmatprep.subr.mxu0 0.0
    %4034 = vmatpush2.msra.mxu0 0.0
    %4035 = vmatprep.mubr.f32.mxu0 0.0
    %4036 = vmatmul.mubr.f32.gmra.mxu0 %v3969
    %v4037 = vpop.f32.mrf.mxu0
    %v4038 = vadd.f32 %v3965, %v4037
    %v4039 = vpop.f32.mrf.mxu0
    %4040 = vdwg.mxu0
    %4041 = vrot.lane.b32.xlu0 %v2588, 112
    %v4042 = vpop.permute.xlu0 %4041
    %4043 = vrot.lane.b32.xlu0 %v361, 112
    %v4044 = vpop.permute.xlu0 %4043
    %v4045 = vsel %vm517, %v4042, 0
    %v4047 = vsel %vm517, %v4044, 0
    %4049 = vmatprep.subr.mxu0 0.0
    %4050 = vmatpush1.xpose.msra.mxu0 0.0
    %4051 = vmatprep.subr.mxu0 0.0
    %4052 = vmatpush1.xpose.msra.mxu0 0.0
    %4053 = vmatprep.subr.mxu0 0.0
    %4054 = vmatpush1.xpose.msra.mxu0 0.0
    %4055 = vmatprep.subr.mxu0 0.0
    %4056 = vmatpush1.xpose.msra.mxu0 0.0
    %4057 = vmatprep.subr.mxu0 0.0
    %4058 = vmatpush1.xpose.msra.mxu0 0.0
    %4059 = vmatprep.subr.mxu0 0.0
    %4060 = vmatpush1.xpose.msra.mxu0 0.0
    %4061 = vmatprep.subr.mxu0 0.0
    %4062 = vmatpush1.xpose.msra.mxu0 0.0
    %4063 = vmatprep.subr.mxu0 0.0
    %4064 = vmatpush1.xpose.msra.mxu0 0.0
    %4065 = vmatprep.subr.mxu0 0.0
    %4066 = vmatpush1.xpose.msra.mxu0 0.0
    %4067 = vmatprep.subr.mxu0 0.0
    %4068 = vmatpush1.xpose.msra.mxu0 0.0
    %4069 = vmatprep.subr.mxu0 0.0
    %4070 = vmatpush1.xpose.msra.mxu0 0.0
    %4071 = vmatprep.subr.mxu0 0.0
    %4072 = vmatpush1.xpose.msra.mxu0 0.0
    %4073 = vmatprep.subr.mxu0 0.0
    %4074 = vmatpush1.xpose.msra.mxu0 0.0
    %4075 = vmatprep.subr.mxu0 0.0
    %4076 = vmatpush1.xpose.msra.mxu0 0.0
    %4077 = vmatprep.subr.mxu0 0.0
    %4078 = vmatpush1.xpose.msra.mxu0 0.0
    %4079 = vmatprep.subr.mxu0 0.0
    %4080 = vmatpush1.xpose.msra.mxu0 %v4047
    %4081 = vmatprep.subr.mxu0 0.0
    %4082 = vmatpush2.xpose.msra.mxu0 0.0
    %4083 = vmatprep.subr.mxu0 0.0
    %4084 = vmatpush2.xpose.msra.mxu0 0.0
    %4085 = vmatprep.subr.mxu0 0.0
    %4086 = vmatpush2.xpose.msra.mxu0 0.0
    %4087 = vmatprep.subr.mxu0 0.0
    %4088 = vmatpush2.xpose.msra.mxu0 0.0
    %4089 = vmatprep.subr.mxu0 0.0
    %4090 = vmatpush2.xpose.msra.mxu0 0.0
    %4091 = vmatprep.subr.mxu0 0.0
    %4092 = vmatpush2.xpose.msra.mxu0 0.0
    %4093 = vmatprep.subr.mxu0 0.0
    %4094 = vmatpush2.xpose.msra.mxu0 0.0
    %4095 = vmatprep.subr.mxu0 0.0
    %4096 = vmatpush2.xpose.msra.mxu0 0.0
    %4097 = vmatprep.subr.mxu0 0.0
    %4098 = vmatpush2.xpose.msra.mxu0 0.0
    %4099 = vmatprep.subr.mxu0 0.0
    %4100 = vmatpush2.xpose.msra.mxu0 0.0
    %4101 = vmatprep.subr.mxu0 0.0
    %4102 = vmatpush2.xpose.msra.mxu0 0.0
    %4103 = vmatprep.subr.mxu0 0.0
    %4104 = vmatpush2.xpose.msra.mxu0 0.0
    %4105 = vmatprep.subr.mxu0 0.0
    %4106 = vmatpush2.xpose.msra.mxu0 0.0
    %4107 = vmatprep.subr.mxu0 0.0
    %4108 = vmatpush2.xpose.msra.mxu0 0.0
    %4109 = vmatprep.subr.mxu0 0.0
    %4110 = vmatpush2.xpose.msra.mxu0 0.0
    %4111 = vmatprep.subr.mxu0 0.0
    %4112 = vmatpush2.xpose.msra.mxu0 0.0
    %4113 = vmatprep.mubr.f32.mxu0 0.0
    %4114 = vmatmul.mubr.f32.gmra.mxu0 %v4045
    %v4115 = vpop.f32.mrf.mxu0
    %v4116 = vadd.f32 0.0, %v4115
    %v4117 = vpop.f32.mrf.mxu0
    %4118 = vdwg.mxu0
    %v4119 = vmul.f32 %v4116, 0.35355338
    %v4120 = vadd.f32 %v4119, %v270
    %v4121 = vsel %vm517, %v4120, -inf
    %4122 = vmax.xlane.f32.xlu0 %v4121
    %v4123 = vpop.xlane.xlu0 %4122
    %v4124 = vsub.f32 %v4120, %v4123
    %v4125 = vmul.f32 %v4124, 1.442695
    %v4126 = vpow.pop %v4125
    %v4127 = vsel %vm517, %v4126, 0.0
    %4128 = vadd.xlane.f32.xlu0 %v4127
    %v4129 = vpop.xlane.xlu0 %4128
    %v4130 = vrcp.pop %v4129
    %v4131 = vmul.f32 %v4126, %v4130
    %4132 = vrot.lane.b32.xlu0 %v361, 80
    %v4133 = vpop.permute.xlu0 %4132
    %v4136 = vsel %vm517, %v4131, 0
    %4138 = vmatprep.subr.mxu0 0.0
    %4139 = vmatpush1.msra.mxu0 0.0
    %4140 = vmatprep.subr.mxu0 0.0
    %4141 = vmatpush1.msra.mxu0 0.0
    %4142 = vmatprep.subr.mxu0 0.0
    %4143 = vmatpush1.msra.mxu0 0.0
    %4144 = vmatprep.subr.mxu0 0.0
    %4145 = vmatpush1.msra.mxu0 0.0
    %4146 = vmatprep.subr.mxu0 0.0
    %4147 = vmatpush1.msra.mxu0 0.0
    %4148 = vmatprep.subr.mxu0 0.0
    %4149 = vmatpush1.msra.mxu0 0.0
    %4150 = vmatprep.subr.mxu0 0.0
    %4151 = vmatpush1.msra.mxu0 0.0
    %4152 = vmatprep.subr.mxu0 0.0
    %4153 = vmatpush1.msra.mxu0 0.0
    %4154 = vmatprep.subr.mxu0 0.0
    %4155 = vmatpush1.msra.mxu0 0.0
    %4156 = vmatprep.subr.mxu0 0.0
    %4157 = vmatpush1.msra.mxu0 0.0
    %4158 = vmatprep.subr.mxu0 0.0
    %4159 = vmatpush1.msra.mxu0 0.0
    %4160 = vmatprep.subr.mxu0 0.0
    %4161 = vmatpush1.msra.mxu0 0.0
    %4162 = vmatprep.subr.mxu0 0.0
    %4163 = vmatpush1.msra.mxu0 0.0
    %4164 = vmatprep.subr.mxu0 0.0
    %4165 = vmatpush1.msra.mxu0 0.0
    %4166 = vmatprep.subr.mxu0 0.0
    %4167 = vmatpush1.msra.mxu0 0.0
    %4168 = vmatprep.subr.mxu0 0.0
    %4169 = vmatpush1.msra.mxu0 %v4133
    %4170 = vmatprep.subr.mxu0 0.0
    %4171 = vmatpush2.msra.mxu0 0.0
    %4172 = vmatprep.subr.mxu0 0.0
    %4173 = vmatpush2.msra.mxu0 0.0
    %4174 = vmatprep.subr.mxu0 0.0
    %4175 = vmatpush2.msra.mxu0 0.0
    %4176 = vmatprep.subr.mxu0 0.0
    %4177 = vmatpush2.msra.mxu0 0.0
    %4178 = vmatprep.subr.mxu0 0.0
    %4179 = vmatpush2.msra.mxu0 0.0
    %4180 = vmatprep.subr.mxu0 0.0
    %4181 = vmatpush2.msra.mxu0 0.0
    %4182 = vmatprep.subr.mxu0 0.0
    %4183 = vmatpush2.msra.mxu0 0.0
    %4184 = vmatprep.subr.mxu0 0.0
    %4185 = vmatpush2.msra.mxu0 0.0
    %4186 = vmatprep.subr.mxu0 0.0
    %4187 = vmatpush2.msra.mxu0 0.0
    %4188 = vmatprep.subr.mxu0 0.0
    %4189 = vmatpush2.msra.mxu0 0.0
    %4190 = vmatprep.subr.mxu0 0.0
    %4191 = vmatpush2.msra.mxu0 0.0
    %4192 = vmatprep.subr.mxu0 0.0
    %4193 = vmatpush2.msra.mxu0 0.0
    %4194 = vmatprep.subr.mxu0 0.0
    %4195 = vmatpush2.msra.mxu0 0.0
    %4196 = vmatprep.subr.mxu0 0.0
    %4197 = vmatpush2.msra.mxu0 0.0
    %4198 = vmatprep.subr.mxu0 0.0
    %4199 = vmatpush2.msra.mxu0 0.0
    %4200 = vmatprep.subr.mxu0 0.0
    %4201 = vmatpush2.msra.mxu0 0.0
    %4202 = vmatprep.mubr.f32.mxu0 0.0
    %4203 = vmatmul.mubr.f32.gmra.mxu0 %v4136
    %v4204 = vpop.f32.mrf.mxu0
    %v4205 = vadd.f32 0.0, %v4204
    %v4206 = vpop.f32.mrf.mxu0
    %4207 = vdwg.mxu0
    %v4209 = vsel %vm517, %v4205, 0
    %4211 = vmatprep.subr.mxu0 0.0
    %4212 = vmatpush1.msra.mxu0 0.0
    %4213 = vmatprep.subr.mxu0 0.0
    %4214 = vmatpush1.msra.mxu0 0.0
    %4215 = vmatprep.subr.mxu0 0.0
    %4216 = vmatpush1.msra.mxu0 0.0
    %4217 = vmatprep.subr.mxu0 0.0
    %4218 = vmatpush1.msra.mxu0 0.0
    %4219 = vmatprep.subr.mxu0 0.0
    %4220 = vmatpush1.msra.mxu0 0.0
    %4221 = vmatprep.subr.mxu0 0.0
    %4222 = vmatpush1.msra.mxu0 0.0
    %4223 = vmatprep.subr.mxu0 0.0
    %4224 = vmatpush1.msra.mxu0 0.0
    %4225 = vmatprep.subr.mxu0 0.0
    %4226 = vmatpush1.msra.mxu0 0.0
    %4227 = vmatprep.subr.mxu0 0.0
    %4228 = vmatpush1.msra.mxu0 0.0
    %4229 = vmatprep.subr.mxu0 0.0
    %4230 = vmatpush1.msra.mxu0 0.0
    %4231 = vmatprep.subr.mxu0 0.0
    %4232 = vmatpush1.msra.mxu0 0.0
    %4233 = vmatprep.subr.mxu0 0.0
    %4234 = vmatpush1.msra.mxu0 0.0
    %4235 = vmatprep.subr.mxu0 0.0
    %4236 = vmatpush1.msra.mxu0 0.0
    %4237 = vmatprep.subr.mxu0 0.0
    %4238 = vmatpush1.msra.mxu0 0.0
    %4239 = vmatprep.subr.mxu0 0.0
    %4240 = vmatpush1.msra.mxu0 0.0
    %4241 = vmatprep.subr.mxu0 0.0
    %4242 = vmatpush1.msra.mxu0 %v2593
    %4243 = vmatprep.subr.mxu0 0.0
    %4244 = vmatpush2.msra.mxu0 0.0
    %4245 = vmatprep.subr.mxu0 0.0
    %4246 = vmatpush2.msra.mxu0 0.0
    %4247 = vmatprep.subr.mxu0 0.0
    %4248 = vmatpush2.msra.mxu0 0.0
    %4249 = vmatprep.subr.mxu0 0.0
    %4250 = vmatpush2.msra.mxu0 0.0
    %4251 = vmatprep.subr.mxu0 0.0
    %4252 = vmatpush2.msra.mxu0 0.0
    %4253 = vmatprep.subr.mxu0 0.0
    %4254 = vmatpush2.msra.mxu0 0.0
    %4255 = vmatprep.subr.mxu0 0.0
    %4256 = vmatpush2.msra.mxu0 0.0
    %4257 = vmatprep.subr.mxu0 0.0
    %4258 = vmatpush2.msra.mxu0 0.0
    %4259 = vmatprep.subr.mxu0 0.0
    %4260 = vmatpush2.msra.mxu0 0.0
    %4261 = vmatprep.subr.mxu0 0.0
    %4262 = vmatpush2.msra.mxu0 0.0
    %4263 = vmatprep.subr.mxu0 0.0
    %4264 = vmatpush2.msra.mxu0 0.0
    %4265 = vmatprep.subr.mxu0 0.0
    %4266 = vmatpush2.msra.mxu0 0.0
    %4267 = vmatprep.subr.mxu0 0.0
    %4268 = vmatpush2.msra.mxu0 0.0
    %4269 = vmatprep.subr.mxu0 0.0
    %4270 = vmatpush2.msra.mxu0 0.0
    %4271 = vmatprep.subr.mxu0 0.0
    %4272 = vmatpush2.msra.mxu0 0.0
    %4273 = vmatprep.subr.mxu0 0.0
    %4274 = vmatpush2.msra.mxu0 0.0
    %4275 = vmatprep.mubr.f32.mxu0 0.0
    %4276 = vmatmul.mubr.f32.gmra.mxu0 %v4209
    %v4277 = vpop.f32.mrf.mxu0
    %v4278 = vadd.f32 0.0, %v4277
    %v4279 = vpop.f32.mrf.mxu0
    %4280 = vdwg.mxu0
    %v4281 = vadd.f32 %v4038, %v4278
    %4282 = vrot.lane.b32.xlu0 %v2588, 104
    %v4283 = vpop.permute.xlu0 %4282
    %4284 = vrot.lane.b32.xlu0 %v361, 104
    %v4285 = vpop.permute.xlu0 %4284
    %v4286 = vsel %vm517, %v4283, 0
    %v4288 = vsel %vm517, %v4285, 0
    %4290 = vmatprep.subr.mxu0 0.0
    %4291 = vmatpush1.xpose.msra.mxu0 0.0
    %4292 = vmatprep.subr.mxu0 0.0
    %4293 = vmatpush1.xpose.msra.mxu0 0.0
    %4294 = vmatprep.subr.mxu0 0.0
    %4295 = vmatpush1.xpose.msra.mxu0 0.0
    %4296 = vmatprep.subr.mxu0 0.0
    %4297 = vmatpush1.xpose.msra.mxu0 0.0
    %4298 = vmatprep.subr.mxu0 0.0
    %4299 = vmatpush1.xpose.msra.mxu0 0.0
    %4300 = vmatprep.subr.mxu0 0.0
    %4301 = vmatpush1.xpose.msra.mxu0 0.0
    %4302 = vmatprep.subr.mxu0 0.0
    %4303 = vmatpush1.xpose.msra.mxu0 0.0
    %4304 = vmatprep.subr.mxu0 0.0
    %4305 = vmatpush1.xpose.msra.mxu0 0.0
    %4306 = vmatprep.subr.mxu0 0.0
    %4307 = vmatpush1.xpose.msra.mxu0 0.0
    %4308 = vmatprep.subr.mxu0 0.0
    %4309 = vmatpush1.xpose.msra.mxu0 0.0
    %4310 = vmatprep.subr.mxu0 0.0
    %4311 = vmatpush1.xpose.msra.mxu0 0.0
    %4312 = vmatprep.subr.mxu0 0.0
    %4313 = vmatpush1.xpose.msra.mxu0 0.0
    %4314 = vmatprep.subr.mxu0 0.0
    %4315 = vmatpush1.xpose.msra.mxu0 0.0
    %4316 = vmatprep.subr.mxu0 0.0
    %4317 = vmatpush1.xpose.msra.mxu0 0.0
    %4318 = vmatprep.subr.mxu0 0.0
    %4319 = vmatpush1.xpose.msra.mxu0 0.0
    %4320 = vmatprep.subr.mxu0 0.0
    %4321 = vmatpush1.xpose.msra.mxu0 %v4288
    %4322 = vmatprep.subr.mxu0 0.0
    %4323 = vmatpush2.xpose.msra.mxu0 0.0
    %4324 = vmatprep.subr.mxu0 0.0
    %4325 = vmatpush2.xpose.msra.mxu0 0.0
    %4326 = vmatprep.subr.mxu0 0.0
    %4327 = vmatpush2.xpose.msra.mxu0 0.0
    %4328 = vmatprep.subr.mxu0 0.0
    %4329 = vmatpush2.xpose.msra.mxu0 0.0
    %4330 = vmatprep.subr.mxu0 0.0
    %4331 = vmatpush2.xpose.msra.mxu0 0.0
    %4332 = vmatprep.subr.mxu0 0.0
    %4333 = vmatpush2.xpose.msra.mxu0 0.0
    %4334 = vmatprep.subr.mxu0 0.0
    %4335 = vmatpush2.xpose.msra.mxu0 0.0
    %4336 = vmatprep.subr.mxu0 0.0
    %4337 = vmatpush2.xpose.msra.mxu0 0.0
    %4338 = vmatprep.subr.mxu0 0.0
    %4339 = vmatpush2.xpose.msra.mxu0 0.0
    %4340 = vmatprep.subr.mxu0 0.0
    %4341 = vmatpush2.xpose.msra.mxu0 0.0
    %4342 = vmatprep.subr.mxu0 0.0
    %4343 = vmatpush2.xpose.msra.mxu0 0.0
    %4344 = vmatprep.subr.mxu0 0.0
    %4345 = vmatpush2.xpose.msra.mxu0 0.0
    %4346 = vmatprep.subr.mxu0 0.0
    %4347 = vmatpush2.xpose.msra.mxu0 0.0
    %4348 = vmatprep.subr.mxu0 0.0
    %4349 = vmatpush2.xpose.msra.mxu0 0.0
    %4350 = vmatprep.subr.mxu0 0.0
    %4351 = vmatpush2.xpose.msra.mxu0 0.0
    %4352 = vmatprep.subr.mxu0 0.0
    %4353 = vmatpush2.xpose.msra.mxu0 0.0
    %4354 = vmatprep.mubr.f32.mxu0 0.0
    %4355 = vmatmul.mubr.f32.gmra.mxu0 %v4286
    %v4356 = vpop.f32.mrf.mxu0
    %v4357 = vadd.f32 0.0, %v4356
    %v4358 = vpop.f32.mrf.mxu0
    %4359 = vdwg.mxu0
    %v4360 = vmul.f32 %v4357, 0.35355338
    %v4361 = vadd.f32 %v4360, %v270
    %v4362 = vsel %vm517, %v4361, -inf
    %4363 = vmax.xlane.f32.xlu0 %v4362
    %v4364 = vpop.xlane.xlu0 %4363
    %v4365 = vsub.f32 %v4361, %v4364
    %v4366 = vmul.f32 %v4365, 1.442695
    %v4367 = vpow.pop %v4366
    %v4368 = vsel %vm517, %v4367, 0.0
    %4369 = vadd.xlane.f32.xlu0 %v4368
    %v4370 = vpop.xlane.xlu0 %4369
    %v4371 = vrcp.pop %v4370
    %v4372 = vmul.f32 %v4367, %v4371
    %4373 = vrot.lane.b32.xlu0 %v361, 72
    %v4374 = vpop.permute.xlu0 %4373
    %v4377 = vsel %vm517, %v4372, 0
    %4379 = vmatprep.subr.mxu0 0.0
    %4380 = vmatpush1.msra.mxu0 0.0
    %4381 = vmatprep.subr.mxu0 0.0
    %4382 = vmatpush1.msra.mxu0 0.0
    %4383 = vmatprep.subr.mxu0 0.0
    %4384 = vmatpush1.msra.mxu0 0.0
    %4385 = vmatprep.subr.mxu0 0.0
    %4386 = vmatpush1.msra.mxu0 0.0
    %4387 = vmatprep.subr.mxu0 0.0
    %4388 = vmatpush1.msra.mxu0 0.0
    %4389 = vmatprep.subr.mxu0 0.0
    %4390 = vmatpush1.msra.mxu0 0.0
    %4391 = vmatprep.subr.mxu0 0.0
    %4392 = vmatpush1.msra.mxu0 0.0
    %4393 = vmatprep.subr.mxu0 0.0
    %4394 = vmatpush1.msra.mxu0 0.0
    %4395 = vmatprep.subr.mxu0 0.0
    %4396 = vmatpush1.msra.mxu0 0.0
    %4397 = vmatprep.subr.mxu0 0.0
    %4398 = vmatpush1.msra.mxu0 0.0
    %4399 = vmatprep.subr.mxu0 0.0
    %4400 = vmatpush1.msra.mxu0 0.0
    %4401 = vmatprep.subr.mxu0 0.0
    %4402 = vmatpush1.msra.mxu0 0.0
    %4403 = vmatprep.subr.mxu0 0.0
    %4404 = vmatpush1.msra.mxu0 0.0
    %4405 = vmatprep.subr.mxu0 0.0
    %4406 = vmatpush1.msra.mxu0 0.0
    %4407 = vmatprep.subr.mxu0 0.0
    %4408 = vmatpush1.msra.mxu0 0.0
    %4409 = vmatprep.subr.mxu0 0.0
    %4410 = vmatpush1.msra.mxu0 %v4374
    %4411 = vmatprep.subr.mxu0 0.0
    %4412 = vmatpush2.msra.mxu0 0.0
    %4413 = vmatprep.subr.mxu0 0.0
    %4414 = vmatpush2.msra.mxu0 0.0
    %4415 = vmatprep.subr.mxu0 0.0
    %4416 = vmatpush2.msra.mxu0 0.0
    %4417 = vmatprep.subr.mxu0 0.0
    %4418 = vmatpush2.msra.mxu0 0.0
    %4419 = vmatprep.subr.mxu0 0.0
    %4420 = vmatpush2.msra.mxu0 0.0
    %4421 = vmatprep.subr.mxu0 0.0
    %4422 = vmatpush2.msra.mxu0 0.0
    %4423 = vmatprep.subr.mxu0 0.0
    %4424 = vmatpush2.msra.mxu0 0.0
    %4425 = vmatprep.subr.mxu0 0.0
    %4426 = vmatpush2.msra.mxu0 0.0
    %4427 = vmatprep.subr.mxu0 0.0
    %4428 = vmatpush2.msra.mxu0 0.0
    %4429 = vmatprep.subr.mxu0 0.0
    %4430 = vmatpush2.msra.mxu0 0.0
    %4431 = vmatprep.subr.mxu0 0.0
    %4432 = vmatpush2.msra.mxu0 0.0
    %4433 = vmatprep.subr.mxu0 0.0
    %4434 = vmatpush2.msra.mxu0 0.0
    %4435 = vmatprep.subr.mxu0 0.0
    %4436 = vmatpush2.msra.mxu0 0.0
    %4437 = vmatprep.subr.mxu0 0.0
    %4438 = vmatpush2.msra.mxu0 0.0
    %4439 = vmatprep.subr.mxu0 0.0
    %4440 = vmatpush2.msra.mxu0 0.0
    %4441 = vmatprep.subr.mxu0 0.0
    %4442 = vmatpush2.msra.mxu0 0.0
    %4443 = vmatprep.mubr.f32.mxu0 0.0
    %4444 = vmatmul.mubr.f32.gmra.mxu0 %v4377
    %v4445 = vpop.f32.mrf.mxu0
    %v4446 = vadd.f32 0.0, %v4445
    %v4447 = vpop.f32.mrf.mxu0
    %4448 = vdwg.mxu0
    %v4450 = vsel %vm517, %v4446, 0
    %4452 = vmatprep.subr.mxu0 0.0
    %4453 = vmatpush1.msra.mxu0 0.0
    %4454 = vmatprep.subr.mxu0 0.0
    %4455 = vmatpush1.msra.mxu0 0.0
    %4456 = vmatprep.subr.mxu0 0.0
    %4457 = vmatpush1.msra.mxu0 0.0
    %4458 = vmatprep.subr.mxu0 0.0
    %4459 = vmatpush1.msra.mxu0 0.0
    %4460 = vmatprep.subr.mxu0 0.0
    %4461 = vmatpush1.msra.mxu0 0.0
    %4462 = vmatprep.subr.mxu0 0.0
    %4463 = vmatpush1.msra.mxu0 0.0
    %4464 = vmatprep.subr.mxu0 0.0
    %4465 = vmatpush1.msra.mxu0 0.0
    %4466 = vmatprep.subr.mxu0 0.0
    %4467 = vmatpush1.msra.mxu0 0.0
    %4468 = vmatprep.subr.mxu0 0.0
    %4469 = vmatpush1.msra.mxu0 0.0
    %4470 = vmatprep.subr.mxu0 0.0
    %4471 = vmatpush1.msra.mxu0 0.0
    %4472 = vmatprep.subr.mxu0 0.0
    %4473 = vmatpush1.msra.mxu0 0.0
    %4474 = vmatprep.subr.mxu0 0.0
    %4475 = vmatpush1.msra.mxu0 0.0
    %4476 = vmatprep.subr.mxu0 0.0
    %4477 = vmatpush1.msra.mxu0 0.0
    %4478 = vmatprep.subr.mxu0 0.0
    %4479 = vmatpush1.msra.mxu0 0.0
    %4480 = vmatprep.subr.mxu0 0.0
    %4481 = vmatpush1.msra.mxu0 0.0
    %4482 = vmatprep.subr.mxu0 0.0
    %4483 = vmatpush1.msra.mxu0 %v2594
    %4484 = vmatprep.subr.mxu0 0.0
    %4485 = vmatpush2.msra.mxu0 0.0
    %4486 = vmatprep.subr.mxu0 0.0
    %4487 = vmatpush2.msra.mxu0 0.0
    %4488 = vmatprep.subr.mxu0 0.0
    %4489 = vmatpush2.msra.mxu0 0.0
    %4490 = vmatprep.subr.mxu0 0.0
    %4491 = vmatpush2.msra.mxu0 0.0
    %4492 = vmatprep.subr.mxu0 0.0
    %4493 = vmatpush2.msra.mxu0 0.0
    %4494 = vmatprep.subr.mxu0 0.0
    %4495 = vmatpush2.msra.mxu0 0.0
    %4496 = vmatprep.subr.mxu0 0.0
    %4497 = vmatpush2.msra.mxu0 0.0
    %4498 = vmatprep.subr.mxu0 0.0
    %4499 = vmatpush2.msra.mxu0 0.0
    %4500 = vmatprep.subr.mxu0 0.0
    %4501 = vmatpush2.msra.mxu0 0.0
    %4502 = vmatprep.subr.mxu0 0.0
    %4503 = vmatpush2.msra.mxu0 0.0
    %4504 = vmatprep.subr.mxu0 0.0
    %4505 = vmatpush2.msra.mxu0 0.0
    %4506 = vmatprep.subr.mxu0 0.0
    %4507 = vmatpush2.msra.mxu0 0.0
    %4508 = vmatprep.subr.mxu0 0.0
    %4509 = vmatpush2.msra.mxu0 0.0
    %4510 = vmatprep.subr.mxu0 0.0
    %4511 = vmatpush2.msra.mxu0 0.0
    %4512 = vmatprep.subr.mxu0 0.0
    %4513 = vmatpush2.msra.mxu0 0.0
    %4514 = vmatprep.subr.mxu0 0.0
    %4515 = vmatpush2.msra.mxu0 0.0
    %4516 = vmatprep.mubr.f32.mxu0 0.0
    %4517 = vmatmul.mubr.f32.gmra.mxu0 %v4450
    %v4518 = vpop.f32.mrf.mxu0
    %v4519 = vadd.f32 0.0, %v4518
    %v4520 = vpop.f32.mrf.mxu0
    %4521 = vdwg.mxu0
    %v4522 = vadd.f32 %v4281, %v4519
    %v4523 = vadd.f32 %v4522, %v3560
    %v4524 = vadd.f32 %v2445, %v3562
    %v4525 = vadd.f32 %v2446, %v4523
    %v4526 = vsel %vm282, %v4524, 0.0
    %4527 = vadd.xlane.f32.xlu0 %v4526
    %v4528 = vpop.xlane.xlu0 %4527
    %v4529 = vsel %vm282, %v4525, 0.0
    %4530 = vadd.xlane.f32.xlu0 %v4529
    %v4531 = vpop.xlane.xlu0 %4530
    %v4532 = vmul.f32 %v4528, %v370
    %v4533 = vmul.f32 %v4531, %v370
    %v4534 = vsub.f32 %v4524, %v4532
    %v4535 = vsub.f32 %v4525, %v4533
    %v4536 = vmul.f32 %v4534, %v4534
    %v4537 = vmul.f32 %v4535, %v4535
    %v4538 = vsel %vm282, %v4536, 0.0
    %4539 = vadd.xlane.f32.xlu0 %v4538
    %v4540 = vpop.xlane.xlu0 %4539
    %v4541 = vsel %vm282, %v4537, 0.0
    %4542 = vadd.xlane.f32.xlu0 %v4541
    %v4543 = vpop.xlane.xlu0 %4542
    %v4544 = vmul.f32 %v4540, 0.032258064
    %v4545 = vmul.f32 %v4543, 0.032258064
    %v4546 = vrsqrt.pop %v4544
    %v4547 = vmul.f32 %v4544, %v4546
    %vm4548 = vcmp.eq.f32.partialorder %v4544, inf
    %v4549 = vsel %vm4548, %v4544, %v4547
    %vm4550 = vcmp.eq.f32.partialorder %v4544, 0.0
    %v4551 = vand.u32 %v4544, 2147483648
    %v4552 = vsel %vm4550, %v4551, %v4549
    %v4553 = vrsqrt.pop %v4545
    %v4554 = vmul.f32 %v4545, %v4553
    %vm4555 = vcmp.eq.f32.partialorder %v4545, inf
    %v4556 = vsel %vm4555, %v4545, %v4554
    %vm4557 = vcmp.eq.f32.partialorder %v4545, 0.0
    %v4558 = vand.u32 %v4545, 2147483648
    %v4559 = vsel %vm4557, %v4558, %v4556
    %v4560 = vlaneseq
    %v4561 = vshrl.u32 %v4560, 7
    %v4562 = vsub.s32 2, %v4561
    %v4563 = vrot.slane %v257, %v4562
    %v4564 = vmul.f32 %v4563, %v4534
    %v4565 = vmul.f32 %v4563, %v4535
    %v4566 = vadd.f32 %v4552, 1e-06
    %v4567 = vadd.f32 %v4559, 1e-06
    %v4568 = vrcp.pop %v4566
    %v4569 = vmul.f32 %v4564, %v4568
    %v4570 = vrcp.pop %v4567
    %v4571 = vmul.f32 %v4565, %v4570
    %v4572 = vlaneseq
    %v4573 = vshrl.u32 %v4572, 7
    %v4574 = vsub.s32 2, %v4573
    %v4575 = vrot.slane %v258, %v4574
    %v4576 = vadd.f32 %v4569, %v4575
    %v4577 = vadd.f32 %v4571, %v4575
    %v4578 = vld [vmem:[#allocation23] sm:$0xff]
    %v4579 = vld [vmem:[#allocation23 + $0x8] sm:$0xff]
    %v4580 = vld [vmem:[#allocation23 + $0x10] sm:$0xff]
    %v4581 = vld [vmem:[#allocation23 + $0x18] sm:$0xff]
    %v4582 = vld [vmem:[#allocation25] sm:$0x1]
    %v4584 = vlaneseq
    %v4585 = vshrl.u32 %v4584, 7
    %v4586 = vsub.s32 0, %v4585
    %v4587 = vrot.slane %v4582, %v4586
    %v4590 = vsel %vm282, %v4576, 0
    %v4593 = vsel %vm282, %v4577, 0
    %4595 = vmatprep.subr.mxu0 0.0
    %4596 = vmatpush1.msra.mxu0 0.0
    %4597 = vmatprep.subr.mxu0 0.0
    %4598 = vmatpush1.msra.mxu0 0.0
    %4599 = vmatprep.subr.mxu0 0.0
    %4600 = vmatpush1.msra.mxu0 0.0
    %4601 = vmatprep.subr.mxu0 0.0
    %4602 = vmatpush1.msra.mxu0 0.0
    %4603 = vmatprep.subr.mxu0 0.0
    %4604 = vmatpush1.msra.mxu0 0.0
    %4605 = vmatprep.subr.mxu0 0.0
    %4606 = vmatpush1.msra.mxu0 0.0
    %4607 = vmatprep.subr.mxu0 0.0
    %4608 = vmatpush1.msra.mxu0 0.0
    %4609 = vmatprep.subr.mxu0 0.0
    %4610 = vmatpush1.msra.mxu0 0.0
    %4611 = vmatprep.subr.mxu0 0.0
    %4612 = vmatpush1.msra.mxu0 0.0
    %4613 = vmatprep.subr.mxu0 0.0
    %4614 = vmatpush1.msra.mxu0 0.0
    %4615 = vmatprep.subr.mxu0 0.0
    %4616 = vmatpush1.msra.mxu0 0.0
    %4617 = vmatprep.subr.mxu0 0.0
    %4618 = vmatpush1.msra.mxu0 0.0
    %4619 = vmatprep.subr.mxu0 0.0
    %4620 = vmatpush1.msra.mxu0 %v4581
    %4621 = vmatprep.subr.mxu0 0.0
    %4622 = vmatpush1.msra.mxu0 %v4580
    %4623 = vmatprep.subr.mxu0 0.0
    %4624 = vmatpush1.msra.mxu0 %v4579
    %4625 = vmatprep.subr.mxu0 0.0
    %4626 = vmatpush1.msra.mxu0 %v4578
    %4627 = vmatprep.subr.mxu0 0.0
    %4628 = vmatpush2.msra.mxu0 0.0
    %4629 = vmatprep.subr.mxu0 0.0
    %4630 = vmatpush2.msra.mxu0 0.0
    %4631 = vmatprep.subr.mxu0 0.0
    %4632 = vmatpush2.msra.mxu0 0.0
    %4633 = vmatprep.subr.mxu0 0.0
    %4634 = vmatpush2.msra.mxu0 0.0
    %4635 = vmatprep.subr.mxu0 0.0
    %4636 = vmatpush2.msra.mxu0 0.0
    %4637 = vmatprep.subr.mxu0 0.0
    %4638 = vmatpush2.msra.mxu0 0.0
    %4639 = vmatprep.subr.mxu0 0.0
    %4640 = vmatpush2.msra.mxu0 0.0
    %4641 = vmatprep.subr.mxu0 0.0
    %4642 = vmatpush2.msra.mxu0 0.0
    %4643 = vmatprep.subr.mxu0 0.0
    %4644 = vmatpush2.msra.mxu0 0.0
    %4645 = vmatprep.subr.mxu0 0.0
    %4646 = vmatpush2.msra.mxu0 0.0
    %4647 = vmatprep.subr.mxu0 0.0
    %4648 = vmatpush2.msra.mxu0 0.0
    %4649 = vmatprep.subr.mxu0 0.0
    %4650 = vmatpush2.msra.mxu0 0.0
    %4651 = vmatprep.subr.mxu0 0.0
    %4652 = vmatpush2.msra.mxu0 0.0
    %4653 = vmatprep.subr.mxu0 0.0
    %4654 = vmatpush2.msra.mxu0 0.0
    %4655 = vmatprep.subr.mxu0 0.0
    %4656 = vmatpush2.msra.mxu0 0.0
    %4657 = vmatprep.subr.mxu0 0.0
    %4658 = vmatpush2.msra.mxu0 0.0
    %4659 = vmatprep.mubr.f32.mxu0 0.0
    %4660 = vmatmul.mubr.f32.gmra.mxu0 %v4590
    %v4661 = vpop.f32.mrf.mxu0
    %v4662 = vadd.f32 %v4587, %v4661
    %v4663 = vpop.f32.mrf.mxu0
    %4664 = vmatprep.mubr.f32.mxu0 0.0
    %4665 = vmatmul.mubr.f32.gmra.mxu0 %v4593
    %v4666 = vpop.f32.mrf.mxu0
    %v4667 = vadd.f32 %v4587, %v4666
    %v4668 = vpop.f32.mrf.mxu0
    %4669 = vdwg.mxu0
    %v4670 = vmax.f32 %v4662, 0.0
    %v4671 = vmax.f32 %v4667, 0.0
    %v4672 = vld [vmem:[%s18] sm:$0xff]
    %v4673 = vld [vmem:[%s18 + $0x8] sm:$0xff]
    %v4674 = vld [vmem:[%s18 + $0x10] sm:$0xff]
    %v4675 = vld [vmem:[%s18 + $0x18] sm:$0xff]
    %v4676 = vld [vmem:[%s18 + $0x20] sm:$0xff]
    %v4677 = vld [vmem:[%s18 + $0x28] sm:$0xff]
    %v4678 = vld [vmem:[%s18 + $0x30] sm:$0xff]
    %v4679 = vld [vmem:[%s18 + $0x38] sm:$0xff]
    %vm4680 = vcmask 523264
    %v4682 = vsel %vm4680, %v4670, 0
    %v4685 = vsel %vm4680, %v4671, 0
    %4687 = vmatprep.subr.mxu0 0.0
    %4688 = vmatpush1.msra.mxu0 0.0
    %4689 = vmatprep.subr.mxu0 0.0
    %4690 = vmatpush1.msra.mxu0 0.0
    %4691 = vmatprep.subr.mxu0 0.0
    %4692 = vmatpush1.msra.mxu0 0.0
    %4693 = vmatprep.subr.mxu0 0.0
    %4694 = vmatpush1.msra.mxu0 0.0
    %4695 = vmatprep.subr.mxu0 0.0
    %4696 = vmatpush1.msra.mxu0 0.0
    %4697 = vmatprep.subr.mxu0 0.0
    %4698 = vmatpush1.msra.mxu0 0.0
    %4699 = vmatprep.subr.mxu0 0.0
    %4700 = vmatpush1.msra.mxu0 0.0
    %4701 = vmatprep.subr.mxu0 0.0
    %4702 = vmatpush1.msra.mxu0 0.0
    %4703 = vmatprep.subr.mxu0 0.0
    %4704 = vmatpush1.msra.mxu0 %v4679
    %4705 = vmatprep.subr.mxu0 0.0
    %4706 = vmatpush1.msra.mxu0 %v4678
    %4707 = vmatprep.subr.mxu0 0.0
    %4708 = vmatpush1.msra.mxu0 %v4677
    %4709 = vmatprep.subr.mxu0 0.0
    %4710 = vmatpush1.msra.mxu0 %v4676
    %4711 = vmatprep.subr.mxu0 0.0
    %4712 = vmatpush1.msra.mxu0 %v4675
    %4713 = vmatprep.subr.mxu0 0.0
    %4714 = vmatpush1.msra.mxu0 %v4674
    %4715 = vmatprep.subr.mxu0 0.0
    %4716 = vmatpush1.msra.mxu0 %v4673
    %4717 = vmatprep.subr.mxu0 0.0
    %4718 = vmatpush1.msra.mxu0 %v4672
    %4719 = vmatprep.subr.mxu0 0.0
    %4720 = vmatpush2.msra.mxu0 0.0
    %4721 = vmatprep.subr.mxu0 0.0
    %4722 = vmatpush2.msra.mxu0 0.0
    %4723 = vmatprep.subr.mxu0 0.0
    %4724 = vmatpush2.msra.mxu0 0.0
    %4725 = vmatprep.subr.mxu0 0.0
    %4726 = vmatpush2.msra.mxu0 0.0
    %4727 = vmatprep.subr.mxu0 0.0
    %4728 = vmatpush2.msra.mxu0 0.0
    %4729 = vmatprep.subr.mxu0 0.0
    %4730 = vmatpush2.msra.mxu0 0.0
    %4731 = vmatprep.subr.mxu0 0.0
    %4732 = vmatpush2.msra.mxu0 0.0
    %4733 = vmatprep.subr.mxu0 0.0
    %4734 = vmatpush2.msra.mxu0 0.0
    %4735 = vmatprep.subr.mxu0 0.0
    %4736 = vmatpush2.msra.mxu0 0.0
    %4737 = vmatprep.subr.mxu0 0.0
    %4738 = vmatpush2.msra.mxu0 0.0
    %4739 = vmatprep.subr.mxu0 0.0
    %4740 = vmatpush2.msra.mxu0 0.0
    %4741 = vmatprep.subr.mxu0 0.0
    %4742 = vmatpush2.msra.mxu0 0.0
    %4743 = vmatprep.subr.mxu0 0.0
    %4744 = vmatpush2.msra.mxu0 0.0
    %4745 = vmatprep.subr.mxu0 0.0
    %4746 = vmatpush2.msra.mxu0 0.0
    %4747 = vmatprep.subr.mxu0 0.0
    %4748 = vmatpush2.msra.mxu0 0.0
    %4749 = vmatprep.subr.mxu0 0.0
    %4750 = vmatpush2.msra.mxu0 0.0
    %4751 = vmatprep.mubr.f32.mxu0 0.0
    %4752 = vmatmul.mubr.f32.gmra.mxu0 %v4682
    %v4753 = vpop.f32.mrf.mxu0
    %v4754 = vadd.f32 0.0, %v4753
    %v4755 = vpop.f32.mrf.mxu0
    %4756 = vmatprep.mubr.f32.mxu0 0.0
    %4757 = vmatmul.mubr.f32.gmra.mxu0 %v4685
    %v4758 = vpop.f32.mrf.mxu0
    %v4759 = vadd.f32 0.0, %v4758
    %v4760 = vpop.f32.mrf.mxu0
    %4761 = vdwg.mxu0
    %v4762 = vadd.f32 %v4524, %v4754
    %v4763 = vadd.f32 %v4525, %v4759
    %v4764 = vld [vmem:[%s19] sm:$0x1]
    %v4766 = vlaneseq
    %v4767 = vshrl.u32 %v4766, 7
    %v4768 = vsub.s32 0, %v4767
    %v4769 = vrot.slane %v4764, %v4768
    %v4771 = vadd.f32 %v4762, %v4769
    %v4772 = vadd.f32 %v4763, %v4769
    %4773 = vst.msk [vmem:[#allocation26] sm:$0xff] %vm282, %v4771
    %4774 = vst.msk [vmem:[#allocation26 + $0x8] sm:$0xff] %vm282, %v4772
    // Predicated region
    $region142: #{tpu_custom_call.1} parent=1 // pred_check
      _
    $region143: #{tpu_custom_call.1} parent=1 // pred_check_branch
      %4776 = sbr.rel (0) target = $region145
    $region144: #{tpu_custom_call.1} parent=1 // pred_region
      %s4778 = ssub.s32 256, 256
      %4779 = vsyncadd [#allocation4], %s4778
      %s4780 = sshll.u32 [#allocation26], 4
      %s4781 = int_to_ptr.vmem [resolvable:$true] %s4780
      %4786 = dma.vmem_to_hbm [thread:$0]  %s4781, 256, %s20, [#allocation4], 128, 128, 8
    $region145: #{tpu_custom_call.1} parent=1 // pred_fallthru
      _
    // Predicated region
    $region146: #{tpu_custom_call.1} parent=1 // pred_check
      _
    $region147: #{tpu_custom_call.1} parent=1 // pred_check_branch
      %4788 = sbr.rel (0) target = $region149
    $region148: #{tpu_custom_call.1} parent=1 // pred_region
      %4789 = dma.done [#allocation4], 256
    $region149: #{tpu_custom_call.1} parent=1 // pred_fallthru
      _
    %4790 = vsyncpa [#allocation3], 1
    %4791 = vsyncpa [#allocation6], 1
    %4792 = vsyncpa [#allocation9], 1
    %4793 = vsyncpa [#allocation12], 1
    %4794 = vsyncpa [#allocation15], 1
    %4795 = vsyncpa [#allocation18], 1
    %4796 = vsyncpa [#allocation21], 1
    %4797 = vsyncpa [#allocation24], 1
    %4798 = vsyncpa [#allocation4], 1

</llo_original>
